<compile_context>
chip_gen: v7x
topology: tpu7x:2x2x1
jax: 0.10.0
libtpu: 0.0.40
codegen_flags: <defaults>
</compile_context>

<pallas_src>
import functools

import jax
import jax.numpy as jnp
from jax.experimental import pallas as pl
from jax.experimental.pallas import tpu as pltpu


# ----------------------------------------------------------------------------
# Shared GRU cell math (PyTorch gate order r | z | n, biases on both paths):
#   r  = sigmoid(gx_r + gh_r)
#   z  = sigmoid(gx_z + gh_z)
#   n  = tanh  (gx_n + r * gh_n)
#   h' = (1 - z) * n + z * h
# gx = x W_ih + b_ih (precomputed outside), gh = h W_hh + b_hh.
# ----------------------------------------------------------------------------
def _gru_cell(gx, gh, h_prev, hd):
    r = jax.nn.sigmoid(gx[:, :hd] + gh[:, :hd])
    z = jax.nn.sigmoid(gx[:, hd:2 * hd] + gh[:, hd:2 * hd])
    n = jnp.tanh(gx[:, 2 * hd:] + r * gh[:, 2 * hd:])
    return (1.0 - z) * n + z * h_prev


# ----------------------------------------------------------------------------
# Encoder: bidirectional GRU, both directions fused in one [B, 2H] carry.
#   gx_ref : [Te, B, 6H]  columns = (fw_r|fw_z|fw_n | bw_r|bw_z|bw_n)
#   whh_ref: [2H, 6H]     block-diagonal (fw block | bw block)
#   bhh_ref: [1, 6H]
# Outputs:
#   enc_out_ref: [B, Te, 2H]  (fw output at lanes 0:H, bw output at lanes H:2H)
#   hfin_ref   : [B, 2H]      == cat(h_fw_final, h_bw_final)  (the 'cat' state)
# ----------------------------------------------------------------------------
def _encoder_kernel(gx_ref, whh_ref, bhh_ref, enc_out_ref, hfin_ref):
    T, B, _ = gx_ref.shape
    H2 = whh_ref.shape[0]          # 2H (both directions)
    H = H2 // 2                    # per-direction hidden
    H3 = 3 * H

    whh = whh_ref[...]
    bhh = bhh_ref[...]
    h = jnp.zeros((B, H2), jnp.float32)

    # fully-unrolled time loop: everything stays in vregs / VMEM
    for s in range(T):
        gh = jnp.dot(h, whh, preferred_element_type=jnp.float32) + bhh   # [B,6H]
        gx_fw = gx_ref[s]                  # fw consumes token s
        gx_bw = gx_ref[T - 1 - s]          # bw consumes token T-1-s (reversed)
        hf = _gru_cell(gx_fw[:, :H3], gh[:, :H3], h[:, :H], H)
        hb = _gru_cell(gx_bw[:, H3:], gh[:, H3:], h[:, H:], H)
        h = jnp.concatenate([hf, hb], axis=-1)
        # layout plumbing in-kernel: emit [B, Te, 2H] directly
        enc_out_ref[:, s, :H] = hf
        enc_out_ref[:, T - 1 - s, H:] = hb

    hfin_ref[...] = h


def encoder_gru(gx, whh, bhh):
    """gx: [Te, B, 6H] packed input gates; whh: [2H, 6H] block-diag; bhh: [1, 6H].
    Returns (enc_output [B, Te, 2H], enc_state [B, 2H])."""
    T, B, _ = gx.shape
    H2 = whh.shape[0]
    return pl.pallas_call(
        _encoder_kernel,
        out_shape=[
            jax.ShapeDtypeStruct((B, T, H2), jnp.float32),
            jax.ShapeDtypeStruct((B, H2), jnp.float32),
        ],
    )(gx, whh, bhh)


# ----------------------------------------------------------------------------
# Decoder GRU (hidden 2H) + fused attention + tanh(attention_fc) + fc.
# Attention matches:
#   a_t = softmax(bmm(enc, dec^T), dim=1)   (here s[b,d,e] = a_t[b,e,d],
#                                            softmax over last axis)
#   c_t = bmm(a_t^T, enc)
#   out = tanh([c_t, dec] @ W_att + b_att)  (W_att pre-split: c@Wc + dec@Wd)
#   logits = out @ W_fc + b_fc
# ----------------------------------------------------------------------------
def _decoder_kernel(gx_ref, h0_ref, whh_ref, bhh_ref, enc_ref,
                    wc_ref, wd_ref, batt_ref, wfc_ref, bfc_ref,
                    logits_ref, hfin_ref, dec_scr):
    Td, B, _ = gx_ref.shape
    H2 = h0_ref.shape[-1]          # decoder hidden = 2H

    whh = whh_ref[...]
    bhh = bhh_ref[...]
    h = h0_ref[...]                # [B, 2H]

    for d in range(Td):
        gh = jnp.dot(h, whh, preferred_element_type=jnp.float32) + bhh   # [B,6H]
        h = _gru_cell(gx_ref[d], gh, h, H2)
        dec_scr[:, d, :] = h       # accumulate dec outputs in VMEM scratch

    hfin_ref[...] = h

    # ---- fused attention + fc heads epilogue ----
    enc = enc_ref[...]             # [B, Te, 2H]
    dec = dec_scr[...]             # [B, Td, 2H]

    s = jnp.einsum("bdh,beh->bde", dec, enc,
                   preferred_element_type=jnp.float32)        # [B, Td, Te]
    s = s - jnp.max(s, axis=-1, keepdims=True)                # softmax over Te
    p = jnp.exp(s)
    a = p * pl.reciprocal(jnp.sum(p, axis=-1, keepdims=True), approx=True)
    c = jnp.einsum("bde,beh->bdh", a, enc,
                   preferred_element_type=jnp.float32)        # [B, Td, 2H]

    c2 = c.reshape(B * Td, H2)
    d2 = dec.reshape(B * Td, H2)
    out = jnp.tanh(
        jnp.dot(c2, wc_ref[...], preferred_element_type=jnp.float32)
        + jnp.dot(d2, wd_ref[...], preferred_element_type=jnp.float32)
        + batt_ref[...])
    logits = (jnp.dot(out, wfc_ref[...], preferred_element_type=jnp.float32)
              + bfc_ref[...])
    logits_ref[...] = logits.reshape(B, Td, -1).astype(logits_ref.dtype)


def decoder_attn_fc(gx, h0, whh, bhh, enc_out, wc, wd, batt, wfc, bfc):
    """gx: [Td, B, 6H']; h0: [B, 2H]; enc_out: [B, Te, 2H].
    Returns (logits [B, Td, V], hidden [B, 2H])."""
    Td, B, _ = gx.shape
    H2 = h0.shape[-1]
    V = wfc.shape[1]
    return pl.pallas_call(
        _decoder_kernel,
        out_shape=[
            jax.ShapeDtypeStruct((B, Td, V), jnp.float32),
            jax.ShapeDtypeStruct((B, H2), jnp.float32),
        ],
        scratch_shapes=[pltpu.VMEM((B, Td, H2), jnp.float32)],
    )(gx, h0, whh, bhh, enc_out, wc, wd, batt, wfc, bfc)


# ----------------------------------------------------------------------------
# Full Seq2Seq forward (hidden_type='cat').
# ----------------------------------------------------------------------------
def seq2seq_forward(params, enc_tokens, dec_tokens):
    hp = jax.lax.Precision.HIGHEST

    # ---- Encoder: embedding (glue) + hoisted input projection + recurrence
    x_enc_t = params["enc_emb"][enc_tokens.T]                      # [Te, B, E]
    gx_enc = jnp.einsum("tbe,eo->tbo", x_enc_t, params["enc_wih"],
                        precision=hp) + params["enc_bih"]          # [Te, B, 6H]
    enc_output, enc_state = encoder_gru(gx_enc, params["enc_whh"],
                                        params["enc_bhh"])
    # enc_output: [B, Te, 2H]; enc_state: [B, 2H] (== cat(h_fw, h_bw))

    # ---- Decoder (+ fused attention + fc heads) ----
    x_dec_t = params["dec_emb"][dec_tokens.T]                      # [Td, B, E]
    gx_dec = jnp.einsum("tbe,eo->tbo", x_dec_t, params["dec_wih"],
                        precision=hp) + params["dec_bih"]          # [Td, B, 6H']
    logits, h_dec = decoder_attn_fc(
        gx_dec, enc_state, params["dec_whh"], params["dec_bhh"], enc_output,
        params["att_wc"], params["att_wd"], params["att_b"],
        params["fc_w"], params["fc_b"])
    return logits, h_dec[None]                                     # [1, B, 2H]


# ----------------------------------------------------------------------------
# Deterministic parameter construction (synthetic, fused/packed layouts).
# ----------------------------------------------------------------------------
def init_params(key, enc_vocab, dec_vocab, emb_dim, hidden):
    def nrm(k, shape, scale=0.1):
        return (scale * jax.random.normal(k, shape)).astype(jnp.float32)

    ks = iter(jax.random.split(key, 24))
    H = hidden

    def gru_params(in_dim, out_dim):
        # fused gate layout: columns packed as (r | z | n) -> [., 3*out_dim]
        return (nrm(next(ks), (in_dim, 3 * out_dim)),    # W_ih (transposed)
                nrm(next(ks), (out_dim, 3 * out_dim)),   # W_hh (transposed)
                nrm(next(ks), (1, 3 * out_dim)),         # b_ih
                nrm(next(ks), (1, 3 * out_dim)))         # b_hh

    enc_emb = nrm(next(ks), (enc_vocab, emb_dim))
    dec_emb = nrm(next(ks), (dec_vocab, emb_dim))
    wih_fw, whh_fw, bih_fw, bhh_fw = gru_params(emb_dim, H)
    wih_bw, whh_bw, bih_bw, bhh_bw = gru_params(emb_dim, H)
    wih_d, whh_d, bih_d, bhh_d = gru_params(emb_dim, 2 * H)

    # Encoder packing: lane order (fw_r|fw_z|fw_n | bw_r|bw_z|bw_n);
    # hidden carried as [B, 2H] = [fw | bw]; W_hh block-diagonal so both
    # directions share ONE [B,2H] @ [2H,6H] matmul per step.
    enc_wih = jnp.concatenate([wih_fw, wih_bw], axis=1)            # [E, 6H]
    enc_bih = jnp.concatenate([bih_fw, bih_bw], axis=1)            # [1, 6H]
    enc_whh = jnp.zeros((2 * H, 6 * H), jnp.float32)
    enc_whh = enc_whh.at[:H, :3 * H].set(whh_fw)
    enc_whh = enc_whh.at[H:, 3 * H:].set(whh_bw)                   # [2H, 6H]
    enc_bhh = jnp.concatenate([bhh_fw, bhh_bw], axis=1)            # [1, 6H]

    return {
        "hidden_size": H,
        "enc_emb": enc_emb,
        "dec_emb": dec_emb,
        "enc_wih": enc_wih, "enc_bih": enc_bih,
        "enc_whh": enc_whh, "enc_bhh": enc_bhh,
        "dec_wih": wih_d, "dec_bih": bih_d,                        # [E,6H], [1,6H]
        "dec_whh": whh_d, "dec_bhh": bhh_d,                        # [2H,6H], [1,6H]
        # attention_fc weight pre-split (c_t half | dec half) to avoid concat
        "att_wc": nrm(next(ks), (2 * H, 2 * H)),
        "att_wd": nrm(next(ks), (2 * H, 2 * H)),
        "att_b": nrm(next(ks), (1, 2 * H)),
        "fc_w": nrm(next(ks), (2 * H, dec_vocab)),
        "fc_b": nrm(next(ks), (1, dec_vocab)),
    }


# ----------------------------------------------------------------------------
# Pure-JAX reference (mirrors the PyTorch module) for a correctness check.
# ----------------------------------------------------------------------------
def seq2seq_reference(params, enc_tokens, dec_tokens):
    H = params["hidden_size"]
    hp = jax.lax.Precision.HIGHEST
    B, Te = enc_tokens.shape
    Td = dec_tokens.shape[1]

    def cell(x_t, h, wih, whh, bih, bhh):
        hd = h.shape[-1]
        gx = jnp.dot(x_t, wih, precision=hp) + bih
        gh = jnp.dot(h, whh, precision=hp) + bhh
        r = jax.nn.sigmoid(gx[:, :hd] + gh[:, :hd])
        z = jax.nn.sigmoid(gx[:, hd:2 * hd] + gh[:, hd:2 * hd])
        n = jnp.tanh(gx[:, 2 * hd:] + r * gh[:, 2 * hd:])
        return (1.0 - z) * n + z * h

    # unpack per-direction encoder weights from the packed layout
    wih_fw, wih_bw = params["enc_wih"][:, :3 * H], params["enc_wih"][:, 3 * H:]
    bih_fw, bih_bw = params["enc_bih"][:, :3 * H], params["enc_bih"][:, 3 * H:]
    whh_fw, whh_bw = params["enc_whh"][:H, :3 * H], params["enc_whh"][H:, 3 * H:]
    bhh_fw, bhh_bw = params["enc_bhh"][:, :3 * H], params["enc_bhh"][:, 3 * H:]

    x = params["enc_emb"][enc_tokens]                              # [B, Te, E]
    hf = jnp.zeros((B, H), jnp.float32)
    hb = jnp.zeros((B, H), jnp.float32)
    fw_out, bw_out = [], [None] * Te
    for t in range(Te):
        hf = cell(x[:, t], hf, wih_fw, whh_fw, bih_fw, bhh_fw)
        fw_out.append(hf)
    for t in range(Te - 1, -1, -1):
        hb = cell(x[:, t], hb, wih_bw, whh_bw, bih_bw, bhh_bw)
        bw_out[t] = hb
    enc_out = jnp.stack([jnp.concatenate([f, b], -1)
                         for f, b in zip(fw_out, bw_out)], axis=1)  # [B, Te, 2H]
    enc_state = jnp.concatenate([hf, hb], axis=-1)                  # [B, 2H]

    xd = params["dec_emb"][dec_tokens]                              # [B, Td, E]
    hd = enc_state
    dec_steps = []
    for t in range(Td):
        hd = cell(xd[:, t], hd, params["dec_wih"], params["dec_whh"],
                  params["dec_bih"], params["dec_bhh"])
        dec_steps.append(hd)
    dec = jnp.stack(dec_steps, axis=1)                              # [B, Td, 2H]

    a_t = jnp.einsum("beh,bdh->bed", enc_out, dec, precision=hp)    # [B, Te, Td]
    a_t = jax.nn.softmax(a_t, axis=1)
    c_t = jnp.einsum("bed,beh->bdh", a_t, enc_out, precision=hp)    # [B, Td, 2H]
    out = jnp.tanh(jnp.einsum("bdh,ho->bdo", c_t, params["att_wc"], precision=hp)
                   + jnp.einsum("bdh,ho->bdo", dec, params["att_wd"], precision=hp)
                   + params["att_b"])
    logits = jnp.einsum("bdo,ov->bdv", out, params["fc_w"], precision=hp) + params["fc_b"]
    return logits, hd[None]


if __name__ == "__main__":
    ENC_VOCAB, DEC_VOCAB = 20, 24
    EMB_DIM, HIDDEN = 16, 32
    B, TE, TD = 2, 8, 6

    key = jax.random.PRNGKey(0)
    kp, ke, kd = jax.random.split(key, 3)
    params = init_params(kp, ENC_VOCAB, DEC_VOCAB, EMB_DIM, HIDDEN)

    enc_tokens = jax.random.randint(ke, (B, TE), 0, ENC_VOCAB, dtype=jnp.int32)
    dec_tokens = jax.random.randint(kd, (B, TD), 0, DEC_VOCAB, dtype=jnp.int32)

    fwd = jax.jit(functools.partial(seq2seq_forward, params))
    logits, hidden = fwd(enc_tokens, dec_tokens)
    jax.block_until_ready((logits, hidden))

    assert logits.shape == (B, TD, DEC_VOCAB), logits.shape
    assert hidden.shape == (1, B, 2 * HIDDEN), hidden.shape
    assert bool(jnp.all(jnp.isfinite(logits))) and bool(jnp.all(jnp.isfinite(hidden)))

    # correctness check against the pure-JAX reference of the PyTorch module
    ref_logits, ref_hidden = jax.jit(
        functools.partial(seq2seq_reference, params))(enc_tokens, dec_tokens)
    jax.block_until_ready((ref_logits, ref_hidden))
    assert bool(jnp.allclose(logits, ref_logits, rtol=5e-3, atol=5e-3)), (
        float(jnp.max(jnp.abs(logits - ref_logits))))
    assert bool(jnp.allclose(hidden, ref_hidden, rtol=5e-3, atol=5e-3)), (
        float(jnp.max(jnp.abs(hidden - ref_hidden))))

    print("KERNEL_OK")
</pallas_src>

<mosaic_0001>
module attributes {stable_mosaic.version = 11 : i64} {
  func.func @_encoder_kernel(%arg0: memref<8x2x192xf32, #tpu.memory_space<vmem>>, %arg1: memref<64x192xf32, #tpu.memory_space<vmem>>, %arg2: memref<1x192xf32, #tpu.memory_space<vmem>>, %arg3: memref<2x8x64xf32, #tpu.memory_space<vmem>>, %arg4: memref<2x64xf32, #tpu.memory_space<vmem>>) attributes {dimension_semantics = [], scalar_prefetch = 0 : i64, scratch_operands = 0 : i64, tpu.core_type = #tpu.core_type<tc>} {
    %c0 = arith.constant 0 : index
    %c0_0 = arith.constant 0 : index
    %0 = vector.load %arg1[%c0, %c0_0] : memref<64x192xf32, #tpu.memory_space<vmem>>, vector<64x192xf32>
    %c0_1 = arith.constant 0 : index
    %c0_2 = arith.constant 0 : index
    %1 = vector.load %arg2[%c0_1, %c0_2] : memref<1x192xf32, #tpu.memory_space<vmem>>, vector<1x192xf32>
    %cst = arith.constant 0.000000e+00 : f32
    %2 = vector.broadcast %cst : f32 to vector<2x64xf32>
    %cst_3 = arith.constant dense<0.000000e+00> : vector<2x192xf32>
    %3 = tpu.matmul %2, %0, %cst_3 {dimension_numbers = #tpu.dot_dimension_numbers<[1], [0], [0], [1], [0, 0, 1, 1], [], []>} : vector<2x64xf32>, vector<64x192xf32>, vector<2x192xf32> -> vector<2x192xf32>
    %4 = vector.broadcast %1 : vector<1x192xf32> to vector<2x192xf32>
    %5 = arith.addf %3, %4 : vector<2x192xf32>
    %c0_4 = arith.constant 0 : index
    %c0_5 = arith.constant 0 : index
    %c0_6 = arith.constant 0 : index
    %6 = vector.load %arg0[%c0_4, %c0_5, %c0_6] : memref<8x2x192xf32, #tpu.memory_space<vmem>>, vector<1x2x192xf32>
    %7 = vector.shape_cast %6 : vector<1x2x192xf32> to vector<2x192xf32>
    %c7 = arith.constant 7 : index
    %c0_7 = arith.constant 0 : index
    %c0_8 = arith.constant 0 : index
    %8 = vector.load %arg0[%c7, %c0_7, %c0_8] : memref<8x2x192xf32, #tpu.memory_space<vmem>>, vector<1x2x192xf32>
    %9 = vector.shape_cast %8 : vector<1x2x192xf32> to vector<2x192xf32>
    %10 = vector.extract_strided_slice %7 {offsets = [0, 0], sizes = [2, 96], strides = [1, 1]} : vector<2x192xf32> to vector<2x96xf32>
    %11 = vector.extract_strided_slice %5 {offsets = [0, 0], sizes = [2, 96], strides = [1, 1]} : vector<2x192xf32> to vector<2x96xf32>
    %12 = vector.extract_strided_slice %2 {offsets = [0, 0], sizes = [2, 32], strides = [1, 1]} : vector<2x64xf32> to vector<2x32xf32>
    %13 = vector.extract_strided_slice %10 {offsets = [0, 0], sizes = [2, 32], strides = [1, 1]} : vector<2x96xf32> to vector<2x32xf32>
    %14 = vector.extract_strided_slice %11 {offsets = [0, 0], sizes = [2, 32], strides = [1, 1]} : vector<2x96xf32> to vector<2x32xf32>
    %15 = arith.addf %13, %14 : vector<2x32xf32>
    %16 = arith.negf %15 : vector<2x32xf32>
    %17 = math.exp %16 : vector<2x32xf32>
    %cst_9 = arith.constant 1.000000e+00 : f32
    %18 = vector.broadcast %cst_9 : f32 to vector<2x32xf32>
    %19 = arith.addf %18, %17 : vector<2x32xf32>
    %20 = arith.divf %18, %19 : vector<2x32xf32>
    %21 = vector.extract_strided_slice %10 {offsets = [0, 32], sizes = [2, 32], strides = [1, 1]} : vector<2x96xf32> to vector<2x32xf32>
    %22 = vector.extract_strided_slice %11 {offsets = [0, 32], sizes = [2, 32], strides = [1, 1]} : vector<2x96xf32> to vector<2x32xf32>
    %23 = arith.addf %21, %22 : vector<2x32xf32>
    %24 = arith.negf %23 : vector<2x32xf32>
    %25 = math.exp %24 : vector<2x32xf32>
    %cst_10 = arith.constant 1.000000e+00 : f32
    %26 = vector.broadcast %cst_10 : f32 to vector<2x32xf32>
    %27 = arith.addf %26, %25 : vector<2x32xf32>
    %28 = arith.divf %26, %27 : vector<2x32xf32>
    %29 = vector.extract_strided_slice %10 {offsets = [0, 64], sizes = [2, 32], strides = [1, 1]} : vector<2x96xf32> to vector<2x32xf32>
    %30 = vector.extract_strided_slice %11 {offsets = [0, 64], sizes = [2, 32], strides = [1, 1]} : vector<2x96xf32> to vector<2x32xf32>
    %31 = arith.mulf %20, %30 : vector<2x32xf32>
    %32 = arith.addf %29, %31 : vector<2x32xf32>
    %33 = math.tanh %32 : vector<2x32xf32>
    %cst_11 = arith.constant 1.000000e+00 : f32
    %34 = vector.broadcast %cst_11 : f32 to vector<2x32xf32>
    %35 = arith.subf %34, %28 : vector<2x32xf32>
    %36 = arith.mulf %35, %33 : vector<2x32xf32>
    %37 = arith.mulf %28, %12 : vector<2x32xf32>
    %38 = arith.addf %36, %37 : vector<2x32xf32>
    %39 = vector.extract_strided_slice %9 {offsets = [0, 96], sizes = [2, 96], strides = [1, 1]} : vector<2x192xf32> to vector<2x96xf32>
    %40 = vector.extract_strided_slice %5 {offsets = [0, 96], sizes = [2, 96], strides = [1, 1]} : vector<2x192xf32> to vector<2x96xf32>
    %41 = vector.extract_strided_slice %2 {offsets = [0, 32], sizes = [2, 32], strides = [1, 1]} : vector<2x64xf32> to vector<2x32xf32>
    %42 = vector.extract_strided_slice %39 {offsets = [0, 0], sizes = [2, 32], strides = [1, 1]} : vector<2x96xf32> to vector<2x32xf32>
    %43 = vector.extract_strided_slice %40 {offsets = [0, 0], sizes = [2, 32], strides = [1, 1]} : vector<2x96xf32> to vector<2x32xf32>
    %44 = arith.addf %42, %43 : vector<2x32xf32>
    %45 = arith.negf %44 : vector<2x32xf32>
    %46 = math.exp %45 : vector<2x32xf32>
    %cst_12 = arith.constant 1.000000e+00 : f32
    %47 = vector.broadcast %cst_12 : f32 to vector<2x32xf32>
    %48 = arith.addf %47, %46 : vector<2x32xf32>
    %49 = arith.divf %47, %48 : vector<2x32xf32>
    %50 = vector.extract_strided_slice %39 {offsets = [0, 32], sizes = [2, 32], strides = [1, 1]} : vector<2x96xf32> to vector<2x32xf32>
    %51 = vector.extract_strided_slice %40 {offsets = [0, 32], sizes = [2, 32], strides = [1, 1]} : vector<2x96xf32> to vector<2x32xf32>
    %52 = arith.addf %50, %51 : vector<2x32xf32>
    %53 = arith.negf %52 : vector<2x32xf32>
    %54 = math.exp %53 : vector<2x32xf32>
    %cst_13 = arith.constant 1.000000e+00 : f32
    %55 = vector.broadcast %cst_13 : f32 to vector<2x32xf32>
    %56 = arith.addf %55, %54 : vector<2x32xf32>
    %57 = arith.divf %55, %56 : vector<2x32xf32>
    %58 = vector.extract_strided_slice %39 {offsets = [0, 64], sizes = [2, 32], strides = [1, 1]} : vector<2x96xf32> to vector<2x32xf32>
    %59 = vector.extract_strided_slice %40 {offsets = [0, 64], sizes = [2, 32], strides = [1, 1]} : vector<2x96xf32> to vector<2x32xf32>
    %60 = arith.mulf %49, %59 : vector<2x32xf32>
    %61 = arith.addf %58, %60 : vector<2x32xf32>
    %62 = math.tanh %61 : vector<2x32xf32>
    %cst_14 = arith.constant 1.000000e+00 : f32
    %63 = vector.broadcast %cst_14 : f32 to vector<2x32xf32>
    %64 = arith.subf %63, %57 : vector<2x32xf32>
    %65 = arith.mulf %64, %62 : vector<2x32xf32>
    %66 = arith.mulf %57, %41 : vector<2x32xf32>
    %67 = arith.addf %65, %66 : vector<2x32xf32>
    %68 = tpu.concatenate %38, %67 in 1 : vector<2x32xf32>, vector<2x32xf32> -> vector<2x64xf32>
    %c0_15 = arith.constant 0 : index
    %c0_16 = arith.constant 0 : index
    %c0_17 = arith.constant 0 : index
    %69 = vector.load %arg3[%c0_15, %c0_16, %c0_17] : memref<2x8x64xf32, #tpu.memory_space<vmem>>, vector<2x1x32xf32>
    %70 = vector.shape_cast %69 : vector<2x1x32xf32> to vector<2x32xf32>
    %71 = vector.shape_cast %38 : vector<2x32xf32> to vector<2x1x32xf32>
    tpu.vector_store %arg3[%c0_15, %c0_16, %c0_17], %71 {strides = array<i32>} : memref<2x8x64xf32, #tpu.memory_space<vmem>>, vector<2x1x32xf32>,
    %c0_18 = arith.constant 0 : index
    %c7_19 = arith.constant 7 : index
    %c32 = arith.constant 32 : index
    %72 = vector.load %arg3[%c0_18, %c7_19, %c32] : memref<2x8x64xf32, #tpu.memory_space<vmem>>, vector<2x1x32xf32>
    %73 = vector.shape_cast %72 : vector<2x1x32xf32> to vector<2x32xf32>
    %74 = vector.shape_cast %67 : vector<2x32xf32> to vector<2x1x32xf32>
    tpu.vector_store %arg3[%c0_18, %c7_19, %c32], %74 {strides = array<i32>} : memref<2x8x64xf32, #tpu.memory_space<vmem>>, vector<2x1x32xf32>,
    %cst_20 = arith.constant dense<0.000000e+00> : vector<2x192xf32>
    %75 = tpu.matmul %68, %0, %cst_20 {dimension_numbers = #tpu.dot_dimension_numbers<[1], [0], [0], [1], [0, 0, 1, 1], [], []>} : vector<2x64xf32>, vector<64x192xf32>, vector<2x192xf32> -> vector<2x192xf32>
    %76 = vector.broadcast %1 : vector<1x192xf32> to vector<2x192xf32>
    %77 = arith.addf %75, %76 : vector<2x192xf32>
    %c1 = arith.constant 1 : index
    %c0_21 = arith.constant 0 : index
    %c0_22 = arith.constant 0 : index
    %78 = vector.load %arg0[%c1, %c0_21, %c0_22] : memref<8x2x192xf32, #tpu.memory_space<vmem>>, vector<1x2x192xf32>
    %79 = vector.shape_cast %78 : vector<1x2x192xf32> to vector<2x192xf32>
    %c6 = arith.constant 6 : index
    %c0_23 = arith.constant 0 : index
    %c0_24 = arith.constant 0 : index
    %80 = vector.load %arg0[%c6, %c0_23, %c0_24] : memref<8x2x192xf32, #tpu.memory_space<vmem>>, vector<1x2x192xf32>
    %81 = vector.shape_cast %80 : vector<1x2x192xf32> to vector<2x192xf32>
    %82 = vector.extract_strided_slice %79 {offsets = [0, 0], sizes = [2, 96], strides = [1, 1]} : vector<2x192xf32> to vector<2x96xf32>
    %83 = vector.extract_strided_slice %77 {offsets = [0, 0], sizes = [2, 96], strides = [1, 1]} : vector<2x192xf32> to vector<2x96xf32>
    %84 = vector.extract_strided_slice %68 {offsets = [0, 0], sizes = [2, 32], strides = [1, 1]} : vector<2x64xf32> to vector<2x32xf32>
    %85 = vector.extract_strided_slice %82 {offsets = [0, 0], sizes = [2, 32], strides = [1, 1]} : vector<2x96xf32> to vector<2x32xf32>
    %86 = vector.extract_strided_slice %83 {offsets = [0, 0], sizes = [2, 32], strides = [1, 1]} : vector<2x96xf32> to vector<2x32xf32>
    %87 = arith.addf %85, %86 : vector<2x32xf32>
    %88 = arith.negf %87 : vector<2x32xf32>
    %89 = math.exp %88 : vector<2x32xf32>
    %cst_25 = arith.constant 1.000000e+00 : f32
    %90 = vector.broadcast %cst_25 : f32 to vector<2x32xf32>
    %91 = arith.addf %90, %89 : vector<2x32xf32>
    %92 = arith.divf %90, %91 : vector<2x32xf32>
    %93 = vector.extract_strided_slice %82 {offsets = [0, 32], sizes = [2, 32], strides = [1, 1]} : vector<2x96xf32> to vector<2x32xf32>
    %94 = vector.extract_strided_slice %83 {offsets = [0, 32], sizes = [2, 32], strides = [1, 1]} : vector<2x96xf32> to vector<2x32xf32>
    %95 = arith.addf %93, %94 : vector<2x32xf32>
    %96 = arith.negf %95 : vector<2x32xf32>
    %97 = math.exp %96 : vector<2x32xf32>
    %cst_26 = arith.constant 1.000000e+00 : f32
    %98 = vector.broadcast %cst_26 : f32 to vector<2x32xf32>
    %99 = arith.addf %98, %97 : vector<2x32xf32>
    %100 = arith.divf %98, %99 : vector<2x32xf32>
    %101 = vector.extract_strided_slice %82 {offsets = [0, 64], sizes = [2, 32], strides = [1, 1]} : vector<2x96xf32> to vector<2x32xf32>
    %102 = vector.extract_strided_slice %83 {offsets = [0, 64], sizes = [2, 32], strides = [1, 1]} : vector<2x96xf32> to vector<2x32xf32>
    %103 = arith.mulf %92, %102 : vector<2x32xf32>
    %104 = arith.addf %101, %103 : vector<2x32xf32>
    %105 = math.tanh %104 : vector<2x32xf32>
    %cst_27 = arith.constant 1.000000e+00 : f32
    %106 = vector.broadcast %cst_27 : f32 to vector<2x32xf32>
    %107 = arith.subf %106, %100 : vector<2x32xf32>
    %108 = arith.mulf %107, %105 : vector<2x32xf32>
    %109 = arith.mulf %100, %84 : vector<2x32xf32>
    %110 = arith.addf %108, %109 : vector<2x32xf32>
    %111 = vector.extract_strided_slice %81 {offsets = [0, 96], sizes = [2, 96], strides = [1, 1]} : vector<2x192xf32> to vector<2x96xf32>
    %112 = vector.extract_strided_slice %77 {offsets = [0, 96], sizes = [2, 96], strides = [1, 1]} : vector<2x192xf32> to vector<2x96xf32>
    %113 = vector.extract_strided_slice %68 {offsets = [0, 32], sizes = [2, 32], strides = [1, 1]} : vector<2x64xf32> to vector<2x32xf32>
    %114 = vector.extract_strided_slice %111 {offsets = [0, 0], sizes = [2, 32], strides = [1, 1]} : vector<2x96xf32> to vector<2x32xf32>
    %115 = vector.extract_strided_slice %112 {offsets = [0, 0], sizes = [2, 32], strides = [1, 1]} : vector<2x96xf32> to vector<2x32xf32>
    %116 = arith.addf %114, %115 : vector<2x32xf32>
    %117 = arith.negf %116 : vector<2x32xf32>
    %118 = math.exp %117 : vector<2x32xf32>
    %cst_28 = arith.constant 1.000000e+00 : f32
    %119 = vector.broadcast %cst_28 : f32 to vector<2x32xf32>
    %120 = arith.addf %119, %118 : vector<2x32xf32>
    %121 = arith.divf %119, %120 : vector<2x32xf32>
    %122 = vector.extract_strided_slice %111 {offsets = [0, 32], sizes = [2, 32], strides = [1, 1]} : vector<2x96xf32> to vector<2x32xf32>
    %123 = vector.extract_strided_slice %112 {offsets = [0, 32], sizes = [2, 32], strides = [1, 1]} : vector<2x96xf32> to vector<2x32xf32>
    %124 = arith.addf %122, %123 : vector<2x32xf32>
    %125 = arith.negf %124 : vector<2x32xf32>
    %126 = math.exp %125 : vector<2x32xf32>
    %cst_29 = arith.constant 1.000000e+00 : f32
    %127 = vector.broadcast %cst_29 : f32 to vector<2x32xf32>
    %128 = arith.addf %127, %126 : vector<2x32xf32>
    %129 = arith.divf %127, %128 : vector<2x32xf32>
    %130 = vector.extract_strided_slice %111 {offsets = [0, 64], sizes = [2, 32], strides = [1, 1]} : vector<2x96xf32> to vector<2x32xf32>
    %131 = vector.extract_strided_slice %112 {offsets = [0, 64], sizes = [2, 32], strides = [1, 1]} : vector<2x96xf32> to vector<2x32xf32>
    %132 = arith.mulf %121, %131 : vector<2x32xf32>
    %133 = arith.addf %130, %132 : vector<2x32xf32>
    %134 = math.tanh %133 : vector<2x32xf32>
    %cst_30 = arith.constant 1.000000e+00 : f32
    %135 = vector.broadcast %cst_30 : f32 to vector<2x32xf32>
    %136 = arith.subf %135, %129 : vector<2x32xf32>
    %137 = arith.mulf %136, %134 : vector<2x32xf32>
    %138 = arith.mulf %129, %113 : vector<2x32xf32>
    %139 = arith.addf %137, %138 : vector<2x32xf32>
    %140 = tpu.concatenate %110, %139 in 1 : vector<2x32xf32>, vector<2x32xf32> -> vector<2x64xf32>
    %c0_31 = arith.constant 0 : index
    %c1_32 = arith.constant 1 : index
    %c0_33 = arith.constant 0 : index
    %141 = vector.load %arg3[%c0_31, %c1_32, %c0_33] : memref<2x8x64xf32, #tpu.memory_space<vmem>>, vector<2x1x32xf32>
    %142 = vector.shape_cast %141 : vector<2x1x32xf32> to vector<2x32xf32>
    %143 = vector.shape_cast %110 : vector<2x32xf32> to vector<2x1x32xf32>
    tpu.vector_store %arg3[%c0_31, %c1_32, %c0_33], %143 {strides = array<i32>} : memref<2x8x64xf32, #tpu.memory_space<vmem>>, vector<2x1x32xf32>,
    %c0_34 = arith.constant 0 : index
    %c6_35 = arith.constant 6 : index
    %c32_36 = arith.constant 32 : index
    %144 = vector.load %arg3[%c0_34, %c6_35, %c32_36] : memref<2x8x64xf32, #tpu.memory_space<vmem>>, vector<2x1x32xf32>
    %145 = vector.shape_cast %144 : vector<2x1x32xf32> to vector<2x32xf32>
    %146 = vector.shape_cast %139 : vector<2x32xf32> to vector<2x1x32xf32>
    tpu.vector_store %arg3[%c0_34, %c6_35, %c32_36], %146 {strides = array<i32>} : memref<2x8x64xf32, #tpu.memory_space<vmem>>, vector<2x1x32xf32>,
    %cst_37 = arith.constant dense<0.000000e+00> : vector<2x192xf32>
    %147 = tpu.matmul %140, %0, %cst_37 {dimension_numbers = #tpu.dot_dimension_numbers<[1], [0], [0], [1], [0, 0, 1, 1], [], []>} : vector<2x64xf32>, vector<64x192xf32>, vector<2x192xf32> -> vector<2x192xf32>
    %148 = vector.broadcast %1 : vector<1x192xf32> to vector<2x192xf32>
    %149 = arith.addf %147, %148 : vector<2x192xf32>
    %c2 = arith.constant 2 : index
    %c0_38 = arith.constant 0 : index
    %c0_39 = arith.constant 0 : index
    %150 = vector.load %arg0[%c2, %c0_38, %c0_39] : memref<8x2x192xf32, #tpu.memory_space<vmem>>, vector<1x2x192xf32>
    %151 = vector.shape_cast %150 : vector<1x2x192xf32> to vector<2x192xf32>
    %c5 = arith.constant 5 : index
    %c0_40 = arith.constant 0 : index
    %c0_41 = arith.constant 0 : index
    %152 = vector.load %arg0[%c5, %c0_40, %c0_41] : memref<8x2x192xf32, #tpu.memory_space<vmem>>, vector<1x2x192xf32>
    %153 = vector.shape_cast %152 : vector<1x2x192xf32> to vector<2x192xf32>
    %154 = vector.extract_strided_slice %151 {offsets = [0, 0], sizes = [2, 96], strides = [1, 1]} : vector<2x192xf32> to vector<2x96xf32>
    %155 = vector.extract_strided_slice %149 {offsets = [0, 0], sizes = [2, 96], strides = [1, 1]} : vector<2x192xf32> to vector<2x96xf32>
    %156 = vector.extract_strided_slice %140 {offsets = [0, 0], sizes = [2, 32], strides = [1, 1]} : vector<2x64xf32> to vector<2x32xf32>
    %157 = vector.extract_strided_slice %154 {offsets = [0, 0], sizes = [2, 32], strides = [1, 1]} : vector<2x96xf32> to vector<2x32xf32>
    %158 = vector.extract_strided_slice %155 {offsets = [0, 0], sizes = [2, 32], strides = [1, 1]} : vector<2x96xf32> to vector<2x32xf32>
    %159 = arith.addf %157, %158 : vector<2x32xf32>
    %160 = arith.negf %159 : vector<2x32xf32>
    %161 = math.exp %160 : vector<2x32xf32>
    %cst_42 = arith.constant 1.000000e+00 : f32
    %162 = vector.broadcast %cst_42 : f32 to vector<2x32xf32>
    %163 = arith.addf %162, %161 : vector<2x32xf32>
    %164 = arith.divf %162, %163 : vector<2x32xf32>
    %165 = vector.extract_strided_slice %154 {offsets = [0, 32], sizes = [2, 32], strides = [1, 1]} : vector<2x96xf32> to vector<2x32xf32>
    %166 = vector.extract_strided_slice %155 {offsets = [0, 32], sizes = [2, 32], strides = [1, 1]} : vector<2x96xf32> to vector<2x32xf32>
    %167 = arith.addf %165, %166 : vector<2x32xf32>
    %168 = arith.negf %167 : vector<2x32xf32>
    %169 = math.exp %168 : vector<2x32xf32>
    %cst_43 = arith.constant 1.000000e+00 : f32
    %170 = vector.broadcast %cst_43 : f32 to vector<2x32xf32>
    %171 = arith.addf %170, %169 : vector<2x32xf32>
    %172 = arith.divf %170, %171 : vector<2x32xf32>
    %173 = vector.extract_strided_slice %154 {offsets = [0, 64], sizes = [2, 32], strides = [1, 1]} : vector<2x96xf32> to vector<2x32xf32>
    %174 = vector.extract_strided_slice %155 {offsets = [0, 64], sizes = [2, 32], strides = [1, 1]} : vector<2x96xf32> to vector<2x32xf32>
    %175 = arith.mulf %164, %174 : vector<2x32xf32>
    %176 = arith.addf %173, %175 : vector<2x32xf32>
    %177 = math.tanh %176 : vector<2x32xf32>
    %cst_44 = arith.constant 1.000000e+00 : f32
    %178 = vector.broadcast %cst_44 : f32 to vector<2x32xf32>
    %179 = arith.subf %178, %172 : vector<2x32xf32>
    %180 = arith.mulf %179, %177 : vector<2x32xf32>
    %181 = arith.mulf %172, %156 : vector<2x32xf32>
    %182 = arith.addf %180, %181 : vector<2x32xf32>
    %183 = vector.extract_strided_slice %153 {offsets = [0, 96], sizes = [2, 96], strides = [1, 1]} : vector<2x192xf32> to vector<2x96xf32>
    %184 = vector.extract_strided_slice %149 {offsets = [0, 96], sizes = [2, 96], strides = [1, 1]} : vector<2x192xf32> to vector<2x96xf32>
    %185 = vector.extract_strided_slice %140 {offsets = [0, 32], sizes = [2, 32], strides = [1, 1]} : vector<2x64xf32> to vector<2x32xf32>
    %186 = vector.extract_strided_slice %183 {offsets = [0, 0], sizes = [2, 32], strides = [1, 1]} : vector<2x96xf32> to vector<2x32xf32>
    %187 = vector.extract_strided_slice %184 {offsets = [0, 0], sizes = [2, 32], strides = [1, 1]} : vector<2x96xf32> to vector<2x32xf32>
    %188 = arith.addf %186, %187 : vector<2x32xf32>
    %189 = arith.negf %188 : vector<2x32xf32>
    %190 = math.exp %189 : vector<2x32xf32>
    %cst_45 = arith.constant 1.000000e+00 : f32
    %191 = vector.broadcast %cst_45 : f32 to vector<2x32xf32>
    %192 = arith.addf %191, %190 : vector<2x32xf32>
    %193 = arith.divf %191, %192 : vector<2x32xf32>
    %194 = vector.extract_strided_slice %183 {offsets = [0, 32], sizes = [2, 32], strides = [1, 1]} : vector<2x96xf32> to vector<2x32xf32>
    %195 = vector.extract_strided_slice %184 {offsets = [0, 32], sizes = [2, 32], strides = [1, 1]} : vector<2x96xf32> to vector<2x32xf32>
    %196 = arith.addf %194, %195 : vector<2x32xf32>
    %197 = arith.negf %196 : vector<2x32xf32>
    %198 = math.exp %197 : vector<2x32xf32>
    %cst_46 = arith.constant 1.000000e+00 : f32
    %199 = vector.broadcast %cst_46 : f32 to vector<2x32xf32>
    %200 = arith.addf %199, %198 : vector<2x32xf32>
    %201 = arith.divf %199, %200 : vector<2x32xf32>
    %202 = vector.extract_strided_slice %183 {offsets = [0, 64], sizes = [2, 32], strides = [1, 1]} : vector<2x96xf32> to vector<2x32xf32>
    %203 = vector.extract_strided_slice %184 {offsets = [0, 64], sizes = [2, 32], strides = [1, 1]} : vector<2x96xf32> to vector<2x32xf32>
    %204 = arith.mulf %193, %203 : vector<2x32xf32>
    %205 = arith.addf %202, %204 : vector<2x32xf32>
    %206 = math.tanh %205 : vector<2x32xf32>
    %cst_47 = arith.constant 1.000000e+00 : f32
    %207 = vector.broadcast %cst_47 : f32 to vector<2x32xf32>
    %208 = arith.subf %207, %201 : vector<2x32xf32>
    %209 = arith.mulf %208, %206 : vector<2x32xf32>
    %210 = arith.mulf %201, %185 : vector<2x32xf32>
    %211 = arith.addf %209, %210 : vector<2x32xf32>
    %212 = tpu.concatenate %182, %211 in 1 : vector<2x32xf32>, vector<2x32xf32> -> vector<2x64xf32>
    %c0_48 = arith.constant 0 : index
    %c2_49 = arith.constant 2 : index
    %c0_50 = arith.constant 0 : index
    %213 = vector.load %arg3[%c0_48, %c2_49, %c0_50] : memref<2x8x64xf32, #tpu.memory_space<vmem>>, vector<2x1x32xf32>
    %214 = vector.shape_cast %213 : vector<2x1x32xf32> to vector<2x32xf32>
    %215 = vector.shape_cast %182 : vector<2x32xf32> to vector<2x1x32xf32>
    tpu.vector_store %arg3[%c0_48, %c2_49, %c0_50], %215 {strides = array<i32>} : memref<2x8x64xf32, #tpu.memory_space<vmem>>, vector<2x1x32xf32>,
    %c0_51 = arith.constant 0 : index
    %c5_52 = arith.constant 5 : index
    %c32_53 = arith.constant 32 : index
    %216 = vector.load %arg3[%c0_51, %c5_52, %c32_53] : memref<2x8x64xf32, #tpu.memory_space<vmem>>, vector<2x1x32xf32>
    %217 = vector.shape_cast %216 : vector<2x1x32xf32> to vector<2x32xf32>
    %218 = vector.shape_cast %211 : vector<2x32xf32> to vector<2x1x32xf32>
    tpu.vector_store %arg3[%c0_51, %c5_52, %c32_53], %218 {strides = array<i32>} : memref<2x8x64xf32, #tpu.memory_space<vmem>>, vector<2x1x32xf32>,
    %cst_54 = arith.constant dense<0.000000e+00> : vector<2x192xf32>
    %219 = tpu.matmul %212, %0, %cst_54 {dimension_numbers = #tpu.dot_dimension_numbers<[1], [0], [0], [1], [0, 0, 1, 1], [], []>} : vector<2x64xf32>, vector<64x192xf32>, vector<2x192xf32> -> vector<2x192xf32>
    %220 = vector.broadcast %1 : vector<1x192xf32> to vector<2x192xf32>
    %221 = arith.addf %219, %220 : vector<2x192xf32>
    %c3 = arith.constant 3 : index
    %c0_55 = arith.constant 0 : index
    %c0_56 = arith.constant 0 : index
    %222 = vector.load %arg0[%c3, %c0_55, %c0_56] : memref<8x2x192xf32, #tpu.memory_space<vmem>>, vector<1x2x192xf32>
    %223 = vector.shape_cast %222 : vector<1x2x192xf32> to vector<2x192xf32>
    %c4 = arith.constant 4 : index
    %c0_57 = arith.constant 0 : index
    %c0_58 = arith.constant 0 : index
    %224 = vector.load %arg0[%c4, %c0_57, %c0_58] : memref<8x2x192xf32, #tpu.memory_space<vmem>>, vector<1x2x192xf32>
    %225 = vector.shape_cast %224 : vector<1x2x192xf32> to vector<2x192xf32>
    %226 = vector.extract_strided_slice %223 {offsets = [0, 0], sizes = [2, 96], strides = [1, 1]} : vector<2x192xf32> to vector<2x96xf32>
    %227 = vector.extract_strided_slice %221 {offsets = [0, 0], sizes = [2, 96], strides = [1, 1]} : vector<2x192xf32> to vector<2x96xf32>
    %228 = vector.extract_strided_slice %212 {offsets = [0, 0], sizes = [2, 32], strides = [1, 1]} : vector<2x64xf32> to vector<2x32xf32>
    %229 = vector.extract_strided_slice %226 {offsets = [0, 0], sizes = [2, 32], strides = [1, 1]} : vector<2x96xf32> to vector<2x32xf32>
    %230 = vector.extract_strided_slice %227 {offsets = [0, 0], sizes = [2, 32], strides = [1, 1]} : vector<2x96xf32> to vector<2x32xf32>
    %231 = arith.addf %229, %230 : vector<2x32xf32>
    %232 = arith.negf %231 : vector<2x32xf32>
    %233 = math.exp %232 : vector<2x32xf32>
    %cst_59 = arith.constant 1.000000e+00 : f32
    %234 = vector.broadcast %cst_59 : f32 to vector<2x32xf32>
    %235 = arith.addf %234, %233 : vector<2x32xf32>
    %236 = arith.divf %234, %235 : vector<2x32xf32>
    %237 = vector.extract_strided_slice %226 {offsets = [0, 32], sizes = [2, 32], strides = [1, 1]} : vector<2x96xf32> to vector<2x32xf32>
    %238 = vector.extract_strided_slice %227 {offsets = [0, 32], sizes = [2, 32], strides = [1, 1]} : vector<2x96xf32> to vector<2x32xf32>
    %239 = arith.addf %237, %238 : vector<2x32xf32>
    %240 = arith.negf %239 : vector<2x32xf32>
    %241 = math.exp %240 : vector<2x32xf32>
    %cst_60 = arith.constant 1.000000e+00 : f32
    %242 = vector.broadcast %cst_60 : f32 to vector<2x32xf32>
    %243 = arith.addf %242, %241 : vector<2x32xf32>
    %244 = arith.divf %242, %243 : vector<2x32xf32>
    %245 = vector.extract_strided_slice %226 {offsets = [0, 64], sizes = [2, 32], strides = [1, 1]} : vector<2x96xf32> to vector<2x32xf32>
    %246 = vector.extract_strided_slice %227 {offsets = [0, 64], sizes = [2, 32], strides = [1, 1]} : vector<2x96xf32> to vector<2x32xf32>
    %247 = arith.mulf %236, %246 : vector<2x32xf32>
    %248 = arith.addf %245, %247 : vector<2x32xf32>
    %249 = math.tanh %248 : vector<2x32xf32>
    %cst_61 = arith.constant 1.000000e+00 : f32
    %250 = vector.broadcast %cst_61 : f32 to vector<2x32xf32>
    %251 = arith.subf %250, %244 : vector<2x32xf32>
    %252 = arith.mulf %251, %249 : vector<2x32xf32>
    %253 = arith.mulf %244, %228 : vector<2x32xf32>
    %254 = arith.addf %252, %253 : vector<2x32xf32>
    %255 = vector.extract_strided_slice %225 {offsets = [0, 96], sizes = [2, 96], strides = [1, 1]} : vector<2x192xf32> to vector<2x96xf32>
    %256 = vector.extract_strided_slice %221 {offsets = [0, 96], sizes = [2, 96], strides = [1, 1]} : vector<2x192xf32> to vector<2x96xf32>
    %257 = vector.extract_strided_slice %212 {offsets = [0, 32], sizes = [2, 32], strides = [1, 1]} : vector<2x64xf32> to vector<2x32xf32>
    %258 = vector.extract_strided_slice %255 {offsets = [0, 0], sizes = [2, 32], strides = [1, 1]} : vector<2x96xf32> to vector<2x32xf32>
    %259 = vector.extract_strided_slice %256 {offsets = [0, 0], sizes = [2, 32], strides = [1, 1]} : vector<2x96xf32> to vector<2x32xf32>
    %260 = arith.addf %258, %259 : vector<2x32xf32>
    %261 = arith.negf %260 : vector<2x32xf32>
    %262 = math.exp %261 : vector<2x32xf32>
    %cst_62 = arith.constant 1.000000e+00 : f32
    %263 = vector.broadcast %cst_62 : f32 to vector<2x32xf32>
    %264 = arith.addf %263, %262 : vector<2x32xf32>
    %265 = arith.divf %263, %264 : vector<2x32xf32>
    %266 = vector.extract_strided_slice %255 {offsets = [0, 32], sizes = [2, 32], strides = [1, 1]} : vector<2x96xf32> to vector<2x32xf32>
    %267 = vector.extract_strided_slice %256 {offsets = [0, 32], sizes = [2, 32], strides = [1, 1]} : vector<2x96xf32> to vector<2x32xf32>
    %268 = arith.addf %266, %267 : vector<2x32xf32>
    %269 = arith.negf %268 : vector<2x32xf32>
    %270 = math.exp %269 : vector<2x32xf32>
    %cst_63 = arith.constant 1.000000e+00 : f32
    %271 = vector.broadcast %cst_63 : f32 to vector<2x32xf32>
    %272 = arith.addf %271, %270 : vector<2x32xf32>
    %273 = arith.divf %271, %272 : vector<2x32xf32>
    %274 = vector.extract_strided_slice %255 {offsets = [0, 64], sizes = [2, 32], strides = [1, 1]} : vector<2x96xf32> to vector<2x32xf32>
    %275 = vector.extract_strided_slice %256 {offsets = [0, 64], sizes = [2, 32], strides = [1, 1]} : vector<2x96xf32> to vector<2x32xf32>
    %276 = arith.mulf %265, %275 : vector<2x32xf32>
    %277 = arith.addf %274, %276 : vector<2x32xf32>
    %278 = math.tanh %277 : vector<2x32xf32>
    %cst_64 = arith.constant 1.000000e+00 : f32
    %279 = vector.broadcast %cst_64 : f32 to vector<2x32xf32>
    %280 = arith.subf %279, %273 : vector<2x32xf32>
    %281 = arith.mulf %280, %278 : vector<2x32xf32>
    %282 = arith.mulf %273, %257 : vector<2x32xf32>
    %283 = arith.addf %281, %282 : vector<2x32xf32>
    %284 = tpu.concatenate %254, %283 in 1 : vector<2x32xf32>, vector<2x32xf32> -> vector<2x64xf32>
    %c0_65 = arith.constant 0 : index
    %c3_66 = arith.constant 3 : index
    %c0_67 = arith.constant 0 : index
    %285 = vector.load %arg3[%c0_65, %c3_66, %c0_67] : memref<2x8x64xf32, #tpu.memory_space<vmem>>, vector<2x1x32xf32>
    %286 = vector.shape_cast %285 : vector<2x1x32xf32> to vector<2x32xf32>
    %287 = vector.shape_cast %254 : vector<2x32xf32> to vector<2x1x32xf32>
    tpu.vector_store %arg3[%c0_65, %c3_66, %c0_67], %287 {strides = array<i32>} : memref<2x8x64xf32, #tpu.memory_space<vmem>>, vector<2x1x32xf32>,
    %c0_68 = arith.constant 0 : index
    %c4_69 = arith.constant 4 : index
    %c32_70 = arith.constant 32 : index
    %288 = vector.load %arg3[%c0_68, %c4_69, %c32_70] : memref<2x8x64xf32, #tpu.memory_space<vmem>>, vector<2x1x32xf32>
    %289 = vector.shape_cast %288 : vector<2x1x32xf32> to vector<2x32xf32>
    %290 = vector.shape_cast %283 : vector<2x32xf32> to vector<2x1x32xf32>
    tpu.vector_store %arg3[%c0_68, %c4_69, %c32_70], %290 {strides = array<i32>} : memref<2x8x64xf32, #tpu.memory_space<vmem>>, vector<2x1x32xf32>,
    %cst_71 = arith.constant dense<0.000000e+00> : vector<2x192xf32>
    %291 = tpu.matmul %284, %0, %cst_71 {dimension_numbers = #tpu.dot_dimension_numbers<[1], [0], [0], [1], [0, 0, 1, 1], [], []>} : vector<2x64xf32>, vector<64x192xf32>, vector<2x192xf32> -> vector<2x192xf32>
    %292 = vector.broadcast %1 : vector<1x192xf32> to vector<2x192xf32>
    %293 = arith.addf %291, %292 : vector<2x192xf32>
    %c4_72 = arith.constant 4 : index
    %c0_73 = arith.constant 0 : index
    %c0_74 = arith.constant 0 : index
    %294 = vector.load %arg0[%c4_72, %c0_73, %c0_74] : memref<8x2x192xf32, #tpu.memory_space<vmem>>, vector<1x2x192xf32>
    %295 = vector.shape_cast %294 : vector<1x2x192xf32> to vector<2x192xf32>
    %c3_75 = arith.constant 3 : index
    %c0_76 = arith.constant 0 : index
    %c0_77 = arith.constant 0 : index
    %296 = vector.load %arg0[%c3_75, %c0_76, %c0_77] : memref<8x2x192xf32, #tpu.memory_space<vmem>>, vector<1x2x192xf32>
    %297 = vector.shape_cast %296 : vector<1x2x192xf32> to vector<2x192xf32>
    %298 = vector.extract_strided_slice %295 {offsets = [0, 0], sizes = [2, 96], strides = [1, 1]} : vector<2x192xf32> to vector<2x96xf32>
    %299 = vector.extract_strided_slice %293 {offsets = [0, 0], sizes = [2, 96], strides = [1, 1]} : vector<2x192xf32> to vector<2x96xf32>
    %300 = vector.extract_strided_slice %284 {offsets = [0, 0], sizes = [2, 32], strides = [1, 1]} : vector<2x64xf32> to vector<2x32xf32>
    %301 = vector.extract_strided_slice %298 {offsets = [0, 0], sizes = [2, 32], strides = [1, 1]} : vector<2x96xf32> to vector<2x32xf32>
    %302 = vector.extract_strided_slice %299 {offsets = [0, 0], sizes = [2, 32], strides = [1, 1]} : vector<2x96xf32> to vector<2x32xf32>
    %303 = arith.addf %301, %302 : vector<2x32xf32>
    %304 = arith.negf %303 : vector<2x32xf32>
    %305 = math.exp %304 : vector<2x32xf32>
    %cst_78 = arith.constant 1.000000e+00 : f32
    %306 = vector.broadcast %cst_78 : f32 to vector<2x32xf32>
    %307 = arith.addf %306, %305 : vector<2x32xf32>
    %308 = arith.divf %306, %307 : vector<2x32xf32>
    %309 = vector.extract_strided_slice %298 {offsets = [0, 32], sizes = [2, 32], strides = [1, 1]} : vector<2x96xf32> to vector<2x32xf32>
    %310 = vector.extract_strided_slice %299 {offsets = [0, 32], sizes = [2, 32], strides = [1, 1]} : vector<2x96xf32> to vector<2x32xf32>
    %311 = arith.addf %309, %310 : vector<2x32xf32>
    %312 = arith.negf %311 : vector<2x32xf32>
    %313 = math.exp %312 : vector<2x32xf32>
    %cst_79 = arith.constant 1.000000e+00 : f32
    %314 = vector.broadcast %cst_79 : f32 to vector<2x32xf32>
    %315 = arith.addf %314, %313 : vector<2x32xf32>
    %316 = arith.divf %314, %315 : vector<2x32xf32>
    %317 = vector.extract_strided_slice %298 {offsets = [0, 64], sizes = [2, 32], strides = [1, 1]} : vector<2x96xf32> to vector<2x32xf32>
    %318 = vector.extract_strided_slice %299 {offsets = [0, 64], sizes = [2, 32], strides = [1, 1]} : vector<2x96xf32> to vector<2x32xf32>
    %319 = arith.mulf %308, %318 : vector<2x32xf32>
    %320 = arith.addf %317, %319 : vector<2x32xf32>
    %321 = math.tanh %320 : vector<2x32xf32>
    %cst_80 = arith.constant 1.000000e+00 : f32
    %322 = vector.broadcast %cst_80 : f32 to vector<2x32xf32>
    %323 = arith.subf %322, %316 : vector<2x32xf32>
    %324 = arith.mulf %323, %321 : vector<2x32xf32>
    %325 = arith.mulf %316, %300 : vector<2x32xf32>
    %326 = arith.addf %324, %325 : vector<2x32xf32>
    %327 = vector.extract_strided_slice %297 {offsets = [0, 96], sizes = [2, 96], strides = [1, 1]} : vector<2x192xf32> to vector<2x96xf32>
    %328 = vector.extract_strided_slice %293 {offsets = [0, 96], sizes = [2, 96], strides = [1, 1]} : vector<2x192xf32> to vector<2x96xf32>
    %329 = vector.extract_strided_slice %284 {offsets = [0, 32], sizes = [2, 32], strides = [1, 1]} : vector<2x64xf32> to vector<2x32xf32>
    %330 = vector.extract_strided_slice %327 {offsets = [0, 0], sizes = [2, 32], strides = [1, 1]} : vector<2x96xf32> to vector<2x32xf32>
    %331 = vector.extract_strided_slice %328 {offsets = [0, 0], sizes = [2, 32], strides = [1, 1]} : vector<2x96xf32> to vector<2x32xf32>
    %332 = arith.addf %330, %331 : vector<2x32xf32>
    %333 = arith.negf %332 : vector<2x32xf32>
    %334 = math.exp %333 : vector<2x32xf32>
    %cst_81 = arith.constant 1.000000e+00 : f32
    %335 = vector.broadcast %cst_81 : f32 to vector<2x32xf32>
    %336 = arith.addf %335, %334 : vector<2x32xf32>
    %337 = arith.divf %335, %336 : vector<2x32xf32>
    %338 = vector.extract_strided_slice %327 {offsets = [0, 32], sizes = [2, 32], strides = [1, 1]} : vector<2x96xf32> to vector<2x32xf32>
    %339 = vector.extract_strided_slice %328 {offsets = [0, 32], sizes = [2, 32], strides = [1, 1]} : vector<2x96xf32> to vector<2x32xf32>
    %340 = arith.addf %338, %339 : vector<2x32xf32>
    %341 = arith.negf %340 : vector<2x32xf32>
    %342 = math.exp %341 : vector<2x32xf32>
    %cst_82 = arith.constant 1.000000e+00 : f32
    %343 = vector.broadcast %cst_82 : f32 to vector<2x32xf32>
    %344 = arith.addf %343, %342 : vector<2x32xf32>
    %345 = arith.divf %343, %344 : vector<2x32xf32>
    %346 = vector.extract_strided_slice %327 {offsets = [0, 64], sizes = [2, 32], strides = [1, 1]} : vector<2x96xf32> to vector<2x32xf32>
    %347 = vector.extract_strided_slice %328 {offsets = [0, 64], sizes = [2, 32], strides = [1, 1]} : vector<2x96xf32> to vector<2x32xf32>
    %348 = arith.mulf %337, %347 : vector<2x32xf32>
    %349 = arith.addf %346, %348 : vector<2x32xf32>
    %350 = math.tanh %349 : vector<2x32xf32>
    %cst_83 = arith.constant 1.000000e+00 : f32
    %351 = vector.broadcast %cst_83 : f32 to vector<2x32xf32>
    %352 = arith.subf %351, %345 : vector<2x32xf32>
    %353 = arith.mulf %352, %350 : vector<2x32xf32>
    %354 = arith.mulf %345, %329 : vector<2x32xf32>
    %355 = arith.addf %353, %354 : vector<2x32xf32>
    %356 = tpu.concatenate %326, %355 in 1 : vector<2x32xf32>, vector<2x32xf32> -> vector<2x64xf32>
    %c0_84 = arith.constant 0 : index
    %c4_85 = arith.constant 4 : index
    %c0_86 = arith.constant 0 : index
    %357 = vector.load %arg3[%c0_84, %c4_85, %c0_86] : memref<2x8x64xf32, #tpu.memory_space<vmem>>, vector<2x1x32xf32>
    %358 = vector.shape_cast %357 : vector<2x1x32xf32> to vector<2x32xf32>
    %359 = vector.shape_cast %326 : vector<2x32xf32> to vector<2x1x32xf32>
    tpu.vector_store %arg3[%c0_84, %c4_85, %c0_86], %359 {strides = array<i32>} : memref<2x8x64xf32, #tpu.memory_space<vmem>>, vector<2x1x32xf32>,
    %c0_87 = arith.constant 0 : index
    %c3_88 = arith.constant 3 : index
    %c32_89 = arith.constant 32 : index
    %360 = vector.load %arg3[%c0_87, %c3_88, %c32_89] : memref<2x8x64xf32, #tpu.memory_space<vmem>>, vector<2x1x32xf32>
    %361 = vector.shape_cast %360 : vector<2x1x32xf32> to vector<2x32xf32>
    %362 = vector.shape_cast %355 : vector<2x32xf32> to vector<2x1x32xf32>
    tpu.vector_store %arg3[%c0_87, %c3_88, %c32_89], %362 {strides = array<i32>} : memref<2x8x64xf32, #tpu.memory_space<vmem>>, vector<2x1x32xf32>,
    %cst_90 = arith.constant dense<0.000000e+00> : vector<2x192xf32>
    %363 = tpu.matmul %356, %0, %cst_90 {dimension_numbers = #tpu.dot_dimension_numbers<[1], [0], [0], [1], [0, 0, 1, 1], [], []>} : vector<2x64xf32>, vector<64x192xf32>, vector<2x192xf32> -> vector<2x192xf32>
    %364 = vector.broadcast %1 : vector<1x192xf32> to vector<2x192xf32>
    %365 = arith.addf %363, %364 : vector<2x192xf32>
    %c5_91 = arith.constant 5 : index
    %c0_92 = arith.constant 0 : index
    %c0_93 = arith.constant 0 : index
    %366 = vector.load %arg0[%c5_91, %c0_92, %c0_93] : memref<8x2x192xf32, #tpu.memory_space<vmem>>, vector<1x2x192xf32>
    %367 = vector.shape_cast %366 : vector<1x2x192xf32> to vector<2x192xf32>
    %c2_94 = arith.constant 2 : index
    %c0_95 = arith.constant 0 : index
    %c0_96 = arith.constant 0 : index
    %368 = vector.load %arg0[%c2_94, %c0_95, %c0_96] : memref<8x2x192xf32, #tpu.memory_space<vmem>>, vector<1x2x192xf32>
    %369 = vector.shape_cast %368 : vector<1x2x192xf32> to vector<2x192xf32>
    %370 = vector.extract_strided_slice %367 {offsets = [0, 0], sizes = [2, 96], strides = [1, 1]} : vector<2x192xf32> to vector<2x96xf32>
    %371 = vector.extract_strided_slice %365 {offsets = [0, 0], sizes = [2, 96], strides = [1, 1]} : vector<2x192xf32> to vector<2x96xf32>
    %372 = vector.extract_strided_slice %356 {offsets = [0, 0], sizes = [2, 32], strides = [1, 1]} : vector<2x64xf32> to vector<2x32xf32>
    %373 = vector.extract_strided_slice %370 {offsets = [0, 0], sizes = [2, 32], strides = [1, 1]} : vector<2x96xf32> to vector<2x32xf32>
    %374 = vector.extract_strided_slice %371 {offsets = [0, 0], sizes = [2, 32], strides = [1, 1]} : vector<2x96xf32> to vector<2x32xf32>
    %375 = arith.addf %373, %374 : vector<2x32xf32>
    %376 = arith.negf %375 : vector<2x32xf32>
    %377 = math.exp %376 : vector<2x32xf32>
    %cst_97 = arith.constant 1.000000e+00 : f32
    %378 = vector.broadcast %cst_97 : f32 to vector<2x32xf32>
    %379 = arith.addf %378, %377 : vector<2x32xf32>
    %380 = arith.divf %378, %379 : vector<2x32xf32>
    %381 = vector.extract_strided_slice %370 {offsets = [0, 32], sizes = [2, 32], strides = [1, 1]} : vector<2x96xf32> to vector<2x32xf32>
    %382 = vector.extract_strided_slice %371 {offsets = [0, 32], sizes = [2, 32], strides = [1, 1]} : vector<2x96xf32> to vector<2x32xf32>
    %383 = arith.addf %381, %382 : vector<2x32xf32>
    %384 = arith.negf %383 : vector<2x32xf32>
    %385 = math.exp %384 : vector<2x32xf32>
    %cst_98 = arith.constant 1.000000e+00 : f32
    %386 = vector.broadcast %cst_98 : f32 to vector<2x32xf32>
    %387 = arith.addf %386, %385 : vector<2x32xf32>
    %388 = arith.divf %386, %387 : vector<2x32xf32>
    %389 = vector.extract_strided_slice %370 {offsets = [0, 64], sizes = [2, 32], strides = [1, 1]} : vector<2x96xf32> to vector<2x32xf32>
    %390 = vector.extract_strided_slice %371 {offsets = [0, 64], sizes = [2, 32], strides = [1, 1]} : vector<2x96xf32> to vector<2x32xf32>
    %391 = arith.mulf %380, %390 : vector<2x32xf32>
    %392 = arith.addf %389, %391 : vector<2x32xf32>
    %393 = math.tanh %392 : vector<2x32xf32>
    %cst_99 = arith.constant 1.000000e+00 : f32
    %394 = vector.broadcast %cst_99 : f32 to vector<2x32xf32>
    %395 = arith.subf %394, %388 : vector<2x32xf32>
    %396 = arith.mulf %395, %393 : vector<2x32xf32>
    %397 = arith.mulf %388, %372 : vector<2x32xf32>
    %398 = arith.addf %396, %397 : vector<2x32xf32>
    %399 = vector.extract_strided_slice %369 {offsets = [0, 96], sizes = [2, 96], strides = [1, 1]} : vector<2x192xf32> to vector<2x96xf32>
    %400 = vector.extract_strided_slice %365 {offsets = [0, 96], sizes = [2, 96], strides = [1, 1]} : vector<2x192xf32> to vector<2x96xf32>
    %401 = vector.extract_strided_slice %356 {offsets = [0, 32], sizes = [2, 32], strides = [1, 1]} : vector<2x64xf32> to vector<2x32xf32>
    %402 = vector.extract_strided_slice %399 {offsets = [0, 0], sizes = [2, 32], strides = [1, 1]} : vector<2x96xf32> to vector<2x32xf32>
    %403 = vector.extract_strided_slice %400 {offsets = [0, 0], sizes = [2, 32], strides = [1, 1]} : vector<2x96xf32> to vector<2x32xf32>
    %404 = arith.addf %402, %403 : vector<2x32xf32>
    %405 = arith.negf %404 : vector<2x32xf32>
    %406 = math.exp %405 : vector<2x32xf32>
    %cst_100 = arith.constant 1.000000e+00 : f32
    %407 = vector.broadcast %cst_100 : f32 to vector<2x32xf32>
    %408 = arith.addf %407, %406 : vector<2x32xf32>
    %409 = arith.divf %407, %408 : vector<2x32xf32>
    %410 = vector.extract_strided_slice %399 {offsets = [0, 32], sizes = [2, 32], strides = [1, 1]} : vector<2x96xf32> to vector<2x32xf32>
    %411 = vector.extract_strided_slice %400 {offsets = [0, 32], sizes = [2, 32], strides = [1, 1]} : vector<2x96xf32> to vector<2x32xf32>
    %412 = arith.addf %410, %411 : vector<2x32xf32>
    %413 = arith.negf %412 : vector<2x32xf32>
    %414 = math.exp %413 : vector<2x32xf32>
    %cst_101 = arith.constant 1.000000e+00 : f32
    %415 = vector.broadcast %cst_101 : f32 to vector<2x32xf32>
    %416 = arith.addf %415, %414 : vector<2x32xf32>
    %417 = arith.divf %415, %416 : vector<2x32xf32>
    %418 = vector.extract_strided_slice %399 {offsets = [0, 64], sizes = [2, 32], strides = [1, 1]} : vector<2x96xf32> to vector<2x32xf32>
    %419 = vector.extract_strided_slice %400 {offsets = [0, 64], sizes = [2, 32], strides = [1, 1]} : vector<2x96xf32> to vector<2x32xf32>
    %420 = arith.mulf %409, %419 : vector<2x32xf32>
    %421 = arith.addf %418, %420 : vector<2x32xf32>
    %422 = math.tanh %421 : vector<2x32xf32>
    %cst_102 = arith.constant 1.000000e+00 : f32
    %423 = vector.broadcast %cst_102 : f32 to vector<2x32xf32>
    %424 = arith.subf %423, %417 : vector<2x32xf32>
    %425 = arith.mulf %424, %422 : vector<2x32xf32>
    %426 = arith.mulf %417, %401 : vector<2x32xf32>
    %427 = arith.addf %425, %426 : vector<2x32xf32>
    %428 = tpu.concatenate %398, %427 in 1 : vector<2x32xf32>, vector<2x32xf32> -> vector<2x64xf32>
    %c0_103 = arith.constant 0 : index
    %c5_104 = arith.constant 5 : index
    %c0_105 = arith.constant 0 : index
    %429 = vector.load %arg3[%c0_103, %c5_104, %c0_105] : memref<2x8x64xf32, #tpu.memory_space<vmem>>, vector<2x1x32xf32>
    %430 = vector.shape_cast %429 : vector<2x1x32xf32> to vector<2x32xf32>
    %431 = vector.shape_cast %398 : vector<2x32xf32> to vector<2x1x32xf32>
    tpu.vector_store %arg3[%c0_103, %c5_104, %c0_105], %431 {strides = array<i32>} : memref<2x8x64xf32, #tpu.memory_space<vmem>>, vector<2x1x32xf32>,
    %c0_106 = arith.constant 0 : index
    %c2_107 = arith.constant 2 : index
    %c32_108 = arith.constant 32 : index
    %432 = vector.load %arg3[%c0_106, %c2_107, %c32_108] : memref<2x8x64xf32, #tpu.memory_space<vmem>>, vector<2x1x32xf32>
    %433 = vector.shape_cast %432 : vector<2x1x32xf32> to vector<2x32xf32>
    %434 = vector.shape_cast %427 : vector<2x32xf32> to vector<2x1x32xf32>
    tpu.vector_store %arg3[%c0_106, %c2_107, %c32_108], %434 {strides = array<i32>} : memref<2x8x64xf32, #tpu.memory_space<vmem>>, vector<2x1x32xf32>,
    %cst_109 = arith.constant dense<0.000000e+00> : vector<2x192xf32>
    %435 = tpu.matmul %428, %0, %cst_109 {dimension_numbers = #tpu.dot_dimension_numbers<[1], [0], [0], [1], [0, 0, 1, 1], [], []>} : vector<2x64xf32>, vector<64x192xf32>, vector<2x192xf32> -> vector<2x192xf32>
    %436 = vector.broadcast %1 : vector<1x192xf32> to vector<2x192xf32>
    %437 = arith.addf %435, %436 : vector<2x192xf32>
    %c6_110 = arith.constant 6 : index
    %c0_111 = arith.constant 0 : index
    %c0_112 = arith.constant 0 : index
    %438 = vector.load %arg0[%c6_110, %c0_111, %c0_112] : memref<8x2x192xf32, #tpu.memory_space<vmem>>, vector<1x2x192xf32>
    %439 = vector.shape_cast %438 : vector<1x2x192xf32> to vector<2x192xf32>
    %c1_113 = arith.constant 1 : index
    %c0_114 = arith.constant 0 : index
    %c0_115 = arith.constant 0 : index
    %440 = vector.load %arg0[%c1_113, %c0_114, %c0_115] : memref<8x2x192xf32, #tpu.memory_space<vmem>>, vector<1x2x192xf32>
    %441 = vector.shape_cast %440 : vector<1x2x192xf32> to vector<2x192xf32>
    %442 = vector.extract_strided_slice %439 {offsets = [0, 0], sizes = [2, 96], strides = [1, 1]} : vector<2x192xf32> to vector<2x96xf32>
    %443 = vector.extract_strided_slice %437 {offsets = [0, 0], sizes = [2, 96], strides = [1, 1]} : vector<2x192xf32> to vector<2x96xf32>
    %444 = vector.extract_strided_slice %428 {offsets = [0, 0], sizes = [2, 32], strides = [1, 1]} : vector<2x64xf32> to vector<2x32xf32>
    %445 = vector.extract_strided_slice %442 {offsets = [0, 0], sizes = [2, 32], strides = [1, 1]} : vector<2x96xf32> to vector<2x32xf32>
    %446 = vector.extract_strided_slice %443 {offsets = [0, 0], sizes = [2, 32], strides = [1, 1]} : vector<2x96xf32> to vector<2x32xf32>
    %447 = arith.addf %445, %446 : vector<2x32xf32>
    %448 = arith.negf %447 : vector<2x32xf32>
    %449 = math.exp %448 : vector<2x32xf32>
    %cst_116 = arith.constant 1.000000e+00 : f32
    %450 = vector.broadcast %cst_116 : f32 to vector<2x32xf32>
    %451 = arith.addf %450, %449 : vector<2x32xf32>
    %452 = arith.divf %450, %451 : vector<2x32xf32>
    %453 = vector.extract_strided_slice %442 {offsets = [0, 32], sizes = [2, 32], strides = [1, 1]} : vector<2x96xf32> to vector<2x32xf32>
    %454 = vector.extract_strided_slice %443 {offsets = [0, 32], sizes = [2, 32], strides = [1, 1]} : vector<2x96xf32> to vector<2x32xf32>
    %455 = arith.addf %453, %454 : vector<2x32xf32>
    %456 = arith.negf %455 : vector<2x32xf32>
    %457 = math.exp %456 : vector<2x32xf32>
    %cst_117 = arith.constant 1.000000e+00 : f32
    %458 = vector.broadcast %cst_117 : f32 to vector<2x32xf32>
    %459 = arith.addf %458, %457 : vector<2x32xf32>
    %460 = arith.divf %458, %459 : vector<2x32xf32>
    %461 = vector.extract_strided_slice %442 {offsets = [0, 64], sizes = [2, 32], strides = [1, 1]} : vector<2x96xf32> to vector<2x32xf32>
    %462 = vector.extract_strided_slice %443 {offsets = [0, 64], sizes = [2, 32], strides = [1, 1]} : vector<2x96xf32> to vector<2x32xf32>
    %463 = arith.mulf %452, %462 : vector<2x32xf32>
    %464 = arith.addf %461, %463 : vector<2x32xf32>
    %465 = math.tanh %464 : vector<2x32xf32>
    %cst_118 = arith.constant 1.000000e+00 : f32
    %466 = vector.broadcast %cst_118 : f32 to vector<2x32xf32>
    %467 = arith.subf %466, %460 : vector<2x32xf32>
    %468 = arith.mulf %467, %465 : vector<2x32xf32>
    %469 = arith.mulf %460, %444 : vector<2x32xf32>
    %470 = arith.addf %468, %469 : vector<2x32xf32>
    %471 = vector.extract_strided_slice %441 {offsets = [0, 96], sizes = [2, 96], strides = [1, 1]} : vector<2x192xf32> to vector<2x96xf32>
    %472 = vector.extract_strided_slice %437 {offsets = [0, 96], sizes = [2, 96], strides = [1, 1]} : vector<2x192xf32> to vector<2x96xf32>
    %473 = vector.extract_strided_slice %428 {offsets = [0, 32], sizes = [2, 32], strides = [1, 1]} : vector<2x64xf32> to vector<2x32xf32>
    %474 = vector.extract_strided_slice %471 {offsets = [0, 0], sizes = [2, 32], strides = [1, 1]} : vector<2x96xf32> to vector<2x32xf32>
    %475 = vector.extract_strided_slice %472 {offsets = [0, 0], sizes = [2, 32], strides = [1, 1]} : vector<2x96xf32> to vector<2x32xf32>
    %476 = arith.addf %474, %475 : vector<2x32xf32>
    %477 = arith.negf %476 : vector<2x32xf32>
    %478 = math.exp %477 : vector<2x32xf32>
    %cst_119 = arith.constant 1.000000e+00 : f32
    %479 = vector.broadcast %cst_119 : f32 to vector<2x32xf32>
    %480 = arith.addf %479, %478 : vector<2x32xf32>
    %481 = arith.divf %479, %480 : vector<2x32xf32>
    %482 = vector.extract_strided_slice %471 {offsets = [0, 32], sizes = [2, 32], strides = [1, 1]} : vector<2x96xf32> to vector<2x32xf32>
    %483 = vector.extract_strided_slice %472 {offsets = [0, 32], sizes = [2, 32], strides = [1, 1]} : vector<2x96xf32> to vector<2x32xf32>
    %484 = arith.addf %482, %483 : vector<2x32xf32>
    %485 = arith.negf %484 : vector<2x32xf32>
    %486 = math.exp %485 : vector<2x32xf32>
    %cst_120 = arith.constant 1.000000e+00 : f32
    %487 = vector.broadcast %cst_120 : f32 to vector<2x32xf32>
    %488 = arith.addf %487, %486 : vector<2x32xf32>
    %489 = arith.divf %487, %488 : vector<2x32xf32>
    %490 = vector.extract_strided_slice %471 {offsets = [0, 64], sizes = [2, 32], strides = [1, 1]} : vector<2x96xf32> to vector<2x32xf32>
    %491 = vector.extract_strided_slice %472 {offsets = [0, 64], sizes = [2, 32], strides = [1, 1]} : vector<2x96xf32> to vector<2x32xf32>
    %492 = arith.mulf %481, %491 : vector<2x32xf32>
    %493 = arith.addf %490, %492 : vector<2x32xf32>
    %494 = math.tanh %493 : vector<2x32xf32>
    %cst_121 = arith.constant 1.000000e+00 : f32
    %495 = vector.broadcast %cst_121 : f32 to vector<2x32xf32>
    %496 = arith.subf %495, %489 : vector<2x32xf32>
    %497 = arith.mulf %496, %494 : vector<2x32xf32>
    %498 = arith.mulf %489, %473 : vector<2x32xf32>
    %499 = arith.addf %497, %498 : vector<2x32xf32>
    %500 = tpu.concatenate %470, %499 in 1 : vector<2x32xf32>, vector<2x32xf32> -> vector<2x64xf32>
    %c0_122 = arith.constant 0 : index
    %c6_123 = arith.constant 6 : index
    %c0_124 = arith.constant 0 : index
    %501 = vector.load %arg3[%c0_122, %c6_123, %c0_124] : memref<2x8x64xf32, #tpu.memory_space<vmem>>, vector<2x1x32xf32>
    %502 = vector.shape_cast %501 : vector<2x1x32xf32> to vector<2x32xf32>
    %503 = vector.shape_cast %470 : vector<2x32xf32> to vector<2x1x32xf32>
    tpu.vector_store %arg3[%c0_122, %c6_123, %c0_124], %503 {strides = array<i32>} : memref<2x8x64xf32, #tpu.memory_space<vmem>>, vector<2x1x32xf32>,
    %c0_125 = arith.constant 0 : index
    %c1_126 = arith.constant 1 : index
    %c32_127 = arith.constant 32 : index
    %504 = vector.load %arg3[%c0_125, %c1_126, %c32_127] : memref<2x8x64xf32, #tpu.memory_space<vmem>>, vector<2x1x32xf32>
    %505 = vector.shape_cast %504 : vector<2x1x32xf32> to vector<2x32xf32>
    %506 = vector.shape_cast %499 : vector<2x32xf32> to vector<2x1x32xf32>
    tpu.vector_store %arg3[%c0_125, %c1_126, %c32_127], %506 {strides = array<i32>} : memref<2x8x64xf32, #tpu.memory_space<vmem>>, vector<2x1x32xf32>,
    %cst_128 = arith.constant dense<0.000000e+00> : vector<2x192xf32>
    %507 = tpu.matmul %500, %0, %cst_128 {dimension_numbers = #tpu.dot_dimension_numbers<[1], [0], [0], [1], [0, 0, 1, 1], [], []>} : vector<2x64xf32>, vector<64x192xf32>, vector<2x192xf32> -> vector<2x192xf32>
    %508 = vector.broadcast %1 : vector<1x192xf32> to vector<2x192xf32>
    %509 = arith.addf %507, %508 : vector<2x192xf32>
    %c7_129 = arith.constant 7 : index
    %c0_130 = arith.constant 0 : index
    %c0_131 = arith.constant 0 : index
    %510 = vector.load %arg0[%c7_129, %c0_130, %c0_131] : memref<8x2x192xf32, #tpu.memory_space<vmem>>, vector<1x2x192xf32>
    %511 = vector.shape_cast %510 : vector<1x2x192xf32> to vector<2x192xf32>
    %c0_132 = arith.constant 0 : index
    %c0_133 = arith.constant 0 : index
    %c0_134 = arith.constant 0 : index
    %512 = vector.load %arg0[%c0_132, %c0_133, %c0_134] : memref<8x2x192xf32, #tpu.memory_space<vmem>>, vector<1x2x192xf32>
    %513 = vector.shape_cast %512 : vector<1x2x192xf32> to vector<2x192xf32>
    %514 = vector.extract_strided_slice %511 {offsets = [0, 0], sizes = [2, 96], strides = [1, 1]} : vector<2x192xf32> to vector<2x96xf32>
    %515 = vector.extract_strided_slice %509 {offsets = [0, 0], sizes = [2, 96], strides = [1, 1]} : vector<2x192xf32> to vector<2x96xf32>
    %516 = vector.extract_strided_slice %500 {offsets = [0, 0], sizes = [2, 32], strides = [1, 1]} : vector<2x64xf32> to vector<2x32xf32>
    %517 = vector.extract_strided_slice %514 {offsets = [0, 0], sizes = [2, 32], strides = [1, 1]} : vector<2x96xf32> to vector<2x32xf32>
    %518 = vector.extract_strided_slice %515 {offsets = [0, 0], sizes = [2, 32], strides = [1, 1]} : vector<2x96xf32> to vector<2x32xf32>
    %519 = arith.addf %517, %518 : vector<2x32xf32>
    %520 = arith.negf %519 : vector<2x32xf32>
    %521 = math.exp %520 : vector<2x32xf32>
    %cst_135 = arith.constant 1.000000e+00 : f32
    %522 = vector.broadcast %cst_135 : f32 to vector<2x32xf32>
    %523 = arith.addf %522, %521 : vector<2x32xf32>
    %524 = arith.divf %522, %523 : vector<2x32xf32>
    %525 = vector.extract_strided_slice %514 {offsets = [0, 32], sizes = [2, 32], strides = [1, 1]} : vector<2x96xf32> to vector<2x32xf32>
    %526 = vector.extract_strided_slice %515 {offsets = [0, 32], sizes = [2, 32], strides = [1, 1]} : vector<2x96xf32> to vector<2x32xf32>
    %527 = arith.addf %525, %526 : vector<2x32xf32>
    %528 = arith.negf %527 : vector<2x32xf32>
    %529 = math.exp %528 : vector<2x32xf32>
    %cst_136 = arith.constant 1.000000e+00 : f32
    %530 = vector.broadcast %cst_136 : f32 to vector<2x32xf32>
    %531 = arith.addf %530, %529 : vector<2x32xf32>
    %532 = arith.divf %530, %531 : vector<2x32xf32>
    %533 = vector.extract_strided_slice %514 {offsets = [0, 64], sizes = [2, 32], strides = [1, 1]} : vector<2x96xf32> to vector<2x32xf32>
    %534 = vector.extract_strided_slice %515 {offsets = [0, 64], sizes = [2, 32], strides = [1, 1]} : vector<2x96xf32> to vector<2x32xf32>
    %535 = arith.mulf %524, %534 : vector<2x32xf32>
    %536 = arith.addf %533, %535 : vector<2x32xf32>
    %537 = math.tanh %536 : vector<2x32xf32>
    %cst_137 = arith.constant 1.000000e+00 : f32
    %538 = vector.broadcast %cst_137 : f32 to vector<2x32xf32>
    %539 = arith.subf %538, %532 : vector<2x32xf32>
    %540 = arith.mulf %539, %537 : vector<2x32xf32>
    %541 = arith.mulf %532, %516 : vector<2x32xf32>
    %542 = arith.addf %540, %541 : vector<2x32xf32>
    %543 = vector.extract_strided_slice %513 {offsets = [0, 96], sizes = [2, 96], strides = [1, 1]} : vector<2x192xf32> to vector<2x96xf32>
    %544 = vector.extract_strided_slice %509 {offsets = [0, 96], sizes = [2, 96], strides = [1, 1]} : vector<2x192xf32> to vector<2x96xf32>
    %545 = vector.extract_strided_slice %500 {offsets = [0, 32], sizes = [2, 32], strides = [1, 1]} : vector<2x64xf32> to vector<2x32xf32>
    %546 = vector.extract_strided_slice %543 {offsets = [0, 0], sizes = [2, 32], strides = [1, 1]} : vector<2x96xf32> to vector<2x32xf32>
    %547 = vector.extract_strided_slice %544 {offsets = [0, 0], sizes = [2, 32], strides = [1, 1]} : vector<2x96xf32> to vector<2x32xf32>
    %548 = arith.addf %546, %547 : vector<2x32xf32>
    %549 = arith.negf %548 : vector<2x32xf32>
    %550 = math.exp %549 : vector<2x32xf32>
    %cst_138 = arith.constant 1.000000e+00 : f32
    %551 = vector.broadcast %cst_138 : f32 to vector<2x32xf32>
    %552 = arith.addf %551, %550 : vector<2x32xf32>
    %553 = arith.divf %551, %552 : vector<2x32xf32>
    %554 = vector.extract_strided_slice %543 {offsets = [0, 32], sizes = [2, 32], strides = [1, 1]} : vector<2x96xf32> to vector<2x32xf32>
    %555 = vector.extract_strided_slice %544 {offsets = [0, 32], sizes = [2, 32], strides = [1, 1]} : vector<2x96xf32> to vector<2x32xf32>
    %556 = arith.addf %554, %555 : vector<2x32xf32>
    %557 = arith.negf %556 : vector<2x32xf32>
    %558 = math.exp %557 : vector<2x32xf32>
    %cst_139 = arith.constant 1.000000e+00 : f32
    %559 = vector.broadcast %cst_139 : f32 to vector<2x32xf32>
    %560 = arith.addf %559, %558 : vector<2x32xf32>
    %561 = arith.divf %559, %560 : vector<2x32xf32>
    %562 = vector.extract_strided_slice %543 {offsets = [0, 64], sizes = [2, 32], strides = [1, 1]} : vector<2x96xf32> to vector<2x32xf32>
    %563 = vector.extract_strided_slice %544 {offsets = [0, 64], sizes = [2, 32], strides = [1, 1]} : vector<2x96xf32> to vector<2x32xf32>
    %564 = arith.mulf %553, %563 : vector<2x32xf32>
    %565 = arith.addf %562, %564 : vector<2x32xf32>
    %566 = math.tanh %565 : vector<2x32xf32>
    %cst_140 = arith.constant 1.000000e+00 : f32
    %567 = vector.broadcast %cst_140 : f32 to vector<2x32xf32>
    %568 = arith.subf %567, %561 : vector<2x32xf32>
    %569 = arith.mulf %568, %566 : vector<2x32xf32>
    %570 = arith.mulf %561, %545 : vector<2x32xf32>
    %571 = arith.addf %569, %570 : vector<2x32xf32>
    %572 = tpu.concatenate %542, %571 in 1 : vector<2x32xf32>, vector<2x32xf32> -> vector<2x64xf32>
    %c0_141 = arith.constant 0 : index
    %c7_142 = arith.constant 7 : index
    %c0_143 = arith.constant 0 : index
    %573 = vector.load %arg3[%c0_141, %c7_142, %c0_143] : memref<2x8x64xf32, #tpu.memory_space<vmem>>, vector<2x1x32xf32>
    %574 = vector.shape_cast %573 : vector<2x1x32xf32> to vector<2x32xf32>
    %575 = vector.shape_cast %542 : vector<2x32xf32> to vector<2x1x32xf32>
    tpu.vector_store %arg3[%c0_141, %c7_142, %c0_143], %575 {strides = array<i32>} : memref<2x8x64xf32, #tpu.memory_space<vmem>>, vector<2x1x32xf32>,
    %c0_144 = arith.constant 0 : index
    %c0_145 = arith.constant 0 : index
    %c32_146 = arith.constant 32 : index
    %576 = vector.load %arg3[%c0_144, %c0_145, %c32_146] : memref<2x8x64xf32, #tpu.memory_space<vmem>>, vector<2x1x32xf32>
    %577 = vector.shape_cast %576 : vector<2x1x32xf32> to vector<2x32xf32>
    %578 = vector.shape_cast %571 : vector<2x32xf32> to vector<2x1x32xf32>
    tpu.vector_store %arg3[%c0_144, %c0_145, %c32_146], %578 {strides = array<i32>} : memref<2x8x64xf32, #tpu.memory_space<vmem>>, vector<2x1x32xf32>,
    %c0_147 = arith.constant 0 : index
    %c0_148 = arith.constant 0 : index
    %579 = vector.load %arg4[%c0_147, %c0_148] : memref<2x64xf32, #tpu.memory_space<vmem>>, vector<2x64xf32>
    tpu.vector_store %arg4[%c0_147, %c0_148], %572 {strides = array<i32>} : memref<2x64xf32, #tpu.memory_space<vmem>>, vector<2x64xf32>,
    return
  }
}

module attributes {stable_mosaic.version = 11 : i64} {
  func.func @_decoder_kernel(%arg0: memref<6x2x192xf32, #tpu.memory_space<vmem>>, %arg1: memref<2x64xf32, #tpu.memory_space<vmem>>, %arg2: memref<64x192xf32, #tpu.memory_space<vmem>>, %arg3: memref<1x192xf32, #tpu.memory_space<vmem>>, %arg4: memref<2x8x64xf32, #tpu.memory_space<vmem>>, %arg5: memref<64x64xf32, #tpu.memory_space<vmem>>, %arg6: memref<64x64xf32, #tpu.memory_space<vmem>>, %arg7: memref<1x64xf32, #tpu.memory_space<vmem>>, %arg8: memref<64x24xf32, #tpu.memory_space<vmem>>, %arg9: memref<1x24xf32, #tpu.memory_space<vmem>>, %arg10: memref<2x6x24xf32, #tpu.memory_space<vmem>>, %arg11: memref<2x64xf32, #tpu.memory_space<vmem>>, %arg12: memref<2x6x64xf32, #tpu.memory_space<vmem>>) attributes {dimension_semantics = [], scalar_prefetch = 0 : i64, scratch_operands = 1 : i64, tpu.core_type = #tpu.core_type<tc>} {
    %c0 = arith.constant 0 : index
    %c0_0 = arith.constant 0 : index
    %0 = vector.load %arg2[%c0, %c0_0] : memref<64x192xf32, #tpu.memory_space<vmem>>, vector<64x192xf32>
    %c0_1 = arith.constant 0 : index
    %c0_2 = arith.constant 0 : index
    %1 = vector.load %arg3[%c0_1, %c0_2] : memref<1x192xf32, #tpu.memory_space<vmem>>, vector<1x192xf32>
    %c0_3 = arith.constant 0 : index
    %c0_4 = arith.constant 0 : index
    %2 = vector.load %arg1[%c0_3, %c0_4] : memref<2x64xf32, #tpu.memory_space<vmem>>, vector<2x64xf32>
    %cst = arith.constant dense<0.000000e+00> : vector<2x192xf32>
    %3 = tpu.matmul %2, %0, %cst {dimension_numbers = #tpu.dot_dimension_numbers<[1], [0], [0], [1], [0, 0, 1, 1], [], []>} : vector<2x64xf32>, vector<64x192xf32>, vector<2x192xf32> -> vector<2x192xf32>
    %4 = vector.broadcast %1 : vector<1x192xf32> to vector<2x192xf32>
    %5 = arith.addf %3, %4 : vector<2x192xf32>
    %c0_5 = arith.constant 0 : index
    %c0_6 = arith.constant 0 : index
    %c0_7 = arith.constant 0 : index
    %6 = vector.load %arg0[%c0_5, %c0_6, %c0_7] : memref<6x2x192xf32, #tpu.memory_space<vmem>>, vector<1x2x192xf32>
    %7 = vector.shape_cast %6 : vector<1x2x192xf32> to vector<2x192xf32>
    %8 = vector.extract_strided_slice %7 {offsets = [0, 0], sizes = [2, 64], strides = [1, 1]} : vector<2x192xf32> to vector<2x64xf32>
    %9 = vector.extract_strided_slice %5 {offsets = [0, 0], sizes = [2, 64], strides = [1, 1]} : vector<2x192xf32> to vector<2x64xf32>
    %10 = arith.addf %8, %9 : vector<2x64xf32>
    %11 = arith.negf %10 : vector<2x64xf32>
    %12 = math.exp %11 : vector<2x64xf32>
    %cst_8 = arith.constant 1.000000e+00 : f32
    %13 = vector.broadcast %cst_8 : f32 to vector<2x64xf32>
    %14 = arith.addf %13, %12 : vector<2x64xf32>
    %15 = arith.divf %13, %14 : vector<2x64xf32>
    %16 = vector.extract_strided_slice %7 {offsets = [0, 64], sizes = [2, 64], strides = [1, 1]} : vector<2x192xf32> to vector<2x64xf32>
    %17 = vector.extract_strided_slice %5 {offsets = [0, 64], sizes = [2, 64], strides = [1, 1]} : vector<2x192xf32> to vector<2x64xf32>
    %18 = arith.addf %16, %17 : vector<2x64xf32>
    %19 = arith.negf %18 : vector<2x64xf32>
    %20 = math.exp %19 : vector<2x64xf32>
    %cst_9 = arith.constant 1.000000e+00 : f32
    %21 = vector.broadcast %cst_9 : f32 to vector<2x64xf32>
    %22 = arith.addf %21, %20 : vector<2x64xf32>
    %23 = arith.divf %21, %22 : vector<2x64xf32>
    %24 = vector.extract_strided_slice %7 {offsets = [0, 128], sizes = [2, 64], strides = [1, 1]} : vector<2x192xf32> to vector<2x64xf32>
    %25 = vector.extract_strided_slice %5 {offsets = [0, 128], sizes = [2, 64], strides = [1, 1]} : vector<2x192xf32> to vector<2x64xf32>
    %26 = arith.mulf %15, %25 : vector<2x64xf32>
    %27 = arith.addf %24, %26 : vector<2x64xf32>
    %28 = math.tanh %27 : vector<2x64xf32>
    %cst_10 = arith.constant 1.000000e+00 : f32
    %29 = vector.broadcast %cst_10 : f32 to vector<2x64xf32>
    %30 = arith.subf %29, %23 : vector<2x64xf32>
    %31 = arith.mulf %30, %28 : vector<2x64xf32>
    %32 = arith.mulf %23, %2 : vector<2x64xf32>
    %33 = arith.addf %31, %32 : vector<2x64xf32>
    %c0_11 = arith.constant 0 : index
    %c0_12 = arith.constant 0 : index
    %c0_13 = arith.constant 0 : index
    %34 = vector.load %arg12[%c0_11, %c0_12, %c0_13] : memref<2x6x64xf32, #tpu.memory_space<vmem>>, vector<2x1x64xf32>
    %35 = vector.shape_cast %34 : vector<2x1x64xf32> to vector<2x64xf32>
    %36 = vector.shape_cast %33 : vector<2x64xf32> to vector<2x1x64xf32>
    tpu.vector_store %arg12[%c0_11, %c0_12, %c0_13], %36 {strides = array<i32>} : memref<2x6x64xf32, #tpu.memory_space<vmem>>, vector<2x1x64xf32>,
    %cst_14 = arith.constant dense<0.000000e+00> : vector<2x192xf32>
    %37 = tpu.matmul %33, %0, %cst_14 {dimension_numbers = #tpu.dot_dimension_numbers<[1], [0], [0], [1], [0, 0, 1, 1], [], []>} : vector<2x64xf32>, vector<64x192xf32>, vector<2x192xf32> -> vector<2x192xf32>
    %38 = vector.broadcast %1 : vector<1x192xf32> to vector<2x192xf32>
    %39 = arith.addf %37, %38 : vector<2x192xf32>
    %c1 = arith.constant 1 : index
    %c0_15 = arith.constant 0 : index
    %c0_16 = arith.constant 0 : index
    %40 = vector.load %arg0[%c1, %c0_15, %c0_16] : memref<6x2x192xf32, #tpu.memory_space<vmem>>, vector<1x2x192xf32>
    %41 = vector.shape_cast %40 : vector<1x2x192xf32> to vector<2x192xf32>
    %42 = vector.extract_strided_slice %41 {offsets = [0, 0], sizes = [2, 64], strides = [1, 1]} : vector<2x192xf32> to vector<2x64xf32>
    %43 = vector.extract_strided_slice %39 {offsets = [0, 0], sizes = [2, 64], strides = [1, 1]} : vector<2x192xf32> to vector<2x64xf32>
    %44 = arith.addf %42, %43 : vector<2x64xf32>
    %45 = arith.negf %44 : vector<2x64xf32>
    %46 = math.exp %45 : vector<2x64xf32>
    %cst_17 = arith.constant 1.000000e+00 : f32
    %47 = vector.broadcast %cst_17 : f32 to vector<2x64xf32>
    %48 = arith.addf %47, %46 : vector<2x64xf32>
    %49 = arith.divf %47, %48 : vector<2x64xf32>
    %50 = vector.extract_strided_slice %41 {offsets = [0, 64], sizes = [2, 64], strides = [1, 1]} : vector<2x192xf32> to vector<2x64xf32>
    %51 = vector.extract_strided_slice %39 {offsets = [0, 64], sizes = [2, 64], strides = [1, 1]} : vector<2x192xf32> to vector<2x64xf32>
    %52 = arith.addf %50, %51 : vector<2x64xf32>
    %53 = arith.negf %52 : vector<2x64xf32>
    %54 = math.exp %53 : vector<2x64xf32>
    %cst_18 = arith.constant 1.000000e+00 : f32
    %55 = vector.broadcast %cst_18 : f32 to vector<2x64xf32>
    %56 = arith.addf %55, %54 : vector<2x64xf32>
    %57 = arith.divf %55, %56 : vector<2x64xf32>
    %58 = vector.extract_strided_slice %41 {offsets = [0, 128], sizes = [2, 64], strides = [1, 1]} : vector<2x192xf32> to vector<2x64xf32>
    %59 = vector.extract_strided_slice %39 {offsets = [0, 128], sizes = [2, 64], strides = [1, 1]} : vector<2x192xf32> to vector<2x64xf32>
    %60 = arith.mulf %49, %59 : vector<2x64xf32>
    %61 = arith.addf %58, %60 : vector<2x64xf32>
    %62 = math.tanh %61 : vector<2x64xf32>
    %cst_19 = arith.constant 1.000000e+00 : f32
    %63 = vector.broadcast %cst_19 : f32 to vector<2x64xf32>
    %64 = arith.subf %63, %57 : vector<2x64xf32>
    %65 = arith.mulf %64, %62 : vector<2x64xf32>
    %66 = arith.mulf %57, %33 : vector<2x64xf32>
    %67 = arith.addf %65, %66 : vector<2x64xf32>
    %c0_20 = arith.constant 0 : index
    %c1_21 = arith.constant 1 : index
    %c0_22 = arith.constant 0 : index
    %68 = vector.load %arg12[%c0_20, %c1_21, %c0_22] : memref<2x6x64xf32, #tpu.memory_space<vmem>>, vector<2x1x64xf32>
    %69 = vector.shape_cast %68 : vector<2x1x64xf32> to vector<2x64xf32>
    %70 = vector.shape_cast %67 : vector<2x64xf32> to vector<2x1x64xf32>
    tpu.vector_store %arg12[%c0_20, %c1_21, %c0_22], %70 {strides = array<i32>} : memref<2x6x64xf32, #tpu.memory_space<vmem>>, vector<2x1x64xf32>,
    %cst_23 = arith.constant dense<0.000000e+00> : vector<2x192xf32>
    %71 = tpu.matmul %67, %0, %cst_23 {dimension_numbers = #tpu.dot_dimension_numbers<[1], [0], [0], [1], [0, 0, 1, 1], [], []>} : vector<2x64xf32>, vector<64x192xf32>, vector<2x192xf32> -> vector<2x192xf32>
    %72 = vector.broadcast %1 : vector<1x192xf32> to vector<2x192xf32>
    %73 = arith.addf %71, %72 : vector<2x192xf32>
    %c2 = arith.constant 2 : index
    %c0_24 = arith.constant 0 : index
    %c0_25 = arith.constant 0 : index
    %74 = vector.load %arg0[%c2, %c0_24, %c0_25] : memref<6x2x192xf32, #tpu.memory_space<vmem>>, vector<1x2x192xf32>
    %75 = vector.shape_cast %74 : vector<1x2x192xf32> to vector<2x192xf32>
    %76 = vector.extract_strided_slice %75 {offsets = [0, 0], sizes = [2, 64], strides = [1, 1]} : vector<2x192xf32> to vector<2x64xf32>
    %77 = vector.extract_strided_slice %73 {offsets = [0, 0], sizes = [2, 64], strides = [1, 1]} : vector<2x192xf32> to vector<2x64xf32>
    %78 = arith.addf %76, %77 : vector<2x64xf32>
    %79 = arith.negf %78 : vector<2x64xf32>
    %80 = math.exp %79 : vector<2x64xf32>
    %cst_26 = arith.constant 1.000000e+00 : f32
    %81 = vector.broadcast %cst_26 : f32 to vector<2x64xf32>
    %82 = arith.addf %81, %80 : vector<2x64xf32>
    %83 = arith.divf %81, %82 : vector<2x64xf32>
    %84 = vector.extract_strided_slice %75 {offsets = [0, 64], sizes = [2, 64], strides = [1, 1]} : vector<2x192xf32> to vector<2x64xf32>
    %85 = vector.extract_strided_slice %73 {offsets = [0, 64], sizes = [2, 64], strides = [1, 1]} : vector<2x192xf32> to vector<2x64xf32>
    %86 = arith.addf %84, %85 : vector<2x64xf32>
    %87 = arith.negf %86 : vector<2x64xf32>
    %88 = math.exp %87 : vector<2x64xf32>
    %cst_27 = arith.constant 1.000000e+00 : f32
    %89 = vector.broadcast %cst_27 : f32 to vector<2x64xf32>
    %90 = arith.addf %89, %88 : vector<2x64xf32>
    %91 = arith.divf %89, %90 : vector<2x64xf32>
    %92 = vector.extract_strided_slice %75 {offsets = [0, 128], sizes = [2, 64], strides = [1, 1]} : vector<2x192xf32> to vector<2x64xf32>
    %93 = vector.extract_strided_slice %73 {offsets = [0, 128], sizes = [2, 64], strides = [1, 1]} : vector<2x192xf32> to vector<2x64xf32>
    %94 = arith.mulf %83, %93 : vector<2x64xf32>
    %95 = arith.addf %92, %94 : vector<2x64xf32>
    %96 = math.tanh %95 : vector<2x64xf32>
    %cst_28 = arith.constant 1.000000e+00 : f32
    %97 = vector.broadcast %cst_28 : f32 to vector<2x64xf32>
    %98 = arith.subf %97, %91 : vector<2x64xf32>
    %99 = arith.mulf %98, %96 : vector<2x64xf32>
    %100 = arith.mulf %91, %67 : vector<2x64xf32>
    %101 = arith.addf %99, %100 : vector<2x64xf32>
    %c0_29 = arith.constant 0 : index
    %c2_30 = arith.constant 2 : index
    %c0_31 = arith.constant 0 : index
    %102 = vector.load %arg12[%c0_29, %c2_30, %c0_31] : memref<2x6x64xf32, #tpu.memory_space<vmem>>, vector<2x1x64xf32>
    %103 = vector.shape_cast %102 : vector<2x1x64xf32> to vector<2x64xf32>
    %104 = vector.shape_cast %101 : vector<2x64xf32> to vector<2x1x64xf32>
    tpu.vector_store %arg12[%c0_29, %c2_30, %c0_31], %104 {strides = array<i32>} : memref<2x6x64xf32, #tpu.memory_space<vmem>>, vector<2x1x64xf32>,
    %cst_32 = arith.constant dense<0.000000e+00> : vector<2x192xf32>
    %105 = tpu.matmul %101, %0, %cst_32 {dimension_numbers = #tpu.dot_dimension_numbers<[1], [0], [0], [1], [0, 0, 1, 1], [], []>} : vector<2x64xf32>, vector<64x192xf32>, vector<2x192xf32> -> vector<2x192xf32>
    %106 = vector.broadcast %1 : vector<1x192xf32> to vector<2x192xf32>
    %107 = arith.addf %105, %106 : vector<2x192xf32>
    %c3 = arith.constant 3 : index
    %c0_33 = arith.constant 0 : index
    %c0_34 = arith.constant 0 : index
    %108 = vector.load %arg0[%c3, %c0_33, %c0_34] : memref<6x2x192xf32, #tpu.memory_space<vmem>>, vector<1x2x192xf32>
    %109 = vector.shape_cast %108 : vector<1x2x192xf32> to vector<2x192xf32>
    %110 = vector.extract_strided_slice %109 {offsets = [0, 0], sizes = [2, 64], strides = [1, 1]} : vector<2x192xf32> to vector<2x64xf32>
    %111 = vector.extract_strided_slice %107 {offsets = [0, 0], sizes = [2, 64], strides = [1, 1]} : vector<2x192xf32> to vector<2x64xf32>
    %112 = arith.addf %110, %111 : vector<2x64xf32>
    %113 = arith.negf %112 : vector<2x64xf32>
    %114 = math.exp %113 : vector<2x64xf32>
    %cst_35 = arith.constant 1.000000e+00 : f32
    %115 = vector.broadcast %cst_35 : f32 to vector<2x64xf32>
    %116 = arith.addf %115, %114 : vector<2x64xf32>
    %117 = arith.divf %115, %116 : vector<2x64xf32>
    %118 = vector.extract_strided_slice %109 {offsets = [0, 64], sizes = [2, 64], strides = [1, 1]} : vector<2x192xf32> to vector<2x64xf32>
    %119 = vector.extract_strided_slice %107 {offsets = [0, 64], sizes = [2, 64], strides = [1, 1]} : vector<2x192xf32> to vector<2x64xf32>
    %120 = arith.addf %118, %119 : vector<2x64xf32>
    %121 = arith.negf %120 : vector<2x64xf32>
    %122 = math.exp %121 : vector<2x64xf32>
    %cst_36 = arith.constant 1.000000e+00 : f32
    %123 = vector.broadcast %cst_36 : f32 to vector<2x64xf32>
    %124 = arith.addf %123, %122 : vector<2x64xf32>
    %125 = arith.divf %123, %124 : vector<2x64xf32>
    %126 = vector.extract_strided_slice %109 {offsets = [0, 128], sizes = [2, 64], strides = [1, 1]} : vector<2x192xf32> to vector<2x64xf32>
    %127 = vector.extract_strided_slice %107 {offsets = [0, 128], sizes = [2, 64], strides = [1, 1]} : vector<2x192xf32> to vector<2x64xf32>
    %128 = arith.mulf %117, %127 : vector<2x64xf32>
    %129 = arith.addf %126, %128 : vector<2x64xf32>
    %130 = math.tanh %129 : vector<2x64xf32>
    %cst_37 = arith.constant 1.000000e+00 : f32
    %131 = vector.broadcast %cst_37 : f32 to vector<2x64xf32>
    %132 = arith.subf %131, %125 : vector<2x64xf32>
    %133 = arith.mulf %132, %130 : vector<2x64xf32>
    %134 = arith.mulf %125, %101 : vector<2x64xf32>
    %135 = arith.addf %133, %134 : vector<2x64xf32>
    %c0_38 = arith.constant 0 : index
    %c3_39 = arith.constant 3 : index
    %c0_40 = arith.constant 0 : index
    %136 = vector.load %arg12[%c0_38, %c3_39, %c0_40] : memref<2x6x64xf32, #tpu.memory_space<vmem>>, vector<2x1x64xf32>
    %137 = vector.shape_cast %136 : vector<2x1x64xf32> to vector<2x64xf32>
    %138 = vector.shape_cast %135 : vector<2x64xf32> to vector<2x1x64xf32>
    tpu.vector_store %arg12[%c0_38, %c3_39, %c0_40], %138 {strides = array<i32>} : memref<2x6x64xf32, #tpu.memory_space<vmem>>, vector<2x1x64xf32>,
    %cst_41 = arith.constant dense<0.000000e+00> : vector<2x192xf32>
    %139 = tpu.matmul %135, %0, %cst_41 {dimension_numbers = #tpu.dot_dimension_numbers<[1], [0], [0], [1], [0, 0, 1, 1], [], []>} : vector<2x64xf32>, vector<64x192xf32>, vector<2x192xf32> -> vector<2x192xf32>
    %140 = vector.broadcast %1 : vector<1x192xf32> to vector<2x192xf32>
    %141 = arith.addf %139, %140 : vector<2x192xf32>
    %c4 = arith.constant 4 : index
    %c0_42 = arith.constant 0 : index
    %c0_43 = arith.constant 0 : index
    %142 = vector.load %arg0[%c4, %c0_42, %c0_43] : memref<6x2x192xf32, #tpu.memory_space<vmem>>, vector<1x2x192xf32>
    %143 = vector.shape_cast %142 : vector<1x2x192xf32> to vector<2x192xf32>
    %144 = vector.extract_strided_slice %143 {offsets = [0, 0], sizes = [2, 64], strides = [1, 1]} : vector<2x192xf32> to vector<2x64xf32>
    %145 = vector.extract_strided_slice %141 {offsets = [0, 0], sizes = [2, 64], strides = [1, 1]} : vector<2x192xf32> to vector<2x64xf32>
    %146 = arith.addf %144, %145 : vector<2x64xf32>
    %147 = arith.negf %146 : vector<2x64xf32>
    %148 = math.exp %147 : vector<2x64xf32>
    %cst_44 = arith.constant 1.000000e+00 : f32
    %149 = vector.broadcast %cst_44 : f32 to vector<2x64xf32>
    %150 = arith.addf %149, %148 : vector<2x64xf32>
    %151 = arith.divf %149, %150 : vector<2x64xf32>
    %152 = vector.extract_strided_slice %143 {offsets = [0, 64], sizes = [2, 64], strides = [1, 1]} : vector<2x192xf32> to vector<2x64xf32>
    %153 = vector.extract_strided_slice %141 {offsets = [0, 64], sizes = [2, 64], strides = [1, 1]} : vector<2x192xf32> to vector<2x64xf32>
    %154 = arith.addf %152, %153 : vector<2x64xf32>
    %155 = arith.negf %154 : vector<2x64xf32>
    %156 = math.exp %155 : vector<2x64xf32>
    %cst_45 = arith.constant 1.000000e+00 : f32
    %157 = vector.broadcast %cst_45 : f32 to vector<2x64xf32>
    %158 = arith.addf %157, %156 : vector<2x64xf32>
    %159 = arith.divf %157, %158 : vector<2x64xf32>
    %160 = vector.extract_strided_slice %143 {offsets = [0, 128], sizes = [2, 64], strides = [1, 1]} : vector<2x192xf32> to vector<2x64xf32>
    %161 = vector.extract_strided_slice %141 {offsets = [0, 128], sizes = [2, 64], strides = [1, 1]} : vector<2x192xf32> to vector<2x64xf32>
    %162 = arith.mulf %151, %161 : vector<2x64xf32>
    %163 = arith.addf %160, %162 : vector<2x64xf32>
    %164 = math.tanh %163 : vector<2x64xf32>
    %cst_46 = arith.constant 1.000000e+00 : f32
    %165 = vector.broadcast %cst_46 : f32 to vector<2x64xf32>
    %166 = arith.subf %165, %159 : vector<2x64xf32>
    %167 = arith.mulf %166, %164 : vector<2x64xf32>
    %168 = arith.mulf %159, %135 : vector<2x64xf32>
    %169 = arith.addf %167, %168 : vector<2x64xf32>
    %c0_47 = arith.constant 0 : index
    %c4_48 = arith.constant 4 : index
    %c0_49 = arith.constant 0 : index
    %170 = vector.load %arg12[%c0_47, %c4_48, %c0_49] : memref<2x6x64xf32, #tpu.memory_space<vmem>>, vector<2x1x64xf32>
    %171 = vector.shape_cast %170 : vector<2x1x64xf32> to vector<2x64xf32>
    %172 = vector.shape_cast %169 : vector<2x64xf32> to vector<2x1x64xf32>
    tpu.vector_store %arg12[%c0_47, %c4_48, %c0_49], %172 {strides = array<i32>} : memref<2x6x64xf32, #tpu.memory_space<vmem>>, vector<2x1x64xf32>,
    %cst_50 = arith.constant dense<0.000000e+00> : vector<2x192xf32>
    %173 = tpu.matmul %169, %0, %cst_50 {dimension_numbers = #tpu.dot_dimension_numbers<[1], [0], [0], [1], [0, 0, 1, 1], [], []>} : vector<2x64xf32>, vector<64x192xf32>, vector<2x192xf32> -> vector<2x192xf32>
    %174 = vector.broadcast %1 : vector<1x192xf32> to vector<2x192xf32>
    %175 = arith.addf %173, %174 : vector<2x192xf32>
    %c5 = arith.constant 5 : index
    %c0_51 = arith.constant 0 : index
    %c0_52 = arith.constant 0 : index
    %176 = vector.load %arg0[%c5, %c0_51, %c0_52] : memref<6x2x192xf32, #tpu.memory_space<vmem>>, vector<1x2x192xf32>
    %177 = vector.shape_cast %176 : vector<1x2x192xf32> to vector<2x192xf32>
    %178 = vector.extract_strided_slice %177 {offsets = [0, 0], sizes = [2, 64], strides = [1, 1]} : vector<2x192xf32> to vector<2x64xf32>
    %179 = vector.extract_strided_slice %175 {offsets = [0, 0], sizes = [2, 64], strides = [1, 1]} : vector<2x192xf32> to vector<2x64xf32>
    %180 = arith.addf %178, %179 : vector<2x64xf32>
    %181 = arith.negf %180 : vector<2x64xf32>
    %182 = math.exp %181 : vector<2x64xf32>
    %cst_53 = arith.constant 1.000000e+00 : f32
    %183 = vector.broadcast %cst_53 : f32 to vector<2x64xf32>
    %184 = arith.addf %183, %182 : vector<2x64xf32>
    %185 = arith.divf %183, %184 : vector<2x64xf32>
    %186 = vector.extract_strided_slice %177 {offsets = [0, 64], sizes = [2, 64], strides = [1, 1]} : vector<2x192xf32> to vector<2x64xf32>
    %187 = vector.extract_strided_slice %175 {offsets = [0, 64], sizes = [2, 64], strides = [1, 1]} : vector<2x192xf32> to vector<2x64xf32>
    %188 = arith.addf %186, %187 : vector<2x64xf32>
    %189 = arith.negf %188 : vector<2x64xf32>
    %190 = math.exp %189 : vector<2x64xf32>
    %cst_54 = arith.constant 1.000000e+00 : f32
    %191 = vector.broadcast %cst_54 : f32 to vector<2x64xf32>
    %192 = arith.addf %191, %190 : vector<2x64xf32>
    %193 = arith.divf %191, %192 : vector<2x64xf32>
    %194 = vector.extract_strided_slice %177 {offsets = [0, 128], sizes = [2, 64], strides = [1, 1]} : vector<2x192xf32> to vector<2x64xf32>
    %195 = vector.extract_strided_slice %175 {offsets = [0, 128], sizes = [2, 64], strides = [1, 1]} : vector<2x192xf32> to vector<2x64xf32>
    %196 = arith.mulf %185, %195 : vector<2x64xf32>
    %197 = arith.addf %194, %196 : vector<2x64xf32>
    %198 = math.tanh %197 : vector<2x64xf32>
    %cst_55 = arith.constant 1.000000e+00 : f32
    %199 = vector.broadcast %cst_55 : f32 to vector<2x64xf32>
    %200 = arith.subf %199, %193 : vector<2x64xf32>
    %201 = arith.mulf %200, %198 : vector<2x64xf32>
    %202 = arith.mulf %193, %169 : vector<2x64xf32>
    %203 = arith.addf %201, %202 : vector<2x64xf32>
    %c0_56 = arith.constant 0 : index
    %c5_57 = arith.constant 5 : index
    %c0_58 = arith.constant 0 : index
    %204 = vector.load %arg12[%c0_56, %c5_57, %c0_58] : memref<2x6x64xf32, #tpu.memory_space<vmem>>, vector<2x1x64xf32>
    %205 = vector.shape_cast %204 : vector<2x1x64xf32> to vector<2x64xf32>
    %206 = vector.shape_cast %203 : vector<2x64xf32> to vector<2x1x64xf32>
    tpu.vector_store %arg12[%c0_56, %c5_57, %c0_58], %206 {strides = array<i32>} : memref<2x6x64xf32, #tpu.memory_space<vmem>>, vector<2x1x64xf32>,
    %c0_59 = arith.constant 0 : index
    %c0_60 = arith.constant 0 : index
    %207 = vector.load %arg11[%c0_59, %c0_60] : memref<2x64xf32, #tpu.memory_space<vmem>>, vector<2x64xf32>
    tpu.vector_store %arg11[%c0_59, %c0_60], %203 {strides = array<i32>} : memref<2x64xf32, #tpu.memory_space<vmem>>, vector<2x64xf32>,
    %c0_61 = arith.constant 0 : index
    %c0_62 = arith.constant 0 : index
    %c0_63 = arith.constant 0 : index
    %208 = vector.load %arg4[%c0_61, %c0_62, %c0_63] : memref<2x8x64xf32, #tpu.memory_space<vmem>>, vector<2x8x64xf32>
    %c0_64 = arith.constant 0 : index
    %c0_65 = arith.constant 0 : index
    %c0_66 = arith.constant 0 : index
    %209 = vector.load %arg12[%c0_64, %c0_65, %c0_66] : memref<2x6x64xf32, #tpu.memory_space<vmem>>, vector<2x6x64xf32>
    "tpu.trace_start"() <{level = 10 : i32, message = "bdh,beh->bde"}> : () -> ()
    %cst_67 = arith.constant dense<0.000000e+00> : vector<2x6x8xf32>
    %210 = tpu.matmul %209, %208, %cst_67 {dimension_numbers = #tpu.dot_dimension_numbers<[2], [2], [1], [1], [0, 0, 0, 1, 1, 1], [0], [0]>} : vector<2x6x64xf32>, vector<2x8x64xf32>, vector<2x6x8xf32> -> vector<2x6x8xf32>
    "tpu.trace_stop"() : () -> ()
    %cst_68 = arith.constant dense<0xFF800000> : vector<2x6xf32>
    %211 = vector.multi_reduction <maximumf>, %210, %cst_68 [2] : vector<2x6x8xf32> to vector<2x6xf32>
    %212 = vector.shape_cast %211 : vector<2x6xf32> to vector<2x6x1xf32>
    %213 = vector.broadcast %212 : vector<2x6x1xf32> to vector<2x6x8xf32>
    %214 = arith.subf %210, %213 : vector<2x6x8xf32>
    %215 = math.exp %214 : vector<2x6x8xf32>
    %cst_69 = arith.constant dense<0.000000e+00> : vector<2x6xf32>
    %216 = vector.multi_reduction <add>, %215, %cst_69 [2] : vector<2x6x8xf32> to vector<2x6xf32>
    %217 = vector.shape_cast %216 : vector<2x6xf32> to vector<2x6x1xf32>
    %218 = tpu.reciprocal %217 {approx = true} : vector<2x6x1xf32> -> vector<2x6x1xf32>
    %219 = vector.broadcast %218 : vector<2x6x1xf32> to vector<2x6x8xf32>
    %220 = arith.mulf %215, %219 : vector<2x6x8xf32>
    "tpu.trace_start"() <{level = 10 : i32, message = "bde,beh->bdh"}> : () -> ()
    %cst_70 = arith.constant dense<0.000000e+00> : vector<2x6x64xf32>
    %221 = tpu.matmul %220, %208, %cst_70 {dimension_numbers = #tpu.dot_dimension_numbers<[2], [1], [1], [2], [0, 0, 0, 1, 1, 2], [0], [0]>} : vector<2x6x8xf32>, vector<2x8x64xf32>, vector<2x6x64xf32> -> vector<2x6x64xf32>
    "tpu.trace_stop"() : () -> ()
    %222 = vector.shape_cast %221 : vector<2x6x64xf32> to vector<12x64xf32>
    %223 = vector.shape_cast %209 : vector<2x6x64xf32> to vector<12x64xf32>
    %c0_71 = arith.constant 0 : index
    %c0_72 = arith.constant 0 : index
    %224 = vector.load %arg5[%c0_71, %c0_72] : memref<64x64xf32, #tpu.memory_space<vmem>>, vector<64x64xf32>
    %cst_73 = arith.constant dense<0.000000e+00> : vector<12x64xf32>
    %225 = tpu.matmul %222, %224, %cst_73 {dimension_numbers = #tpu.dot_dimension_numbers<[1], [0], [0], [1], [0, 0, 1, 1], [], []>} : vector<12x64xf32>, vector<64x64xf32>, vector<12x64xf32> -> vector<12x64xf32>
    %c0_74 = arith.constant 0 : index
    %c0_75 = arith.constant 0 : index
    %226 = vector.load %arg6[%c0_74, %c0_75] : memref<64x64xf32, #tpu.memory_space<vmem>>, vector<64x64xf32>
    %cst_76 = arith.constant dense<0.000000e+00> : vector<12x64xf32>
    %227 = tpu.matmul %223, %226, %cst_76 {dimension_numbers = #tpu.dot_dimension_numbers<[1], [0], [0], [1], [0, 0, 1, 1], [], []>} : vector<12x64xf32>, vector<64x64xf32>, vector<12x64xf32> -> vector<12x64xf32>
    %228 = arith.addf %225, %227 : vector<12x64xf32>
    %c0_77 = arith.constant 0 : index
    %c0_78 = arith.constant 0 : index
    %229 = vector.load %arg7[%c0_77, %c0_78] : memref<1x64xf32, #tpu.memory_space<vmem>>, vector<1x64xf32>
    %230 = vector.broadcast %229 : vector<1x64xf32> to vector<12x64xf32>
    %231 = arith.addf %228, %230 : vector<12x64xf32>
    %232 = math.tanh %231 : vector<12x64xf32>
    %c0_79 = arith.constant 0 : index
    %c0_80 = arith.constant 0 : index
    %233 = vector.load %arg8[%c0_79, %c0_80] : memref<64x24xf32, #tpu.memory_space<vmem>>, vector<64x24xf32>
    %cst_81 = arith.constant dense<0.000000e+00> : vector<12x24xf32>
    %234 = tpu.matmul %232, %233, %cst_81 {dimension_numbers = #tpu.dot_dimension_numbers<[1], [0], [0], [1], [0, 0, 1, 1], [], []>} : vector<12x64xf32>, vector<64x24xf32>, vector<12x24xf32> -> vector<12x24xf32>
    %c0_82 = arith.constant 0 : index
    %c0_83 = arith.constant 0 : index
    %235 = vector.load %arg9[%c0_82, %c0_83] : memref<1x24xf32, #tpu.memory_space<vmem>>, vector<1x24xf32>
    %236 = vector.broadcast %235 : vector<1x24xf32> to vector<12x24xf32>
    %237 = arith.addf %234, %236 : vector<12x24xf32>
    %238 = vector.shape_cast %237 : vector<12x24xf32> to vector<2x6x24xf32>
    %c0_84 = arith.constant 0 : index
    %c0_85 = arith.constant 0 : index
    %c0_86 = arith.constant 0 : index
    %239 = vector.load %arg10[%c0_84, %c0_85, %c0_86] : memref<2x6x24xf32, #tpu.memory_space<vmem>>, vector<2x6x24xf32>
    tpu.vector_store %arg10[%c0_84, %c0_85, %c0_86], %238 {strides = array<i32>} : memref<2x6x24xf32, #tpu.memory_space<vmem>>, vector<2x6x24xf32>,
    return
  }
}

</mosaic_0001>

<llo_original>
// kernel: seq2seq_forward.3
$region0: #{seq2seq_forward.3}
  #allocation0 [shape = 'u32[]', space=smem, size = 0x4, offset = 0x4, fixed_abs, tag = 'smem constant byte address 0x4 - core index']
  #allocation1 [shape = 'u32[144,128]{1,0:T(1,128)}', space=vmem, size = 0x12000, scoped, tag = 'internal scratch']
  #allocation2 [shape = 'f32[2,6,64]{2,1,0:T(8,128)}', space=vmem, size = 0x2000, scoped, tag = 'scratch operand']
  %s0 = inlined_call_operand.vmem [shape: f32[6,2,192], index: 0, kind: input, shape index: {}]
  %s1 = inlined_call_operand.vmem [shape: f32[2,64], index: 1, kind: input, shape index: {}]
  %s2 = inlined_call_operand.vmem [shape: f32[64,192], index: 2, kind: input, shape index: {}]
  %s3 = inlined_call_operand.vmem [shape: f32[1,192], index: 3, kind: input, shape index: {}]
  %s4 = inlined_call_operand.vmem [shape: f32[2,8,64], index: 4, kind: input, shape index: {}]
  %s5 = inlined_call_operand.vmem [shape: f32[64,64], index: 5, kind: input, shape index: {}]
  %s6 = inlined_call_operand.vmem [shape: f32[64,64], index: 6, kind: input, shape index: {}]
  %s7 = inlined_call_operand.vmem [shape: f32[1,64], index: 7, kind: input, shape index: {}]
  %s8 = inlined_call_operand.vmem [shape: f32[64,24], index: 8, kind: input, shape index: {}]
  %s9 = inlined_call_operand.vmem [shape: f32[1,24], index: 9, kind: input, shape index: {}]
  %s10 = inlined_call_operand.vmem [shape: f32[2,6,24], index: 10, kind: output, shape index: {0}]
  %s11 = inlined_call_operand.hbm [shape: f32[2,64], index: 11, kind: output, shape index: {1}]
  %12 = xla_tuple %s10, %s11
  %s13 = sld [smem:[#allocation0]]
  $region58: #{seq2seq_forward.3} parent=0
    _
  %s15 = ssub.s32 1, %s13
  %s16 = scalar_select 0, %s15, %s13
  $region1: #{seq2seq_forward.3} parent=0
    #allocation3 [shape = 'u8[1024]{0}', space=vmem, size = 0x400, scoped, tag = 'output window, operand 1, single buffered']
    #allocation4 [shape = 's32[1]{0}', space=sflag, size = 0x4, scoped, tag = 'scoped memory for seq2seq_forward.3']
    %17 = vsyncpa [#allocation4], 0
    // Predicated region
    $region2: #{seq2seq_forward.3} parent=1 // pred_check
      _
    $region3: #{seq2seq_forward.3} parent=1 // pred_check_branch
      %19 = sbr.rel (0) target = $region5
    $region4: #{seq2seq_forward.3} parent=1 // pred_region
      _
    $region5: #{seq2seq_forward.3} parent=1 // pred_fallthru
      _
    // Predicated region
    $region6: #{seq2seq_forward.3} parent=1 // pred_check
      _
    $region7: #{seq2seq_forward.3} parent=1 // pred_check_branch
      %21 = sbr.rel (0) target = $region9
    $region8: #{seq2seq_forward.3} parent=1 // pred_region
      _
    $region9: #{seq2seq_forward.3} parent=1 // pred_fallthru
      _
    // Predicated region
    $region10: #{seq2seq_forward.3} parent=1 // pred_check
      _
    $region11: #{seq2seq_forward.3} parent=1 // pred_check_branch
      %23 = sbr.rel (0) target = $region13
    $region12: #{seq2seq_forward.3} parent=1 // pred_region
      _
    $region13: #{seq2seq_forward.3} parent=1 // pred_fallthru
      _
    // Predicated region
    $region14: #{seq2seq_forward.3} parent=1 // pred_check
      _
    $region15: #{seq2seq_forward.3} parent=1 // pred_check_branch
      %25 = sbr.rel (0) target = $region17
    $region16: #{seq2seq_forward.3} parent=1 // pred_region
      _
    $region17: #{seq2seq_forward.3} parent=1 // pred_fallthru
      _
    // Predicated region
    $region18: #{seq2seq_forward.3} parent=1 // pred_check
      _
    $region19: #{seq2seq_forward.3} parent=1 // pred_check_branch
      %27 = sbr.rel (0) target = $region21
    $region20: #{seq2seq_forward.3} parent=1 // pred_region
      _
    $region21: #{seq2seq_forward.3} parent=1 // pred_fallthru
      _
    // Predicated region
    $region22: #{seq2seq_forward.3} parent=1 // pred_check
      _
    $region23: #{seq2seq_forward.3} parent=1 // pred_check_branch
      %29 = sbr.rel (0) target = $region25
    $region24: #{seq2seq_forward.3} parent=1 // pred_region
      _
    $region25: #{seq2seq_forward.3} parent=1 // pred_fallthru
      _
    // Predicated region
    $region26: #{seq2seq_forward.3} parent=1 // pred_check
      _
    $region27: #{seq2seq_forward.3} parent=1 // pred_check_branch
      %31 = sbr.rel (0) target = $region29
    $region28: #{seq2seq_forward.3} parent=1 // pred_region
      _
    $region29: #{seq2seq_forward.3} parent=1 // pred_fallthru
      _
    // Predicated region
    $region30: #{seq2seq_forward.3} parent=1 // pred_check
      _
    $region31: #{seq2seq_forward.3} parent=1 // pred_check_branch
      %33 = sbr.rel (0) target = $region33
    $region32: #{seq2seq_forward.3} parent=1 // pred_region
      _
    $region33: #{seq2seq_forward.3} parent=1 // pred_fallthru
      _
    // Predicated region
    $region34: #{seq2seq_forward.3} parent=1 // pred_check
      _
    $region35: #{seq2seq_forward.3} parent=1 // pred_check_branch
      %35 = sbr.rel (0) target = $region37
    $region36: #{seq2seq_forward.3} parent=1 // pred_region
      _
    $region37: #{seq2seq_forward.3} parent=1 // pred_fallthru
      _
    // Predicated region
    $region38: #{seq2seq_forward.3} parent=1 // pred_check
      _
    $region39: #{seq2seq_forward.3} parent=1 // pred_check_branch
      %37 = sbr.rel (0) target = $region41
    $region40: #{seq2seq_forward.3} parent=1 // pred_region
      _
    $region41: #{seq2seq_forward.3} parent=1 // pred_fallthru
      _
    %v38 = vld [vmem:[%s2] sm:$0xff]
    %v39 = vld [vmem:[%s2 + $0x8] sm:$0xff]
    %v40 = vld [vmem:[%s2 + $0x10] sm:$0xff]
    %v41 = vld [vmem:[%s2 + $0x18] sm:$0xff]
    %v42 = vld [vmem:[%s2 + $0x20] sm:$0xff]
    %v43 = vld [vmem:[%s2 + $0x28] sm:$0xff]
    %v44 = vld [vmem:[%s2 + $0x30] sm:$0xff]
    %v45 = vld [vmem:[%s2 + $0x38] sm:$0xff]
    %v46 = vld [vmem:[%s2 + $0x40] sm:$0xff]
    %v47 = vld [vmem:[%s2 + $0x48] sm:$0xff]
    %v48 = vld [vmem:[%s2 + $0x50] sm:$0xff]
    %v49 = vld [vmem:[%s2 + $0x58] sm:$0xff]
    %v50 = vld [vmem:[%s2 + $0x60] sm:$0xff]
    %v51 = vld [vmem:[%s2 + $0x68] sm:$0xff]
    %v52 = vld [vmem:[%s2 + $0x70] sm:$0xff]
    %v53 = vld [vmem:[%s2 + $0x78] sm:$0xff]
    %v54 = vld [vmem:[%s3] sm:$0x3]
    %v55 = vld [vmem:[%s1] sm:$0x3]
    %v57 = vlaneseq
    %v58 = vshrl.u32 %v57, 7
    %v59 = vsub.s32 0, %v58
    %v60 = vrot.slane %v54, %v59
    %v61 = vlaneseq
    %v62 = vshrl.u32 %v61, 7
    %v63 = vsub.s32 1, %v62
    %v64 = vrot.slane %v54, %v63
    %vm67 = vcmask 523264
    %v69 = vsel %vm67, %v55, 0
    %71 = vmatprep.subr.mxu0 %v39
    %72 = vmatpush1.msra.mxu0 %v38
    %73 = vmatprep.subr.mxu0 %v41
    %74 = vmatpush1.msra.mxu0 %v40
    %75 = vmatprep.subr.mxu0 %v43
    %76 = vmatpush1.msra.mxu0 %v42
    %77 = vmatprep.subr.mxu0 %v45
    %78 = vmatpush1.msra.mxu0 %v44
    %79 = vmatprep.subr.mxu0 %v47
    %80 = vmatpush1.msra.mxu0 %v46
    %81 = vmatprep.subr.mxu0 %v49
    %82 = vmatpush1.msra.mxu0 %v48
    %83 = vmatprep.subr.mxu0 %v51
    %84 = vmatpush1.msra.mxu0 %v50
    %85 = vmatprep.subr.mxu0 %v53
    %86 = vmatpush1.msra.mxu0 %v52
    %87 = vmatprep.subr.mxu0 0.0
    %88 = vmatpush1.msra.mxu0 0.0
    %89 = vmatprep.subr.mxu0 0.0
    %90 = vmatpush1.msra.mxu0 0.0
    %91 = vmatprep.subr.mxu0 0.0
    %92 = vmatpush1.msra.mxu0 0.0
    %93 = vmatprep.subr.mxu0 0.0
    %94 = vmatpush1.msra.mxu0 0.0
    %95 = vmatprep.subr.mxu0 0.0
    %96 = vmatpush1.msra.mxu0 0.0
    %97 = vmatprep.subr.mxu0 0.0
    %98 = vmatpush1.msra.mxu0 0.0
    %99 = vmatprep.subr.mxu0 0.0
    %100 = vmatpush1.msra.mxu0 0.0
    %101 = vmatprep.subr.mxu0 0.0
    %102 = vmatpush1.msra.mxu0 0.0
    %103 = vmatprep.subr.mxu0 0.0
    %104 = vmatpush1.msra.mxu0 0.0
    %105 = vmatprep.subr.mxu0 0.0
    %106 = vmatpush1.msra.mxu0 0.0
    %107 = vmatprep.subr.mxu0 0.0
    %108 = vmatpush1.msra.mxu0 0.0
    %109 = vmatprep.subr.mxu0 0.0
    %110 = vmatpush1.msra.mxu0 0.0
    %111 = vmatprep.subr.mxu0 0.0
    %112 = vmatpush1.msra.mxu0 0.0
    %113 = vmatprep.subr.mxu0 0.0
    %114 = vmatpush1.msra.mxu0 0.0
    %115 = vmatprep.subr.mxu0 0.0
    %116 = vmatpush1.msra.mxu0 0.0
    %117 = vmatprep.subr.mxu0 0.0
    %118 = vmatpush1.msra.mxu0 0.0
    %119 = vmatprep.subr.mxu0 0.0
    %120 = vmatpush1.msra.mxu0 0.0
    %121 = vmatprep.subr.mxu0 0.0
    %122 = vmatpush1.msra.mxu0 0.0
    %123 = vmatprep.subr.mxu0 0.0
    %124 = vmatpush1.msra.mxu0 0.0
    %125 = vmatprep.subr.mxu0 0.0
    %126 = vmatpush1.msra.mxu0 0.0
    %127 = vmatprep.subr.mxu0 0.0
    %128 = vmatpush1.msra.mxu0 0.0
    %129 = vmatprep.subr.mxu0 0.0
    %130 = vmatpush1.msra.mxu0 0.0
    %131 = vmatprep.subr.mxu0 0.0
    %132 = vmatpush1.msra.mxu0 0.0
    %133 = vmatprep.subr.mxu0 0.0
    %134 = vmatpush1.msra.mxu0 0.0
    %135 = vmatprep.mubr.f32.mxu0 0.0
    %136 = vmatmul.mubr.f32.gmra.mrb[0].mxu0 %v69
    %v137 = vpop.f32.mrb[0].mxu0
    %v138 = vadd.f32 %v60, %v137
    %v139 = vpop.f32.mrb[0].mxu0
    %v140 = vadd.f32 %v64, %v139
    %141 = vdwg.mxu0
    %v142 = vld [vmem:[%s0] sm:$0xf]
    %v143 = vadd.f32 %v142, %v138
    %v144 = vxor.u32 %v143, 2147483648
    %v145 = vmul.f32 %v144, 1.442695
    %v146 = vpow.pop %v145
    %v147 = vadd.f32 %v146, 1.0
    %v148 = vrcp.pop %v147
    %v149 = vmul.f32 1.0, %v148
    %v150 = vmul.f32 %v149, %v140
    %v152 = vrot.slane %v142, 2
    %v154 = vadd.f32 %v152, %v150
    %v155 = vtanh.pop %v154
    %v156 = vsub.f32 1.0, %v149
    %158 = vrot.lane.b32.xlu0 %v155, 64
    %v159 = vpop.permute.xlu0 %158
    %v161 = vmul.f32 %v156, %v159
    %v163 = vunpack.c.l.s4 1983009808
    %v164 = vunpack.c.0.s8 %v163
    %v165 = vlaneseq
    %v166 = vshrl.u32 %v165, 7
    %v167 = vsub.s32 %v164, %v166
    %v168 = vrot.slane %v55, %v167
    %169 = vrot.lane.b32.xlu0 %v168, 64
    %v170 = vpop.permute.xlu0 %169
    %v172 = vmul.f32 %v149, %v170
    %v173 = vadd.f32 %v161, %v172
    %v176 = vunpack.c.l.s4 1966171168
    %v177 = vunpack.c.0.s8 %v176
    %v178 = vlaneseq
    %v179 = vshrl.u32 %v178, 7
    %v180 = vsub.s32 %v177, %v179
    %v181 = vrot.slane %v173, %v180
    %v182 = vcombine.high %v181, %v181
    %v183 = vlaneseq
    %v184 = vshrl.u32 %v183, 7
    %v185 = vsub.s32 0, %v184
    %v186 = vrot.slane %v181, %v185
    %v187 = vlaneseq
    %v188 = vshrl.u32 %v187, 7
    %v189 = vsub.s32 0, %v188
    %v190 = vrot.slane %v182, %v189
    %191 = vrot.lane.b32.xlu0 %v186, 64
    %v192 = vpop.permute.xlu0 %191
    %193 = vrot.lane.b32.xlu0 %v190, 64
    %v194 = vpop.permute.xlu0 %193
    %vm197 = vcmask 516096
    %198 = vst.msk [vmem:[#allocation2] sm:$0x1] %vm197, %v192
    %199 = vst.msk [vmem:[#allocation2 + $0x8] sm:$0x1] %vm197, %v194
    %v201 = vunpack.c.l.s4 1983009808
    %v202 = vunpack.c.0.s8 %v201
    %v203 = vlaneseq
    %v204 = vshrl.u32 %v203, 7
    %v205 = vsub.s32 %v202, %v204
    %v206 = vrot.slane %v173, %v205
    %207 = vrot.lane.b32.xlu0 %v206, 64
    %v208 = vpop.permute.xlu0 %207
    %v209 = vsel %vm67, %v208, 0
    %211 = vmatprep.subr.mxu0 %v39
    %212 = vmatpush1.msra.mxu0 %v38
    %213 = vmatprep.subr.mxu0 %v41
    %214 = vmatpush1.msra.mxu0 %v40
    %215 = vmatprep.subr.mxu0 %v43
    %216 = vmatpush1.msra.mxu0 %v42
    %217 = vmatprep.subr.mxu0 %v45
    %218 = vmatpush1.msra.mxu0 %v44
    %219 = vmatprep.subr.mxu0 %v47
    %220 = vmatpush1.msra.mxu0 %v46
    %221 = vmatprep.subr.mxu0 %v49
    %222 = vmatpush1.msra.mxu0 %v48
    %223 = vmatprep.subr.mxu0 %v51
    %224 = vmatpush1.msra.mxu0 %v50
    %225 = vmatprep.subr.mxu0 %v53
    %226 = vmatpush1.msra.mxu0 %v52
    %227 = vmatprep.subr.mxu0 0.0
    %228 = vmatpush1.msra.mxu0 0.0
    %229 = vmatprep.subr.mxu0 0.0
    %230 = vmatpush1.msra.mxu0 0.0
    %231 = vmatprep.subr.mxu0 0.0
    %232 = vmatpush1.msra.mxu0 0.0
    %233 = vmatprep.subr.mxu0 0.0
    %234 = vmatpush1.msra.mxu0 0.0
    %235 = vmatprep.subr.mxu0 0.0
    %236 = vmatpush1.msra.mxu0 0.0
    %237 = vmatprep.subr.mxu0 0.0
    %238 = vmatpush1.msra.mxu0 0.0
    %239 = vmatprep.subr.mxu0 0.0
    %240 = vmatpush1.msra.mxu0 0.0
    %241 = vmatprep.subr.mxu0 0.0
    %242 = vmatpush1.msra.mxu0 0.0
    %243 = vmatprep.subr.mxu0 0.0
    %244 = vmatpush1.msra.mxu0 0.0
    %245 = vmatprep.subr.mxu0 0.0
    %246 = vmatpush1.msra.mxu0 0.0
    %247 = vmatprep.subr.mxu0 0.0
    %248 = vmatpush1.msra.mxu0 0.0
    %249 = vmatprep.subr.mxu0 0.0
    %250 = vmatpush1.msra.mxu0 0.0
    %251 = vmatprep.subr.mxu0 0.0
    %252 = vmatpush1.msra.mxu0 0.0
    %253 = vmatprep.subr.mxu0 0.0
    %254 = vmatpush1.msra.mxu0 0.0
    %255 = vmatprep.subr.mxu0 0.0
    %256 = vmatpush1.msra.mxu0 0.0
    %257 = vmatprep.subr.mxu0 0.0
    %258 = vmatpush1.msra.mxu0 0.0
    %259 = vmatprep.subr.mxu0 0.0
    %260 = vmatpush1.msra.mxu0 0.0
    %261 = vmatprep.subr.mxu0 0.0
    %262 = vmatpush1.msra.mxu0 0.0
    %263 = vmatprep.subr.mxu0 0.0
    %264 = vmatpush1.msra.mxu0 0.0
    %265 = vmatprep.subr.mxu0 0.0
    %266 = vmatpush1.msra.mxu0 0.0
    %267 = vmatprep.subr.mxu0 0.0
    %268 = vmatpush1.msra.mxu0 0.0
    %269 = vmatprep.subr.mxu0 0.0
    %270 = vmatpush1.msra.mxu0 0.0
    %271 = vmatprep.subr.mxu0 0.0
    %272 = vmatpush1.msra.mxu0 0.0
    %273 = vmatprep.subr.mxu0 0.0
    %274 = vmatpush1.msra.mxu0 0.0
    %275 = vmatprep.mubr.f32.mxu0 0.0
    %276 = vmatmul.mubr.f32.gmra.mrb[0].mxu0 %v209
    %v277 = vpop.f32.mrb[0].mxu0
    %v278 = vadd.f32 %v60, %v277
    %v279 = vpop.f32.mrb[0].mxu0
    %v280 = vadd.f32 %v64, %v279
    %281 = vdwg.mxu0
    %s282 = scalar_lea.vmem %s0, 4
    %v283 = vld [vmem:[%s282] sm:$0xf]
    %v284 = vadd.f32 %v283, %v278
    %v285 = vxor.u32 %v284, 2147483648
    %v286 = vmul.f32 %v285, 1.442695
    %v287 = vpow.pop %v286
    %v288 = vadd.f32 %v287, 1.0
    %v289 = vrcp.pop %v288
    %v290 = vmul.f32 1.0, %v289
    %v291 = vmul.f32 %v290, %v280
    %v293 = vrot.slane %v283, 2
    %v295 = vadd.f32 %v293, %v291
    %v296 = vtanh.pop %v295
    %v297 = vsub.f32 1.0, %v290
    %299 = vrot.lane.b32.xlu0 %v296, 64
    %v300 = vpop.permute.xlu0 %299
    %v302 = vmul.f32 %v297, %v300
    %v303 = vmul.f32 %v290, %v173
    %v304 = vadd.f32 %v302, %v303
    %v307 = vunpack.c.l.s4 1966171168
    %v308 = vunpack.c.0.s8 %v307
    %v309 = vlaneseq
    %v310 = vshrl.u32 %v309, 7
    %v311 = vsub.s32 %v308, %v310
    %v312 = vrot.slane %v304, %v311
    %v313 = vcombine.high %v312, %v312
    %v314 = vlaneseq
    %v315 = vshrl.u32 %v314, 7
    %v316 = vsub.s32 0, %v315
    %v317 = vrot.slane %v312, %v316
    %v318 = vlaneseq
    %v319 = vshrl.u32 %v318, 7
    %v320 = vsub.s32 0, %v319
    %v321 = vrot.slane %v313, %v320
    %322 = vrot.lane.b32.xlu0 %v317, 64
    %v323 = vpop.permute.xlu0 %322
    %324 = vrot.lane.b32.xlu0 %v321, 64
    %v325 = vpop.permute.xlu0 %324
    %328 = vst.msk [vmem:[#allocation2 + $0x1] sm:$0x1] %vm197, %v323
    %329 = vst.msk [vmem:[#allocation2 + $0x9] sm:$0x1] %vm197, %v325
    %v331 = vunpack.c.l.s4 1983009808
    %v332 = vunpack.c.0.s8 %v331
    %v333 = vlaneseq
    %v334 = vshrl.u32 %v333, 7
    %v335 = vsub.s32 %v332, %v334
    %v336 = vrot.slane %v304, %v335
    %337 = vrot.lane.b32.xlu0 %v336, 64
    %v338 = vpop.permute.xlu0 %337
    %v339 = vsel %vm67, %v338, 0
    %341 = vmatprep.subr.mxu0 %v39
    %342 = vmatpush1.msra.mxu0 %v38
    %343 = vmatprep.subr.mxu0 %v41
    %344 = vmatpush1.msra.mxu0 %v40
    %345 = vmatprep.subr.mxu0 %v43
    %346 = vmatpush1.msra.mxu0 %v42
    %347 = vmatprep.subr.mxu0 %v45
    %348 = vmatpush1.msra.mxu0 %v44
    %349 = vmatprep.subr.mxu0 %v47
    %350 = vmatpush1.msra.mxu0 %v46
    %351 = vmatprep.subr.mxu0 %v49
    %352 = vmatpush1.msra.mxu0 %v48
    %353 = vmatprep.subr.mxu0 %v51
    %354 = vmatpush1.msra.mxu0 %v50
    %355 = vmatprep.subr.mxu0 %v53
    %356 = vmatpush1.msra.mxu0 %v52
    %357 = vmatprep.subr.mxu0 0.0
    %358 = vmatpush1.msra.mxu0 0.0
    %359 = vmatprep.subr.mxu0 0.0
    %360 = vmatpush1.msra.mxu0 0.0
    %361 = vmatprep.subr.mxu0 0.0
    %362 = vmatpush1.msra.mxu0 0.0
    %363 = vmatprep.subr.mxu0 0.0
    %364 = vmatpush1.msra.mxu0 0.0
    %365 = vmatprep.subr.mxu0 0.0
    %366 = vmatpush1.msra.mxu0 0.0
    %367 = vmatprep.subr.mxu0 0.0
    %368 = vmatpush1.msra.mxu0 0.0
    %369 = vmatprep.subr.mxu0 0.0
    %370 = vmatpush1.msra.mxu0 0.0
    %371 = vmatprep.subr.mxu0 0.0
    %372 = vmatpush1.msra.mxu0 0.0
    %373 = vmatprep.subr.mxu0 0.0
    %374 = vmatpush1.msra.mxu0 0.0
    %375 = vmatprep.subr.mxu0 0.0
    %376 = vmatpush1.msra.mxu0 0.0
    %377 = vmatprep.subr.mxu0 0.0
    %378 = vmatpush1.msra.mxu0 0.0
    %379 = vmatprep.subr.mxu0 0.0
    %380 = vmatpush1.msra.mxu0 0.0
    %381 = vmatprep.subr.mxu0 0.0
    %382 = vmatpush1.msra.mxu0 0.0
    %383 = vmatprep.subr.mxu0 0.0
    %384 = vmatpush1.msra.mxu0 0.0
    %385 = vmatprep.subr.mxu0 0.0
    %386 = vmatpush1.msra.mxu0 0.0
    %387 = vmatprep.subr.mxu0 0.0
    %388 = vmatpush1.msra.mxu0 0.0
    %389 = vmatprep.subr.mxu0 0.0
    %390 = vmatpush1.msra.mxu0 0.0
    %391 = vmatprep.subr.mxu0 0.0
    %392 = vmatpush1.msra.mxu0 0.0
    %393 = vmatprep.subr.mxu0 0.0
    %394 = vmatpush1.msra.mxu0 0.0
    %395 = vmatprep.subr.mxu0 0.0
    %396 = vmatpush1.msra.mxu0 0.0
    %397 = vmatprep.subr.mxu0 0.0
    %398 = vmatpush1.msra.mxu0 0.0
    %399 = vmatprep.subr.mxu0 0.0
    %400 = vmatpush1.msra.mxu0 0.0
    %401 = vmatprep.subr.mxu0 0.0
    %402 = vmatpush1.msra.mxu0 0.0
    %403 = vmatprep.subr.mxu0 0.0
    %404 = vmatpush1.msra.mxu0 0.0
    %405 = vmatprep.mubr.f32.mxu0 0.0
    %406 = vmatmul.mubr.f32.gmra.mrb[0].mxu0 %v339
    %v407 = vpop.f32.mrb[0].mxu0
    %v408 = vadd.f32 %v60, %v407
    %v409 = vpop.f32.mrb[0].mxu0
    %v410 = vadd.f32 %v64, %v409
    %411 = vdwg.mxu0
    %s412 = scalar_lea.vmem %s0, 8
    %v413 = vld [vmem:[%s412] sm:$0xf]
    %v414 = vadd.f32 %v413, %v408
    %v415 = vxor.u32 %v414, 2147483648
    %v416 = vmul.f32 %v415, 1.442695
    %v417 = vpow.pop %v416
    %v418 = vadd.f32 %v417, 1.0
    %v419 = vrcp.pop %v418
    %v420 = vmul.f32 1.0, %v419
    %v421 = vmul.f32 %v420, %v410
    %v423 = vrot.slane %v413, 2
    %v425 = vadd.f32 %v423, %v421
    %v426 = vtanh.pop %v425
    %v427 = vsub.f32 1.0, %v420
    %429 = vrot.lane.b32.xlu0 %v426, 64
    %v430 = vpop.permute.xlu0 %429
    %v432 = vmul.f32 %v427, %v430
    %v433 = vmul.f32 %v420, %v304
    %v434 = vadd.f32 %v432, %v433
    %v437 = vunpack.c.l.s4 1966171168
    %v438 = vunpack.c.0.s8 %v437
    %v439 = vlaneseq
    %v440 = vshrl.u32 %v439, 7
    %v441 = vsub.s32 %v438, %v440
    %v442 = vrot.slane %v434, %v441
    %v443 = vcombine.high %v442, %v442
    %v444 = vlaneseq
    %v445 = vshrl.u32 %v444, 7
    %v446 = vsub.s32 0, %v445
    %v447 = vrot.slane %v442, %v446
    %v448 = vlaneseq
    %v449 = vshrl.u32 %v448, 7
    %v450 = vsub.s32 0, %v449
    %v451 = vrot.slane %v443, %v450
    %452 = vrot.lane.b32.xlu0 %v447, 64
    %v453 = vpop.permute.xlu0 %452
    %454 = vrot.lane.b32.xlu0 %v451, 64
    %v455 = vpop.permute.xlu0 %454
    %458 = vst.msk [vmem:[#allocation2 + $0x2] sm:$0x1] %vm197, %v453
    %459 = vst.msk [vmem:[#allocation2 + $0xa] sm:$0x1] %vm197, %v455
    %v461 = vunpack.c.l.s4 1983009808
    %v462 = vunpack.c.0.s8 %v461
    %v463 = vlaneseq
    %v464 = vshrl.u32 %v463, 7
    %v465 = vsub.s32 %v462, %v464
    %v466 = vrot.slane %v434, %v465
    %467 = vrot.lane.b32.xlu0 %v466, 64
    %v468 = vpop.permute.xlu0 %467
    %v469 = vsel %vm67, %v468, 0
    %471 = vmatprep.subr.mxu0 %v39
    %472 = vmatpush1.msra.mxu0 %v38
    %473 = vmatprep.subr.mxu0 %v41
    %474 = vmatpush1.msra.mxu0 %v40
    %475 = vmatprep.subr.mxu0 %v43
    %476 = vmatpush1.msra.mxu0 %v42
    %477 = vmatprep.subr.mxu0 %v45
    %478 = vmatpush1.msra.mxu0 %v44
    %479 = vmatprep.subr.mxu0 %v47
    %480 = vmatpush1.msra.mxu0 %v46
    %481 = vmatprep.subr.mxu0 %v49
    %482 = vmatpush1.msra.mxu0 %v48
    %483 = vmatprep.subr.mxu0 %v51
    %484 = vmatpush1.msra.mxu0 %v50
    %485 = vmatprep.subr.mxu0 %v53
    %486 = vmatpush1.msra.mxu0 %v52
    %487 = vmatprep.subr.mxu0 0.0
    %488 = vmatpush1.msra.mxu0 0.0
    %489 = vmatprep.subr.mxu0 0.0
    %490 = vmatpush1.msra.mxu0 0.0
    %491 = vmatprep.subr.mxu0 0.0
    %492 = vmatpush1.msra.mxu0 0.0
    %493 = vmatprep.subr.mxu0 0.0
    %494 = vmatpush1.msra.mxu0 0.0
    %495 = vmatprep.subr.mxu0 0.0
    %496 = vmatpush1.msra.mxu0 0.0
    %497 = vmatprep.subr.mxu0 0.0
    %498 = vmatpush1.msra.mxu0 0.0
    %499 = vmatprep.subr.mxu0 0.0
    %500 = vmatpush1.msra.mxu0 0.0
    %501 = vmatprep.subr.mxu0 0.0
    %502 = vmatpush1.msra.mxu0 0.0
    %503 = vmatprep.subr.mxu0 0.0
    %504 = vmatpush1.msra.mxu0 0.0
    %505 = vmatprep.subr.mxu0 0.0
    %506 = vmatpush1.msra.mxu0 0.0
    %507 = vmatprep.subr.mxu0 0.0
    %508 = vmatpush1.msra.mxu0 0.0
    %509 = vmatprep.subr.mxu0 0.0
    %510 = vmatpush1.msra.mxu0 0.0
    %511 = vmatprep.subr.mxu0 0.0
    %512 = vmatpush1.msra.mxu0 0.0
    %513 = vmatprep.subr.mxu0 0.0
    %514 = vmatpush1.msra.mxu0 0.0
    %515 = vmatprep.subr.mxu0 0.0
    %516 = vmatpush1.msra.mxu0 0.0
    %517 = vmatprep.subr.mxu0 0.0
    %518 = vmatpush1.msra.mxu0 0.0
    %519 = vmatprep.subr.mxu0 0.0
    %520 = vmatpush1.msra.mxu0 0.0
    %521 = vmatprep.subr.mxu0 0.0
    %522 = vmatpush1.msra.mxu0 0.0
    %523 = vmatprep.subr.mxu0 0.0
    %524 = vmatpush1.msra.mxu0 0.0
    %525 = vmatprep.subr.mxu0 0.0
    %526 = vmatpush1.msra.mxu0 0.0
    %527 = vmatprep.subr.mxu0 0.0
    %528 = vmatpush1.msra.mxu0 0.0
    %529 = vmatprep.subr.mxu0 0.0
    %530 = vmatpush1.msra.mxu0 0.0
    %531 = vmatprep.subr.mxu0 0.0
    %532 = vmatpush1.msra.mxu0 0.0
    %533 = vmatprep.subr.mxu0 0.0
    %534 = vmatpush1.msra.mxu0 0.0
    %535 = vmatprep.mubr.f32.mxu0 0.0
    %536 = vmatmul.mubr.f32.gmra.mrb[0].mxu0 %v469
    %v537 = vpop.f32.mrb[0].mxu0
    %v538 = vadd.f32 %v60, %v537
    %v539 = vpop.f32.mrb[0].mxu0
    %v540 = vadd.f32 %v64, %v539
    %541 = vdwg.mxu0
    %s542 = scalar_lea.vmem %s0, 12
    %v543 = vld [vmem:[%s542] sm:$0xf]
    %v544 = vadd.f32 %v543, %v538
    %v545 = vxor.u32 %v544, 2147483648
    %v546 = vmul.f32 %v545, 1.442695
    %v547 = vpow.pop %v546
    %v548 = vadd.f32 %v547, 1.0
    %v549 = vrcp.pop %v548
    %v550 = vmul.f32 1.0, %v549
    %v551 = vmul.f32 %v550, %v540
    %v553 = vrot.slane %v543, 2
    %v555 = vadd.f32 %v553, %v551
    %v556 = vtanh.pop %v555
    %v557 = vsub.f32 1.0, %v550
    %559 = vrot.lane.b32.xlu0 %v556, 64
    %v560 = vpop.permute.xlu0 %559
    %v562 = vmul.f32 %v557, %v560
    %v563 = vmul.f32 %v550, %v434
    %v564 = vadd.f32 %v562, %v563
    %v567 = vunpack.c.l.s4 1966171168
    %v568 = vunpack.c.0.s8 %v567
    %v569 = vlaneseq
    %v570 = vshrl.u32 %v569, 7
    %v571 = vsub.s32 %v568, %v570
    %v572 = vrot.slane %v564, %v571
    %v573 = vcombine.high %v572, %v572
    %v574 = vlaneseq
    %v575 = vshrl.u32 %v574, 7
    %v576 = vsub.s32 0, %v575
    %v577 = vrot.slane %v572, %v576
    %v578 = vlaneseq
    %v579 = vshrl.u32 %v578, 7
    %v580 = vsub.s32 0, %v579
    %v581 = vrot.slane %v573, %v580
    %582 = vrot.lane.b32.xlu0 %v577, 64
    %v583 = vpop.permute.xlu0 %582
    %584 = vrot.lane.b32.xlu0 %v581, 64
    %v585 = vpop.permute.xlu0 %584
    %588 = vst.msk [vmem:[#allocation2 + $0x3] sm:$0x1] %vm197, %v583
    %589 = vst.msk [vmem:[#allocation2 + $0xb] sm:$0x1] %vm197, %v585
    %v591 = vunpack.c.l.s4 1983009808
    %v592 = vunpack.c.0.s8 %v591
    %v593 = vlaneseq
    %v594 = vshrl.u32 %v593, 7
    %v595 = vsub.s32 %v592, %v594
    %v596 = vrot.slane %v564, %v595
    %597 = vrot.lane.b32.xlu0 %v596, 64
    %v598 = vpop.permute.xlu0 %597
    %v599 = vsel %vm67, %v598, 0
    %601 = vmatprep.subr.mxu0 %v39
    %602 = vmatpush1.msra.mxu0 %v38
    %603 = vmatprep.subr.mxu0 %v41
    %604 = vmatpush1.msra.mxu0 %v40
    %605 = vmatprep.subr.mxu0 %v43
    %606 = vmatpush1.msra.mxu0 %v42
    %607 = vmatprep.subr.mxu0 %v45
    %608 = vmatpush1.msra.mxu0 %v44
    %609 = vmatprep.subr.mxu0 %v47
    %610 = vmatpush1.msra.mxu0 %v46
    %611 = vmatprep.subr.mxu0 %v49
    %612 = vmatpush1.msra.mxu0 %v48
    %613 = vmatprep.subr.mxu0 %v51
    %614 = vmatpush1.msra.mxu0 %v50
    %615 = vmatprep.subr.mxu0 %v53
    %616 = vmatpush1.msra.mxu0 %v52
    %617 = vmatprep.subr.mxu0 0.0
    %618 = vmatpush1.msra.mxu0 0.0
    %619 = vmatprep.subr.mxu0 0.0
    %620 = vmatpush1.msra.mxu0 0.0
    %621 = vmatprep.subr.mxu0 0.0
    %622 = vmatpush1.msra.mxu0 0.0
    %623 = vmatprep.subr.mxu0 0.0
    %624 = vmatpush1.msra.mxu0 0.0
    %625 = vmatprep.subr.mxu0 0.0
    %626 = vmatpush1.msra.mxu0 0.0
    %627 = vmatprep.subr.mxu0 0.0
    %628 = vmatpush1.msra.mxu0 0.0
    %629 = vmatprep.subr.mxu0 0.0
    %630 = vmatpush1.msra.mxu0 0.0
    %631 = vmatprep.subr.mxu0 0.0
    %632 = vmatpush1.msra.mxu0 0.0
    %633 = vmatprep.subr.mxu0 0.0
    %634 = vmatpush1.msra.mxu0 0.0
    %635 = vmatprep.subr.mxu0 0.0
    %636 = vmatpush1.msra.mxu0 0.0
    %637 = vmatprep.subr.mxu0 0.0
    %638 = vmatpush1.msra.mxu0 0.0
    %639 = vmatprep.subr.mxu0 0.0
    %640 = vmatpush1.msra.mxu0 0.0
    %641 = vmatprep.subr.mxu0 0.0
    %642 = vmatpush1.msra.mxu0 0.0
    %643 = vmatprep.subr.mxu0 0.0
    %644 = vmatpush1.msra.mxu0 0.0
    %645 = vmatprep.subr.mxu0 0.0
    %646 = vmatpush1.msra.mxu0 0.0
    %647 = vmatprep.subr.mxu0 0.0
    %648 = vmatpush1.msra.mxu0 0.0
    %649 = vmatprep.subr.mxu0 0.0
    %650 = vmatpush1.msra.mxu0 0.0
    %651 = vmatprep.subr.mxu0 0.0
    %652 = vmatpush1.msra.mxu0 0.0
    %653 = vmatprep.subr.mxu0 0.0
    %654 = vmatpush1.msra.mxu0 0.0
    %655 = vmatprep.subr.mxu0 0.0
    %656 = vmatpush1.msra.mxu0 0.0
    %657 = vmatprep.subr.mxu0 0.0
    %658 = vmatpush1.msra.mxu0 0.0
    %659 = vmatprep.subr.mxu0 0.0
    %660 = vmatpush1.msra.mxu0 0.0
    %661 = vmatprep.subr.mxu0 0.0
    %662 = vmatpush1.msra.mxu0 0.0
    %663 = vmatprep.subr.mxu0 0.0
    %664 = vmatpush1.msra.mxu0 0.0
    %665 = vmatprep.mubr.f32.mxu0 0.0
    %666 = vmatmul.mubr.f32.gmra.mrb[0].mxu0 %v599
    %v667 = vpop.f32.mrb[0].mxu0
    %v668 = vadd.f32 %v60, %v667
    %v669 = vpop.f32.mrb[0].mxu0
    %v670 = vadd.f32 %v64, %v669
    %671 = vdwg.mxu0
    %s672 = scalar_lea.vmem %s0, 16
    %v673 = vld [vmem:[%s672] sm:$0xf]
    %v674 = vadd.f32 %v673, %v668
    %v675 = vxor.u32 %v674, 2147483648
    %v676 = vmul.f32 %v675, 1.442695
    %v677 = vpow.pop %v676
    %v678 = vadd.f32 %v677, 1.0
    %v679 = vrcp.pop %v678
    %v680 = vmul.f32 1.0, %v679
    %v681 = vmul.f32 %v680, %v670
    %v683 = vrot.slane %v673, 2
    %v685 = vadd.f32 %v683, %v681
    %v686 = vtanh.pop %v685
    %v687 = vsub.f32 1.0, %v680
    %689 = vrot.lane.b32.xlu0 %v686, 64
    %v690 = vpop.permute.xlu0 %689
    %v692 = vmul.f32 %v687, %v690
    %v693 = vmul.f32 %v680, %v564
    %v694 = vadd.f32 %v692, %v693
    %v697 = vunpack.c.l.s4 1966171168
    %v698 = vunpack.c.0.s8 %v697
    %v699 = vlaneseq
    %v700 = vshrl.u32 %v699, 7
    %v701 = vsub.s32 %v698, %v700
    %v702 = vrot.slane %v694, %v701
    %v703 = vcombine.high %v702, %v702
    %v704 = vlaneseq
    %v705 = vshrl.u32 %v704, 7
    %v706 = vsub.s32 0, %v705
    %v707 = vrot.slane %v702, %v706
    %v708 = vlaneseq
    %v709 = vshrl.u32 %v708, 7
    %v710 = vsub.s32 0, %v709
    %v711 = vrot.slane %v703, %v710
    %712 = vrot.lane.b32.xlu0 %v707, 64
    %v713 = vpop.permute.xlu0 %712
    %714 = vrot.lane.b32.xlu0 %v711, 64
    %v715 = vpop.permute.xlu0 %714
    %718 = vst.msk [vmem:[#allocation2 + $0x4] sm:$0x1] %vm197, %v713
    %719 = vst.msk [vmem:[#allocation2 + $0xc] sm:$0x1] %vm197, %v715
    %v721 = vunpack.c.l.s4 1983009808
    %v722 = vunpack.c.0.s8 %v721
    %v723 = vlaneseq
    %v724 = vshrl.u32 %v723, 7
    %v725 = vsub.s32 %v722, %v724
    %v726 = vrot.slane %v694, %v725
    %727 = vrot.lane.b32.xlu0 %v726, 64
    %v728 = vpop.permute.xlu0 %727
    %v729 = vsel %vm67, %v728, 0
    %731 = vmatprep.subr.mxu0 %v39
    %732 = vmatpush1.msra.mxu0 %v38
    %733 = vmatprep.subr.mxu0 %v41
    %734 = vmatpush1.msra.mxu0 %v40
    %735 = vmatprep.subr.mxu0 %v43
    %736 = vmatpush1.msra.mxu0 %v42
    %737 = vmatprep.subr.mxu0 %v45
    %738 = vmatpush1.msra.mxu0 %v44
    %739 = vmatprep.subr.mxu0 %v47
    %740 = vmatpush1.msra.mxu0 %v46
    %741 = vmatprep.subr.mxu0 %v49
    %742 = vmatpush1.msra.mxu0 %v48
    %743 = vmatprep.subr.mxu0 %v51
    %744 = vmatpush1.msra.mxu0 %v50
    %745 = vmatprep.subr.mxu0 %v53
    %746 = vmatpush1.msra.mxu0 %v52
    %747 = vmatprep.subr.mxu0 0.0
    %748 = vmatpush1.msra.mxu0 0.0
    %749 = vmatprep.subr.mxu0 0.0
    %750 = vmatpush1.msra.mxu0 0.0
    %751 = vmatprep.subr.mxu0 0.0
    %752 = vmatpush1.msra.mxu0 0.0
    %753 = vmatprep.subr.mxu0 0.0
    %754 = vmatpush1.msra.mxu0 0.0
    %755 = vmatprep.subr.mxu0 0.0
    %756 = vmatpush1.msra.mxu0 0.0
    %757 = vmatprep.subr.mxu0 0.0
    %758 = vmatpush1.msra.mxu0 0.0
    %759 = vmatprep.subr.mxu0 0.0
    %760 = vmatpush1.msra.mxu0 0.0
    %761 = vmatprep.subr.mxu0 0.0
    %762 = vmatpush1.msra.mxu0 0.0
    %763 = vmatprep.subr.mxu0 0.0
    %764 = vmatpush1.msra.mxu0 0.0
    %765 = vmatprep.subr.mxu0 0.0
    %766 = vmatpush1.msra.mxu0 0.0
    %767 = vmatprep.subr.mxu0 0.0
    %768 = vmatpush1.msra.mxu0 0.0
    %769 = vmatprep.subr.mxu0 0.0
    %770 = vmatpush1.msra.mxu0 0.0
    %771 = vmatprep.subr.mxu0 0.0
    %772 = vmatpush1.msra.mxu0 0.0
    %773 = vmatprep.subr.mxu0 0.0
    %774 = vmatpush1.msra.mxu0 0.0
    %775 = vmatprep.subr.mxu0 0.0
    %776 = vmatpush1.msra.mxu0 0.0
    %777 = vmatprep.subr.mxu0 0.0
    %778 = vmatpush1.msra.mxu0 0.0
    %779 = vmatprep.subr.mxu0 0.0
    %780 = vmatpush1.msra.mxu0 0.0
    %781 = vmatprep.subr.mxu0 0.0
    %782 = vmatpush1.msra.mxu0 0.0
    %783 = vmatprep.subr.mxu0 0.0
    %784 = vmatpush1.msra.mxu0 0.0
    %785 = vmatprep.subr.mxu0 0.0
    %786 = vmatpush1.msra.mxu0 0.0
    %787 = vmatprep.subr.mxu0 0.0
    %788 = vmatpush1.msra.mxu0 0.0
    %789 = vmatprep.subr.mxu0 0.0
    %790 = vmatpush1.msra.mxu0 0.0
    %791 = vmatprep.subr.mxu0 0.0
    %792 = vmatpush1.msra.mxu0 0.0
    %793 = vmatprep.subr.mxu0 0.0
    %794 = vmatpush1.msra.mxu0 0.0
    %795 = vmatprep.mubr.f32.mxu0 0.0
    %796 = vmatmul.mubr.f32.gmra.mrb[0].mxu0 %v729
    %v797 = vpop.f32.mrb[0].mxu0
    %v798 = vadd.f32 %v60, %v797
    %v799 = vpop.f32.mrb[0].mxu0
    %v800 = vadd.f32 %v64, %v799
    %801 = vdwg.mxu0
    %s802 = scalar_lea.vmem %s0, 20
    %v803 = vld [vmem:[%s802] sm:$0xf]
    %v804 = vadd.f32 %v803, %v798
    %v805 = vxor.u32 %v804, 2147483648
    %v806 = vmul.f32 %v805, 1.442695
    %v807 = vpow.pop %v806
    %v808 = vadd.f32 %v807, 1.0
    %v809 = vrcp.pop %v808
    %v810 = vmul.f32 1.0, %v809
    %v811 = vmul.f32 %v810, %v800
    %v813 = vrot.slane %v803, 2
    %v815 = vadd.f32 %v813, %v811
    %v816 = vtanh.pop %v815
    %v817 = vsub.f32 1.0, %v810
    %819 = vrot.lane.b32.xlu0 %v816, 64
    %v820 = vpop.permute.xlu0 %819
    %v822 = vmul.f32 %v817, %v820
    %v823 = vmul.f32 %v810, %v694
    %v824 = vadd.f32 %v822, %v823
    %v827 = vunpack.c.l.s4 1966171168
    %v828 = vunpack.c.0.s8 %v827
    %v829 = vlaneseq
    %v830 = vshrl.u32 %v829, 7
    %v831 = vsub.s32 %v828, %v830
    %v832 = vrot.slane %v824, %v831
    %v833 = vcombine.high %v832, %v832
    %v834 = vlaneseq
    %v835 = vshrl.u32 %v834, 7
    %v836 = vsub.s32 0, %v835
    %v837 = vrot.slane %v832, %v836
    %v838 = vlaneseq
    %v839 = vshrl.u32 %v838, 7
    %v840 = vsub.s32 0, %v839
    %v841 = vrot.slane %v833, %v840
    %842 = vrot.lane.b32.xlu0 %v837, 64
    %v843 = vpop.permute.xlu0 %842
    %844 = vrot.lane.b32.xlu0 %v841, 64
    %v845 = vpop.permute.xlu0 %844
    %848 = vst.msk [vmem:[#allocation2 + $0x5] sm:$0x1] %vm197, %v843
    %849 = vst.msk [vmem:[#allocation2 + $0xd] sm:$0x1] %vm197, %v845
    %v851 = vunpack.c.l.s4 1983009808
    %v852 = vunpack.c.0.s8 %v851
    %v853 = vlaneseq
    %v854 = vshrl.u32 %v853, 7
    %v855 = vsub.s32 %v852, %v854
    %v856 = vrot.slane %v824, %v855
    %857 = vrot.lane.b32.xlu0 %v856, 64
    %v858 = vpop.permute.xlu0 %857
    %vm860 = vcmask 517120
    %861 = vst.msk [vmem:[#allocation3] sm:$0x3] %vm860, %v858
    %v862 = vld [vmem:[%s4] sm:$0xff]
    %v863 = vld [vmem:[%s4 + $0x8] sm:$0xff]
    %v864 = vld [vmem:[#allocation2] sm:$0x3f]
    %v865 = vld [vmem:[#allocation2 + $0x8] sm:$0x3f]
    %v867 = vsel %vm67, %v864, 0
    %v870 = vsel %vm67, %v862, 0
    %872 = vmatprep.subr.mxu0 0.0
    %873 = vmatpush1.xpose.msra.mxu0 %v870
    %874 = vmatprep.subr.mxu0 0.0
    %875 = vmatpush1.xpose.msra.mxu0 0.0
    %876 = vmatprep.subr.mxu0 0.0
    %877 = vmatpush1.xpose.msra.mxu0 0.0
    %878 = vmatprep.subr.mxu0 0.0
    %879 = vmatpush1.xpose.msra.mxu0 0.0
    %880 = vmatprep.subr.mxu0 0.0
    %881 = vmatpush1.xpose.msra.mxu0 0.0
    %882 = vmatprep.subr.mxu0 0.0
    %883 = vmatpush1.xpose.msra.mxu0 0.0
    %884 = vmatprep.subr.mxu0 0.0
    %885 = vmatpush1.xpose.msra.mxu0 0.0
    %886 = vmatprep.subr.mxu0 0.0
    %887 = vmatpush1.xpose.msra.mxu0 0.0
    %888 = vmatprep.subr.mxu0 0.0
    %889 = vmatpush1.xpose.msra.mxu0 0.0
    %890 = vmatprep.subr.mxu0 0.0
    %891 = vmatpush1.xpose.msra.mxu0 0.0
    %892 = vmatprep.subr.mxu0 0.0
    %893 = vmatpush1.xpose.msra.mxu0 0.0
    %894 = vmatprep.subr.mxu0 0.0
    %895 = vmatpush1.xpose.msra.mxu0 0.0
    %896 = vmatprep.subr.mxu0 0.0
    %897 = vmatpush1.xpose.msra.mxu0 0.0
    %898 = vmatprep.subr.mxu0 0.0
    %899 = vmatpush1.xpose.msra.mxu0 0.0
    %900 = vmatprep.subr.mxu0 0.0
    %901 = vmatpush1.xpose.msra.mxu0 0.0
    %902 = vmatprep.subr.mxu0 0.0
    %903 = vmatpush1.xpose.msra.mxu0 0.0
    %904 = vmatprep.subr.mxu0 0.0
    %905 = vmatpush1.xpose.msra.mxu0 0.0
    %906 = vmatprep.subr.mxu0 0.0
    %907 = vmatpush1.xpose.msra.mxu0 0.0
    %908 = vmatprep.subr.mxu0 0.0
    %909 = vmatpush1.xpose.msra.mxu0 0.0
    %910 = vmatprep.subr.mxu0 0.0
    %911 = vmatpush1.xpose.msra.mxu0 0.0
    %912 = vmatprep.subr.mxu0 0.0
    %913 = vmatpush1.xpose.msra.mxu0 0.0
    %914 = vmatprep.subr.mxu0 0.0
    %915 = vmatpush1.xpose.msra.mxu0 0.0
    %916 = vmatprep.subr.mxu0 0.0
    %917 = vmatpush1.xpose.msra.mxu0 0.0
    %918 = vmatprep.subr.mxu0 0.0
    %919 = vmatpush1.xpose.msra.mxu0 0.0
    %920 = vmatprep.subr.mxu0 0.0
    %921 = vmatpush1.xpose.msra.mxu0 0.0
    %922 = vmatprep.subr.mxu0 0.0
    %923 = vmatpush1.xpose.msra.mxu0 0.0
    %924 = vmatprep.subr.mxu0 0.0
    %925 = vmatpush1.xpose.msra.mxu0 0.0
    %926 = vmatprep.subr.mxu0 0.0
    %927 = vmatpush1.xpose.msra.mxu0 0.0
    %928 = vmatprep.subr.mxu0 0.0
    %929 = vmatpush1.xpose.msra.mxu0 0.0
    %930 = vmatprep.subr.mxu0 0.0
    %931 = vmatpush1.xpose.msra.mxu0 0.0
    %932 = vmatprep.subr.mxu0 0.0
    %933 = vmatpush1.xpose.msra.mxu0 0.0
    %934 = vmatprep.subr.mxu0 0.0
    %935 = vmatpush1.xpose.msra.mxu0 0.0
    %936 = vmatprep.mubr.f32.mxu0 0.0
    %937 = vmatmul.mubr.f32.gmra.mrb[0].mxu0 %v867
    %v938 = vpop.f32.mrb[0].mxu0
    %v939 = vadd.f32 0.0, %v938
    %v940 = vpop.f32.mrb[0].mxu0
    %941 = vdwg.mxu0
    %v943 = vsel %vm67, %v865, 0
    %v946 = vsel %vm67, %v863, 0
    %948 = vmatprep.subr.mxu0 0.0
    %949 = vmatpush1.xpose.msra.mxu0 %v946
    %950 = vmatprep.subr.mxu0 0.0
    %951 = vmatpush1.xpose.msra.mxu0 0.0
    %952 = vmatprep.subr.mxu0 0.0
    %953 = vmatpush1.xpose.msra.mxu0 0.0
    %954 = vmatprep.subr.mxu0 0.0
    %955 = vmatpush1.xpose.msra.mxu0 0.0
    %956 = vmatprep.subr.mxu0 0.0
    %957 = vmatpush1.xpose.msra.mxu0 0.0
    %958 = vmatprep.subr.mxu0 0.0
    %959 = vmatpush1.xpose.msra.mxu0 0.0
    %960 = vmatprep.subr.mxu0 0.0
    %961 = vmatpush1.xpose.msra.mxu0 0.0
    %962 = vmatprep.subr.mxu0 0.0
    %963 = vmatpush1.xpose.msra.mxu0 0.0
    %964 = vmatprep.subr.mxu0 0.0
    %965 = vmatpush1.xpose.msra.mxu0 0.0
    %966 = vmatprep.subr.mxu0 0.0
    %967 = vmatpush1.xpose.msra.mxu0 0.0
    %968 = vmatprep.subr.mxu0 0.0
    %969 = vmatpush1.xpose.msra.mxu0 0.0
    %970 = vmatprep.subr.mxu0 0.0
    %971 = vmatpush1.xpose.msra.mxu0 0.0
    %972 = vmatprep.subr.mxu0 0.0
    %973 = vmatpush1.xpose.msra.mxu0 0.0
    %974 = vmatprep.subr.mxu0 0.0
    %975 = vmatpush1.xpose.msra.mxu0 0.0
    %976 = vmatprep.subr.mxu0 0.0
    %977 = vmatpush1.xpose.msra.mxu0 0.0
    %978 = vmatprep.subr.mxu0 0.0
    %979 = vmatpush1.xpose.msra.mxu0 0.0
    %980 = vmatprep.subr.mxu0 0.0
    %981 = vmatpush1.xpose.msra.mxu0 0.0
    %982 = vmatprep.subr.mxu0 0.0
    %983 = vmatpush1.xpose.msra.mxu0 0.0
    %984 = vmatprep.subr.mxu0 0.0
    %985 = vmatpush1.xpose.msra.mxu0 0.0
    %986 = vmatprep.subr.mxu0 0.0
    %987 = vmatpush1.xpose.msra.mxu0 0.0
    %988 = vmatprep.subr.mxu0 0.0
    %989 = vmatpush1.xpose.msra.mxu0 0.0
    %990 = vmatprep.subr.mxu0 0.0
    %991 = vmatpush1.xpose.msra.mxu0 0.0
    %992 = vmatprep.subr.mxu0 0.0
    %993 = vmatpush1.xpose.msra.mxu0 0.0
    %994 = vmatprep.subr.mxu0 0.0
    %995 = vmatpush1.xpose.msra.mxu0 0.0
    %996 = vmatprep.subr.mxu0 0.0
    %997 = vmatpush1.xpose.msra.mxu0 0.0
    %998 = vmatprep.subr.mxu0 0.0
    %999 = vmatpush1.xpose.msra.mxu0 0.0
    %1000 = vmatprep.subr.mxu0 0.0
    %1001 = vmatpush1.xpose.msra.mxu0 0.0
    %1002 = vmatprep.subr.mxu0 0.0
    %1003 = vmatpush1.xpose.msra.mxu0 0.0
    %1004 = vmatprep.subr.mxu0 0.0
    %1005 = vmatpush1.xpose.msra.mxu0 0.0
    %1006 = vmatprep.subr.mxu0 0.0
    %1007 = vmatpush1.xpose.msra.mxu0 0.0
    %1008 = vmatprep.subr.mxu0 0.0
    %1009 = vmatpush1.xpose.msra.mxu0 0.0
    %1010 = vmatprep.subr.mxu0 0.0
    %1011 = vmatpush1.xpose.msra.mxu0 0.0
    %1012 = vmatprep.mubr.f32.mxu0 0.0
    %1013 = vmatmul.mubr.f32.gmra.mrb[0].mxu0 %v943
    %v1014 = vpop.f32.mrb[0].mxu0
    %v1015 = vadd.f32 0.0, %v1014
    %v1016 = vpop.f32.mrb[0].mxu0
    %1017 = vdwg.mxu0
    %vm1018 = vcmask 62464
    %v1019 = vsel %vm1018, %v939, -inf
    %1020 = vmax.xlane.f32.xlu0 %v1019
    %v1021 = vpop.xlane.xlu0 %1020
    %v1022 = vsel %vm1018, %v1015, -inf
    %1023 = vmax.xlane.f32.xlu0 %v1022
    %v1024 = vpop.xlane.xlu0 %1023
    %v1025 = vsub.f32 %v939, %v1021
    %v1026 = vsub.f32 %v1015, %v1024
    %v1027 = vmul.f32 %v1025, 1.442695
    %v1028 = vpow.pop %v1027
    %v1029 = vmul.f32 %v1026, 1.442695
    %v1030 = vpow.pop %v1029
    %v1031 = vsel %vm1018, %v1028, 0.0
    %1032 = vadd.xlane.f32.xlu0 %v1031
    %v1033 = vpop.xlane.xlu0 %1032
    %v1034 = vsel %vm1018, %v1030, 0.0
    %1035 = vadd.xlane.f32.xlu0 %v1034
    %v1036 = vpop.xlane.xlu0 %1035
    %v1037 = vrcp.pop %v1033
    %v1038 = vrcp.pop %v1036
    %v1039 = vmul.f32 %v1028, %v1037
    %v1040 = vmul.f32 %v1030, %v1038
    %vm1041 = vcmask 64512
    %v1043 = vsel %vm1041, %v1039, 0
    %1045 = vmatprep.subr.mxu0 0.0
    %1046 = vmatpush1.msra.mxu0 %v862
    %1047 = vmatprep.subr.mxu0 0.0
    %1048 = vmatpush1.msra.mxu0 0.0
    %1049 = vmatprep.subr.mxu0 0.0
    %1050 = vmatpush1.msra.mxu0 0.0
    %1051 = vmatprep.subr.mxu0 0.0
    %1052 = vmatpush1.msra.mxu0 0.0
    %1053 = vmatprep.subr.mxu0 0.0
    %1054 = vmatpush1.msra.mxu0 0.0
    %1055 = vmatprep.subr.mxu0 0.0
    %1056 = vmatpush1.msra.mxu0 0.0
    %1057 = vmatprep.subr.mxu0 0.0
    %1058 = vmatpush1.msra.mxu0 0.0
    %1059 = vmatprep.subr.mxu0 0.0
    %1060 = vmatpush1.msra.mxu0 0.0
    %1061 = vmatprep.subr.mxu0 0.0
    %1062 = vmatpush1.msra.mxu0 0.0
    %1063 = vmatprep.subr.mxu0 0.0
    %1064 = vmatpush1.msra.mxu0 0.0
    %1065 = vmatprep.subr.mxu0 0.0
    %1066 = vmatpush1.msra.mxu0 0.0
    %1067 = vmatprep.subr.mxu0 0.0
    %1068 = vmatpush1.msra.mxu0 0.0
    %1069 = vmatprep.subr.mxu0 0.0
    %1070 = vmatpush1.msra.mxu0 0.0
    %1071 = vmatprep.subr.mxu0 0.0
    %1072 = vmatpush1.msra.mxu0 0.0
    %1073 = vmatprep.subr.mxu0 0.0
    %1074 = vmatpush1.msra.mxu0 0.0
    %1075 = vmatprep.subr.mxu0 0.0
    %1076 = vmatpush1.msra.mxu0 0.0
    %1077 = vmatprep.subr.mxu0 0.0
    %1078 = vmatpush1.msra.mxu0 0.0
    %1079 = vmatprep.subr.mxu0 0.0
    %1080 = vmatpush1.msra.mxu0 0.0
    %1081 = vmatprep.subr.mxu0 0.0
    %1082 = vmatpush1.msra.mxu0 0.0
    %1083 = vmatprep.subr.mxu0 0.0
    %1084 = vmatpush1.msra.mxu0 0.0
    %1085 = vmatprep.subr.mxu0 0.0
    %1086 = vmatpush1.msra.mxu0 0.0
    %1087 = vmatprep.subr.mxu0 0.0
    %1088 = vmatpush1.msra.mxu0 0.0
    %1089 = vmatprep.subr.mxu0 0.0
    %1090 = vmatpush1.msra.mxu0 0.0
    %1091 = vmatprep.subr.mxu0 0.0
    %1092 = vmatpush1.msra.mxu0 0.0
    %1093 = vmatprep.subr.mxu0 0.0
    %1094 = vmatpush1.msra.mxu0 0.0
    %1095 = vmatprep.subr.mxu0 0.0
    %1096 = vmatpush1.msra.mxu0 0.0
    %1097 = vmatprep.subr.mxu0 0.0
    %1098 = vmatpush1.msra.mxu0 0.0
    %1099 = vmatprep.subr.mxu0 0.0
    %1100 = vmatpush1.msra.mxu0 0.0
    %1101 = vmatprep.subr.mxu0 0.0
    %1102 = vmatpush1.msra.mxu0 0.0
    %1103 = vmatprep.subr.mxu0 0.0
    %1104 = vmatpush1.msra.mxu0 0.0
    %1105 = vmatprep.subr.mxu0 0.0
    %1106 = vmatpush1.msra.mxu0 0.0
    %1107 = vmatprep.subr.mxu0 0.0
    %1108 = vmatpush1.msra.mxu0 0.0
    %1109 = vmatprep.mubr.f32.mxu0 0.0
    %1110 = vmatmul.mubr.f32.gmra.mrb[0].mxu0 %v1043
    %v1111 = vpop.f32.mrb[0].mxu0
    %v1112 = vadd.f32 0.0, %v1111
    %v1113 = vpop.f32.mrb[0].mxu0
    %1114 = vdwg.mxu0
    %v1116 = vsel %vm1041, %v1040, 0
    %1118 = vmatprep.subr.mxu0 0.0
    %1119 = vmatpush1.msra.mxu0 %v863
    %1120 = vmatprep.subr.mxu0 0.0
    %1121 = vmatpush1.msra.mxu0 0.0
    %1122 = vmatprep.subr.mxu0 0.0
    %1123 = vmatpush1.msra.mxu0 0.0
    %1124 = vmatprep.subr.mxu0 0.0
    %1125 = vmatpush1.msra.mxu0 0.0
    %1126 = vmatprep.subr.mxu0 0.0
    %1127 = vmatpush1.msra.mxu0 0.0
    %1128 = vmatprep.subr.mxu0 0.0
    %1129 = vmatpush1.msra.mxu0 0.0
    %1130 = vmatprep.subr.mxu0 0.0
    %1131 = vmatpush1.msra.mxu0 0.0
    %1132 = vmatprep.subr.mxu0 0.0
    %1133 = vmatpush1.msra.mxu0 0.0
    %1134 = vmatprep.subr.mxu0 0.0
    %1135 = vmatpush1.msra.mxu0 0.0
    %1136 = vmatprep.subr.mxu0 0.0
    %1137 = vmatpush1.msra.mxu0 0.0
    %1138 = vmatprep.subr.mxu0 0.0
    %1139 = vmatpush1.msra.mxu0 0.0
    %1140 = vmatprep.subr.mxu0 0.0
    %1141 = vmatpush1.msra.mxu0 0.0
    %1142 = vmatprep.subr.mxu0 0.0
    %1143 = vmatpush1.msra.mxu0 0.0
    %1144 = vmatprep.subr.mxu0 0.0
    %1145 = vmatpush1.msra.mxu0 0.0
    %1146 = vmatprep.subr.mxu0 0.0
    %1147 = vmatpush1.msra.mxu0 0.0
    %1148 = vmatprep.subr.mxu0 0.0
    %1149 = vmatpush1.msra.mxu0 0.0
    %1150 = vmatprep.subr.mxu0 0.0
    %1151 = vmatpush1.msra.mxu0 0.0
    %1152 = vmatprep.subr.mxu0 0.0
    %1153 = vmatpush1.msra.mxu0 0.0
    %1154 = vmatprep.subr.mxu0 0.0
    %1155 = vmatpush1.msra.mxu0 0.0
    %1156 = vmatprep.subr.mxu0 0.0
    %1157 = vmatpush1.msra.mxu0 0.0
    %1158 = vmatprep.subr.mxu0 0.0
    %1159 = vmatpush1.msra.mxu0 0.0
    %1160 = vmatprep.subr.mxu0 0.0
    %1161 = vmatpush1.msra.mxu0 0.0
    %1162 = vmatprep.subr.mxu0 0.0
    %1163 = vmatpush1.msra.mxu0 0.0
    %1164 = vmatprep.subr.mxu0 0.0
    %1165 = vmatpush1.msra.mxu0 0.0
    %1166 = vmatprep.subr.mxu0 0.0
    %1167 = vmatpush1.msra.mxu0 0.0
    %1168 = vmatprep.subr.mxu0 0.0
    %1169 = vmatpush1.msra.mxu0 0.0
    %1170 = vmatprep.subr.mxu0 0.0
    %1171 = vmatpush1.msra.mxu0 0.0
    %1172 = vmatprep.subr.mxu0 0.0
    %1173 = vmatpush1.msra.mxu0 0.0
    %1174 = vmatprep.subr.mxu0 0.0
    %1175 = vmatpush1.msra.mxu0 0.0
    %1176 = vmatprep.subr.mxu0 0.0
    %1177 = vmatpush1.msra.mxu0 0.0
    %1178 = vmatprep.subr.mxu0 0.0
    %1179 = vmatpush1.msra.mxu0 0.0
    %1180 = vmatprep.subr.mxu0 0.0
    %1181 = vmatpush1.msra.mxu0 0.0
    %1182 = vmatprep.mubr.f32.mxu0 0.0
    %1183 = vmatmul.mubr.f32.gmra.mrb[0].mxu0 %v1116
    %v1184 = vpop.f32.mrb[0].mxu0
    %v1185 = vadd.f32 0.0, %v1184
    %v1186 = vpop.f32.mrb[0].mxu0
    %1187 = vdwg.mxu0
    %v1190 = vcombine.high %v1112, %v1112
    %v1192 = vunpack.c.l.s4 1983009808
    %v1193 = vunpack.c.0.s8 %v1192
    %v1194 = vlaneseq
    %v1195 = vshrl.u32 %v1194, 7
    %v1196 = vsub.s32 %v1193, %v1195
    %v1197 = vrot.slane %v1112, %v1196
    %v1199 = vunpack.c.l.s4 1983009808
    %v1200 = vunpack.c.0.s8 %v1199
    %v1201 = vlaneseq
    %v1202 = vshrl.u32 %v1201, 7
    %v1203 = vsub.s32 %v1200, %v1202
    %v1204 = vrot.slane %v1190, %v1203
    %v1205 = vcombine.high %v1197, %v1197
    %v1206 = vcombine.high %v1185, %v1185
    %v1208 = vunpack.c.l.s4 1983009808
    %v1209 = vunpack.c.0.s8 %v1208
    %v1210 = vlaneseq
    %v1211 = vshrl.u32 %v1210, 7
    %v1212 = vsub.s32 %v1209, %v1211
    %v1213 = vrot.slane %v1185, %v1212
    %v1215 = vunpack.c.l.s4 1983009808
    %v1216 = vunpack.c.0.s8 %v1215
    %v1217 = vlaneseq
    %v1218 = vshrl.u32 %v1217, 7
    %v1219 = vsub.s32 %v1216, %v1218
    %v1220 = vrot.slane %v1206, %v1219
    %v1221 = vcombine.high %v1213, %v1213
    %v1222 = vcombine.high %v864, %v864
    %v1224 = vunpack.c.l.s4 1983009808
    %v1225 = vunpack.c.0.s8 %v1224
    %v1226 = vlaneseq
    %v1227 = vshrl.u32 %v1226, 7
    %v1228 = vsub.s32 %v1225, %v1227
    %v1229 = vrot.slane %v864, %v1228
    %v1231 = vunpack.c.l.s4 1983009808
    %v1232 = vunpack.c.0.s8 %v1231
    %v1233 = vlaneseq
    %v1234 = vshrl.u32 %v1233, 7
    %v1235 = vsub.s32 %v1232, %v1234
    %v1236 = vrot.slane %v1222, %v1235
    %v1237 = vcombine.high %v1229, %v1229
    %v1238 = vcombine.high %v865, %v865
    %v1240 = vunpack.c.l.s4 1983009808
    %v1241 = vunpack.c.0.s8 %v1240
    %v1242 = vlaneseq
    %v1243 = vshrl.u32 %v1242, 7
    %v1244 = vsub.s32 %v1241, %v1243
    %v1245 = vrot.slane %v865, %v1244
    %v1247 = vunpack.c.l.s4 1983009808
    %v1248 = vunpack.c.0.s8 %v1247
    %v1249 = vlaneseq
    %v1250 = vshrl.u32 %v1249, 7
    %v1251 = vsub.s32 %v1248, %v1250
    %v1252 = vrot.slane %v1238, %v1251
    %v1253 = vcombine.high %v1245, %v1245
    %v1254 = vld [vmem:[%s5] sm:$0xff]
    %v1255 = vld [vmem:[%s5 + $0x8] sm:$0xff]
    %v1256 = vld [vmem:[%s5 + $0x10] sm:$0xff]
    %v1257 = vld [vmem:[%s5 + $0x18] sm:$0xff]
    %v1258 = vld [vmem:[%s5 + $0x20] sm:$0xff]
    %v1259 = vld [vmem:[%s5 + $0x28] sm:$0xff]
    %v1260 = vld [vmem:[%s5 + $0x30] sm:$0xff]
    %v1261 = vld [vmem:[%s5 + $0x38] sm:$0xff]
    %v1262 = vld [vmem:[%s6] sm:$0xff]
    %v1263 = vld [vmem:[%s6 + $0x8] sm:$0xff]
    %v1264 = vld [vmem:[%s6 + $0x10] sm:$0xff]
    %v1265 = vld [vmem:[%s6 + $0x18] sm:$0xff]
    %v1266 = vld [vmem:[%s6 + $0x20] sm:$0xff]
    %v1267 = vld [vmem:[%s6 + $0x28] sm:$0xff]
    %v1268 = vld [vmem:[%s6 + $0x30] sm:$0xff]
    %v1269 = vld [vmem:[%s6 + $0x38] sm:$0xff]
    %v1270 = vcombine.low %v1229, %v1237
    %v1271 = vcombine.low %v1236, %v1245
    %v1273 = vunpack.c.l.s4 1983009808
    %v1274 = vunpack.c.0.s8 %v1273
    %v1275 = vlaneseq
    %v1276 = vshrl.u32 %v1275, 7
    %v1277 = vsub.s32 %v1274, %v1276
    %v1278 = vrot.slane %v1270, %v1277
    %v1280 = vunpack.c.l.s4 1983009808
    %v1281 = vunpack.c.0.s8 %v1280
    %v1282 = vlaneseq
    %v1283 = vshrl.u32 %v1282, 7
    %v1284 = vsub.s32 %v1281, %v1283
    %v1285 = vrot.slane %v1271, %v1284
    %v1286 = vcombine.low %v1278, %v1285
    %v1287 = vcombine.low %v1253, %v1252
    %v1289 = vunpack.c.l.s4 1983009808
    %v1290 = vunpack.c.0.s8 %v1289
    %v1291 = vlaneseq
    %v1292 = vshrl.u32 %v1291, 7
    %v1293 = vsub.s32 %v1290, %v1292
    %v1294 = vrot.slane %v1287, %v1293
    %v1295 = vsel %vm67, %v1286, 0
    %v1297 = vsel %vm67, %v1294, 0
    %1299 = vmatprep.subr.mxu0 0.0
    %1300 = vmatpush1.msra.mxu0 %v1262
    %1301 = vmatprep.subr.mxu0 0.0
    %1302 = vmatpush1.msra.mxu0 %v1263
    %1303 = vmatprep.subr.mxu0 0.0
    %1304 = vmatpush1.msra.mxu0 %v1264
    %1305 = vmatprep.subr.mxu0 0.0
    %1306 = vmatpush1.msra.mxu0 %v1265
    %1307 = vmatprep.subr.mxu0 0.0
    %1308 = vmatpush1.msra.mxu0 %v1266
    %1309 = vmatprep.subr.mxu0 0.0
    %1310 = vmatpush1.msra.mxu0 %v1267
    %1311 = vmatprep.subr.mxu0 0.0
    %1312 = vmatpush1.msra.mxu0 %v1268
    %1313 = vmatprep.subr.mxu0 0.0
    %1314 = vmatpush1.msra.mxu0 %v1269
    %1315 = vmatprep.subr.mxu0 0.0
    %1316 = vmatpush1.msra.mxu0 0.0
    %1317 = vmatprep.subr.mxu0 0.0
    %1318 = vmatpush1.msra.mxu0 0.0
    %1319 = vmatprep.subr.mxu0 0.0
    %1320 = vmatpush1.msra.mxu0 0.0
    %1321 = vmatprep.subr.mxu0 0.0
    %1322 = vmatpush1.msra.mxu0 0.0
    %1323 = vmatprep.subr.mxu0 0.0
    %1324 = vmatpush1.msra.mxu0 0.0
    %1325 = vmatprep.subr.mxu0 0.0
    %1326 = vmatpush1.msra.mxu0 0.0
    %1327 = vmatprep.subr.mxu0 0.0
    %1328 = vmatpush1.msra.mxu0 0.0
    %1329 = vmatprep.subr.mxu0 0.0
    %1330 = vmatpush1.msra.mxu0 0.0
    %1331 = vmatprep.subr.mxu0 0.0
    %1332 = vmatpush1.msra.mxu0 0.0
    %1333 = vmatprep.subr.mxu0 0.0
    %1334 = vmatpush1.msra.mxu0 0.0
    %1335 = vmatprep.subr.mxu0 0.0
    %1336 = vmatpush1.msra.mxu0 0.0
    %1337 = vmatprep.subr.mxu0 0.0
    %1338 = vmatpush1.msra.mxu0 0.0
    %1339 = vmatprep.subr.mxu0 0.0
    %1340 = vmatpush1.msra.mxu0 0.0
    %1341 = vmatprep.subr.mxu0 0.0
    %1342 = vmatpush1.msra.mxu0 0.0
    %1343 = vmatprep.subr.mxu0 0.0
    %1344 = vmatpush1.msra.mxu0 0.0
    %1345 = vmatprep.subr.mxu0 0.0
    %1346 = vmatpush1.msra.mxu0 0.0
    %1347 = vmatprep.subr.mxu0 0.0
    %1348 = vmatpush1.msra.mxu0 0.0
    %1349 = vmatprep.subr.mxu0 0.0
    %1350 = vmatpush1.msra.mxu0 0.0
    %1351 = vmatprep.subr.mxu0 0.0
    %1352 = vmatpush1.msra.mxu0 0.0
    %1353 = vmatprep.subr.mxu0 0.0
    %1354 = vmatpush1.msra.mxu0 0.0
    %1355 = vmatprep.subr.mxu0 0.0
    %1356 = vmatpush1.msra.mxu0 0.0
    %1357 = vmatprep.subr.mxu0 0.0
    %1358 = vmatpush1.msra.mxu0 0.0
    %1359 = vmatprep.subr.mxu0 0.0
    %1360 = vmatpush1.msra.mxu0 0.0
    %1361 = vmatprep.subr.mxu0 0.0
    %1362 = vmatpush1.msra.mxu0 0.0
    %1363 = vmatprep.mubr.f32.mxu0 0.0
    %1364 = vmatmul.mubr.f32.gmra.mrb[0].mxu0 %v1295
    %v1365 = vpop.f32.mrb[0].mxu0
    %v1366 = vadd.f32 0.0, %v1365
    %v1367 = vpop.f32.mrb[0].mxu0
    %1368 = vmatprep.mubr.f32.mxu0 0.0
    %1369 = vmatmul.mubr.f32.gmra.mrb[0].mxu0 %v1297
    %v1370 = vpop.f32.mrb[0].mxu0
    %v1371 = vadd.f32 0.0, %v1370
    %v1372 = vpop.f32.mrb[0].mxu0
    %1373 = vdwg.mxu0
    %v1374 = vcombine.low %v1197, %v1205
    %v1375 = vcombine.low %v1204, %v1213
    %v1377 = vunpack.c.l.s4 1983009808
    %v1378 = vunpack.c.0.s8 %v1377
    %v1379 = vlaneseq
    %v1380 = vshrl.u32 %v1379, 7
    %v1381 = vsub.s32 %v1378, %v1380
    %v1382 = vrot.slane %v1374, %v1381
    %v1384 = vunpack.c.l.s4 1983009808
    %v1385 = vunpack.c.0.s8 %v1384
    %v1386 = vlaneseq
    %v1387 = vshrl.u32 %v1386, 7
    %v1388 = vsub.s32 %v1385, %v1387
    %v1389 = vrot.slane %v1375, %v1388
    %v1390 = vcombine.low %v1382, %v1389
    %v1391 = vcombine.low %v1221, %v1220
    %v1393 = vunpack.c.l.s4 1983009808
    %v1394 = vunpack.c.0.s8 %v1393
    %v1395 = vlaneseq
    %v1396 = vshrl.u32 %v1395, 7
    %v1397 = vsub.s32 %v1394, %v1396
    %v1398 = vrot.slane %v1391, %v1397
    %v1399 = vsel %vm67, %v1390, 0
    %v1401 = vsel %vm67, %v1398, 0
    %1403 = vmatprep.subr.mxu0 0.0
    %1404 = vmatpush1.msra.mxu0 %v1254
    %1405 = vmatprep.subr.mxu0 0.0
    %1406 = vmatpush1.msra.mxu0 %v1255
    %1407 = vmatprep.subr.mxu0 0.0
    %1408 = vmatpush1.msra.mxu0 %v1256
    %1409 = vmatprep.subr.mxu0 0.0
    %1410 = vmatpush1.msra.mxu0 %v1257
    %1411 = vmatprep.subr.mxu0 0.0
    %1412 = vmatpush1.msra.mxu0 %v1258
    %1413 = vmatprep.subr.mxu0 0.0
    %1414 = vmatpush1.msra.mxu0 %v1259
    %1415 = vmatprep.subr.mxu0 0.0
    %1416 = vmatpush1.msra.mxu0 %v1260
    %1417 = vmatprep.subr.mxu0 0.0
    %1418 = vmatpush1.msra.mxu0 %v1261
    %1419 = vmatprep.subr.mxu0 0.0
    %1420 = vmatpush1.msra.mxu0 0.0
    %1421 = vmatprep.subr.mxu0 0.0
    %1422 = vmatpush1.msra.mxu0 0.0
    %1423 = vmatprep.subr.mxu0 0.0
    %1424 = vmatpush1.msra.mxu0 0.0
    %1425 = vmatprep.subr.mxu0 0.0
    %1426 = vmatpush1.msra.mxu0 0.0
    %1427 = vmatprep.subr.mxu0 0.0
    %1428 = vmatpush1.msra.mxu0 0.0
    %1429 = vmatprep.subr.mxu0 0.0
    %1430 = vmatpush1.msra.mxu0 0.0
    %1431 = vmatprep.subr.mxu0 0.0
    %1432 = vmatpush1.msra.mxu0 0.0
    %1433 = vmatprep.subr.mxu0 0.0
    %1434 = vmatpush1.msra.mxu0 0.0
    %1435 = vmatprep.subr.mxu0 0.0
    %1436 = vmatpush1.msra.mxu0 0.0
    %1437 = vmatprep.subr.mxu0 0.0
    %1438 = vmatpush1.msra.mxu0 0.0
    %1439 = vmatprep.subr.mxu0 0.0
    %1440 = vmatpush1.msra.mxu0 0.0
    %1441 = vmatprep.subr.mxu0 0.0
    %1442 = vmatpush1.msra.mxu0 0.0
    %1443 = vmatprep.subr.mxu0 0.0
    %1444 = vmatpush1.msra.mxu0 0.0
    %1445 = vmatprep.subr.mxu0 0.0
    %1446 = vmatpush1.msra.mxu0 0.0
    %1447 = vmatprep.subr.mxu0 0.0
    %1448 = vmatpush1.msra.mxu0 0.0
    %1449 = vmatprep.subr.mxu0 0.0
    %1450 = vmatpush1.msra.mxu0 0.0
    %1451 = vmatprep.subr.mxu0 0.0
    %1452 = vmatpush1.msra.mxu0 0.0
    %1453 = vmatprep.subr.mxu0 0.0
    %1454 = vmatpush1.msra.mxu0 0.0
    %1455 = vmatprep.subr.mxu0 0.0
    %1456 = vmatpush1.msra.mxu0 0.0
    %1457 = vmatprep.subr.mxu0 0.0
    %1458 = vmatpush1.msra.mxu0 0.0
    %1459 = vmatprep.subr.mxu0 0.0
    %1460 = vmatpush1.msra.mxu0 0.0
    %1461 = vmatprep.subr.mxu0 0.0
    %1462 = vmatpush1.msra.mxu0 0.0
    %1463 = vmatprep.subr.mxu0 0.0
    %1464 = vmatpush1.msra.mxu0 0.0
    %1465 = vmatprep.subr.mxu0 0.0
    %1466 = vmatpush1.msra.mxu0 0.0
    %1467 = vmatprep.mubr.f32.mxu0 0.0
    %1468 = vmatmul.mubr.f32.gmra.mrb[0].mxu0 %v1399
    %v1469 = vpop.f32.mrb[0].mxu0
    %v1470 = vadd.f32 %v1366, %v1469
    %v1471 = vpop.f32.mrb[0].mxu0
    %1472 = vmatprep.mubr.f32.mxu0 0.0
    %1473 = vmatmul.mubr.f32.gmra.mrb[0].mxu0 %v1401
    %v1474 = vpop.f32.mrb[0].mxu0
    %v1475 = vadd.f32 %v1371, %v1474
    %v1476 = vpop.f32.mrb[0].mxu0
    %1477 = vdwg.mxu0
    %v1478 = vld [vmem:[%s7] sm:$0x1]
    %v1480 = vlaneseq
    %v1481 = vshrl.u32 %v1480, 7
    %v1482 = vsub.s32 0, %v1481
    %v1483 = vrot.slane %v1478, %v1482
    %v1485 = vadd.f32 %v1470, %v1483
    %v1486 = vadd.f32 %v1475, %v1483
    %v1487 = vtanh.pop %v1485
    %v1488 = vtanh.pop %v1486
    %v1489 = vld [vmem:[%s8] sm:$0xff]
    %v1490 = vld [vmem:[%s8 + $0x8] sm:$0xff]
    %v1491 = vld [vmem:[%s8 + $0x10] sm:$0xff]
    %v1492 = vld [vmem:[%s8 + $0x18] sm:$0xff]
    %v1493 = vld [vmem:[%s8 + $0x20] sm:$0xff]
    %v1494 = vld [vmem:[%s8 + $0x28] sm:$0xff]
    %v1495 = vld [vmem:[%s8 + $0x30] sm:$0xff]
    %v1496 = vld [vmem:[%s8 + $0x38] sm:$0xff]
    %v1497 = vld [vmem:[%s9] sm:$0x1]
    %v1499 = vlaneseq
    %v1500 = vshrl.u32 %v1499, 7
    %v1501 = vsub.s32 0, %v1500
    %v1502 = vrot.slane %v1497, %v1501
    %v1505 = vsel %vm67, %v1487, 0
    %v1508 = vsel %vm67, %v1488, 0
    %1510 = vmatprep.subr.mxu0 0.0
    %1511 = vmatpush1.msra.mxu0 %v1489
    %1512 = vmatprep.subr.mxu0 0.0
    %1513 = vmatpush1.msra.mxu0 %v1490
    %1514 = vmatprep.subr.mxu0 0.0
    %1515 = vmatpush1.msra.mxu0 %v1491
    %1516 = vmatprep.subr.mxu0 0.0
    %1517 = vmatpush1.msra.mxu0 %v1492
    %1518 = vmatprep.subr.mxu0 0.0
    %1519 = vmatpush1.msra.mxu0 %v1493
    %1520 = vmatprep.subr.mxu0 0.0
    %1521 = vmatpush1.msra.mxu0 %v1494
    %1522 = vmatprep.subr.mxu0 0.0
    %1523 = vmatpush1.msra.mxu0 %v1495
    %1524 = vmatprep.subr.mxu0 0.0
    %1525 = vmatpush1.msra.mxu0 %v1496
    %1526 = vmatprep.subr.mxu0 0.0
    %1527 = vmatpush1.msra.mxu0 0.0
    %1528 = vmatprep.subr.mxu0 0.0
    %1529 = vmatpush1.msra.mxu0 0.0
    %1530 = vmatprep.subr.mxu0 0.0
    %1531 = vmatpush1.msra.mxu0 0.0
    %1532 = vmatprep.subr.mxu0 0.0
    %1533 = vmatpush1.msra.mxu0 0.0
    %1534 = vmatprep.subr.mxu0 0.0
    %1535 = vmatpush1.msra.mxu0 0.0
    %1536 = vmatprep.subr.mxu0 0.0
    %1537 = vmatpush1.msra.mxu0 0.0
    %1538 = vmatprep.subr.mxu0 0.0
    %1539 = vmatpush1.msra.mxu0 0.0
    %1540 = vmatprep.subr.mxu0 0.0
    %1541 = vmatpush1.msra.mxu0 0.0
    %1542 = vmatprep.subr.mxu0 0.0
    %1543 = vmatpush1.msra.mxu0 0.0
    %1544 = vmatprep.subr.mxu0 0.0
    %1545 = vmatpush1.msra.mxu0 0.0
    %1546 = vmatprep.subr.mxu0 0.0
    %1547 = vmatpush1.msra.mxu0 0.0
    %1548 = vmatprep.subr.mxu0 0.0
    %1549 = vmatpush1.msra.mxu0 0.0
    %1550 = vmatprep.subr.mxu0 0.0
    %1551 = vmatpush1.msra.mxu0 0.0
    %1552 = vmatprep.subr.mxu0 0.0
    %1553 = vmatpush1.msra.mxu0 0.0
    %1554 = vmatprep.subr.mxu0 0.0
    %1555 = vmatpush1.msra.mxu0 0.0
    %1556 = vmatprep.subr.mxu0 0.0
    %1557 = vmatpush1.msra.mxu0 0.0
    %1558 = vmatprep.subr.mxu0 0.0
    %1559 = vmatpush1.msra.mxu0 0.0
    %1560 = vmatprep.subr.mxu0 0.0
    %1561 = vmatpush1.msra.mxu0 0.0
    %1562 = vmatprep.subr.mxu0 0.0
    %1563 = vmatpush1.msra.mxu0 0.0
    %1564 = vmatprep.subr.mxu0 0.0
    %1565 = vmatpush1.msra.mxu0 0.0
    %1566 = vmatprep.subr.mxu0 0.0
    %1567 = vmatpush1.msra.mxu0 0.0
    %1568 = vmatprep.subr.mxu0 0.0
    %1569 = vmatpush1.msra.mxu0 0.0
    %1570 = vmatprep.subr.mxu0 0.0
    %1571 = vmatpush1.msra.mxu0 0.0
    %1572 = vmatprep.subr.mxu0 0.0
    %1573 = vmatpush1.msra.mxu0 0.0
    %1574 = vmatprep.mubr.f32.mxu0 0.0
    %1575 = vmatmul.mubr.f32.gmra.mrb[0].mxu0 %v1505
    %v1576 = vpop.f32.mrb[0].mxu0
    %v1577 = vadd.f32 %v1502, %v1576
    %v1578 = vpop.f32.mrb[0].mxu0
    %1579 = vmatprep.mubr.f32.mxu0 0.0
    %1580 = vmatmul.mubr.f32.gmra.mrb[0].mxu0 %v1508
    %v1581 = vpop.f32.mrb[0].mxu0
    %v1582 = vadd.f32 %v1502, %v1581
    %v1583 = vpop.f32.mrb[0].mxu0
    %1584 = vdwg.mxu0
    %v1587 = vcombine.high %v1577, %v1577
    %v1589 = vunpack.c.l.s4 1983009808
    %v1590 = vunpack.c.0.s8 %v1589
    %v1591 = vlaneseq
    %v1592 = vshrl.u32 %v1591, 7
    %v1593 = vsub.s32 %v1590, %v1592
    %v1594 = vrot.slane %v1577, %v1593
    %v1596 = vunpack.c.l.s4 1983009808
    %v1597 = vunpack.c.0.s8 %v1596
    %v1598 = vlaneseq
    %v1599 = vshrl.u32 %v1598, 7
    %v1600 = vsub.s32 %v1597, %v1599
    %v1601 = vrot.slane %v1587, %v1600
    %v1602 = vcombine.high %v1594, %v1594
    %v1603 = vcombine.high %v1601, %v1601
    %v1605 = vunpack.c.l.s4 1983009808
    %v1606 = vunpack.c.0.s8 %v1605
    %v1607 = vlaneseq
    %v1608 = vshrl.u32 %v1607, 7
    %v1609 = vsub.s32 %v1606, %v1608
    %v1610 = vrot.slane %v1582, %v1609
    %v1611 = vcombine.high %v1610, %v1610
    %v1612 = vcombine.low %v1594, %v1602
    %v1614 = vunpack.c.l.s4 1983009808
    %v1615 = vunpack.c.0.s8 %v1614
    %v1616 = vlaneseq
    %v1617 = vshrl.u32 %v1616, 7
    %v1618 = vsub.s32 %v1615, %v1617
    %v1619 = vrot.slane %v1612, %v1618
    %v1621 = vunpack.c.l.s4 1983009808
    %v1622 = vunpack.c.0.s8 %v1621
    %v1623 = vlaneseq
    %v1624 = vshrl.u32 %v1623, 7
    %v1625 = vsub.s32 %v1622, %v1624
    %v1626 = vrot.slane %v1601, %v1625
    %v1627 = vcombine.low %v1619, %v1626
    %v1628 = vcombine.low %v1603, %v1610
    %v1630 = vunpack.c.l.s4 1983009808
    %v1631 = vunpack.c.0.s8 %v1630
    %v1632 = vlaneseq
    %v1633 = vshrl.u32 %v1632, 7
    %v1634 = vsub.s32 %v1631, %v1633
    %v1635 = vrot.slane %v1628, %v1634
    %v1637 = vunpack.c.l.s4 1983009808
    %v1638 = vunpack.c.0.s8 %v1637
    %v1639 = vlaneseq
    %v1640 = vshrl.u32 %v1639, 7
    %v1641 = vsub.s32 %v1638, %v1640
    %v1642 = vrot.slane %v1611, %v1641
    %v1643 = vcombine.low %v1635, %v1642
    %vm1646 = vcmask 193536
    %1647 = vst.msk [vmem:[%s10] sm:$0x3f] %vm1646, %v1627
    %1648 = vst.msk [vmem:[%s10 + $0x8] sm:$0x3f] %vm1646, %v1643
    // Predicated region
    $region42: #{seq2seq_forward.3} parent=1 // pred_check
      _
    $region43: #{seq2seq_forward.3} parent=1 // pred_check_branch
      %1650 = sbr.rel (0) target = $region45
    $region44: #{seq2seq_forward.3} parent=1 // pred_region
      _
    $region45: #{seq2seq_forward.3} parent=1 // pred_fallthru
      _
    // Predicated region
    $region46: #{seq2seq_forward.3} parent=1 // pred_check
      _
    $region47: #{seq2seq_forward.3} parent=1 // pred_check_branch
      %1652 = sbr.rel (0) target = $region49
    $region48: #{seq2seq_forward.3} parent=1 // pred_region
      %s1654 = ssub.s32 32, 32
      %1655 = vsyncadd [#allocation4], %s1654
      %s1657 = sshll.u32 [#allocation3], 4
      %s1658 = int_to_ptr.vmem [resolvable:$true] %s1657
      %1660 = dma.vmem_to_hbm [thread:$0]  %s1658, 32, %s11, [#allocation4]
    $region49: #{seq2seq_forward.3} parent=1 // pred_fallthru
      _
    // Predicated region
    $region50: #{seq2seq_forward.3} parent=1 // pred_check
      _
    $region51: #{seq2seq_forward.3} parent=1 // pred_check_branch
      %1662 = sbr.rel (0) target = $region53
    $region52: #{seq2seq_forward.3} parent=1 // pred_region
      _
    $region53: #{seq2seq_forward.3} parent=1 // pred_fallthru
      _
    // Predicated region
    $region54: #{seq2seq_forward.3} parent=1 // pred_check
      _
    $region55: #{seq2seq_forward.3} parent=1 // pred_check_branch
      %1664 = sbr.rel (0) target = $region57
    $region56: #{seq2seq_forward.3} parent=1 // pred_region
      %1665 = dma.done [#allocation4], 32
    $region57: #{seq2seq_forward.3} parent=1 // pred_fallthru
      _
    %1666 = vsyncpa [#allocation4], 1

// kernel: seq2seq_forward.2
$region0: #{seq2seq_forward.2}
  #allocation0 [shape = 'u32[]', space=smem, size = 0x4, offset = 0x4, fixed_abs, tag = 'smem constant byte address 0x4 - core index']
  #allocation1 [shape = 'u32[144,128]{1,0:T(1,128)}', space=vmem, size = 0x12000, scoped, tag = 'internal scratch']
  %s0 = inlined_call_operand.vmem [shape: f32[8,2,192], index: 0, kind: input, shape index: {}]
  %s1 = inlined_call_operand.vmem [shape: f32[64,192], index: 1, kind: input, shape index: {}]
  %s2 = inlined_call_operand.vmem [shape: f32[1,192], index: 2, kind: input, shape index: {}]
  %s3 = inlined_call_operand.vmem [shape: f32[2,8,64], index: 3, kind: output, shape index: {0}]
  %s4 = inlined_call_operand.vmem [shape: f32[2,64], index: 4, kind: output, shape index: {1}]
  %5 = xla_tuple %s3, %s4
  %s6 = sld [smem:[#allocation0]]
  $region30: #{seq2seq_forward.2} parent=0
    _
  %s8 = ssub.s32 1, %s6
  %s9 = scalar_select 0, %s8, %s6
  // Predicated region
  $region2: #{seq2seq_forward.2} parent=0 // pred_check
    _
  $region3: #{seq2seq_forward.2} parent=0 // pred_check_branch
    %11 = sbr.rel (0) target = $region5
  $region4: #{seq2seq_forward.2} parent=0 // pred_region
    _
  $region5: #{seq2seq_forward.2} parent=0 // pred_fallthru
    _
  // Predicated region
  $region6: #{seq2seq_forward.2} parent=0 // pred_check
    _
  $region7: #{seq2seq_forward.2} parent=0 // pred_check_branch
    %13 = sbr.rel (0) target = $region9
  $region8: #{seq2seq_forward.2} parent=0 // pred_region
    _
  $region9: #{seq2seq_forward.2} parent=0 // pred_fallthru
    _
  // Predicated region
  $region10: #{seq2seq_forward.2} parent=0 // pred_check
    _
  $region11: #{seq2seq_forward.2} parent=0 // pred_check_branch
    %15 = sbr.rel (0) target = $region13
  $region12: #{seq2seq_forward.2} parent=0 // pred_region
    _
  $region13: #{seq2seq_forward.2} parent=0 // pred_fallthru
    _
  %v16 = vld [vmem:[%s1] sm:$0xff]
  %v17 = vld [vmem:[%s1 + $0x8] sm:$0xff]
  %v18 = vld [vmem:[%s1 + $0x10] sm:$0xff]
  %v19 = vld [vmem:[%s1 + $0x18] sm:$0xff]
  %v20 = vld [vmem:[%s1 + $0x20] sm:$0xff]
  %v21 = vld [vmem:[%s1 + $0x28] sm:$0xff]
  %v22 = vld [vmem:[%s1 + $0x30] sm:$0xff]
  %v23 = vld [vmem:[%s1 + $0x38] sm:$0xff]
  %v24 = vld [vmem:[%s1 + $0x40] sm:$0xff]
  %v25 = vld [vmem:[%s1 + $0x48] sm:$0xff]
  %v26 = vld [vmem:[%s1 + $0x50] sm:$0xff]
  %v27 = vld [vmem:[%s1 + $0x58] sm:$0xff]
  %v28 = vld [vmem:[%s1 + $0x60] sm:$0xff]
  %v29 = vld [vmem:[%s1 + $0x68] sm:$0xff]
  %v30 = vld [vmem:[%s1 + $0x70] sm:$0xff]
  %v31 = vld [vmem:[%s1 + $0x78] sm:$0xff]
  %v32 = vld [vmem:[%s2] sm:$0x3]
  %v34 = vlaneseq
  %v35 = vshrl.u32 %v34, 7
  %v36 = vsub.s32 0, %v35
  %v37 = vrot.slane %v32, %v36
  %v38 = vlaneseq
  %v39 = vshrl.u32 %v38, 7
  %v40 = vsub.s32 1, %v39
  %v41 = vrot.slane %v32, %v40
  %vm44 = vcmask 523264
  %v46 = vsel %vm44, 0.0, 0
  %48 = vmatprep.subr.mxu0 %v17
  %49 = vmatpush1.msra.mxu0 %v16
  %50 = vmatprep.subr.mxu0 %v19
  %51 = vmatpush1.msra.mxu0 %v18
  %52 = vmatprep.subr.mxu0 %v21
  %53 = vmatpush1.msra.mxu0 %v20
  %54 = vmatprep.subr.mxu0 %v23
  %55 = vmatpush1.msra.mxu0 %v22
  %56 = vmatprep.subr.mxu0 %v25
  %57 = vmatpush1.msra.mxu0 %v24
  %58 = vmatprep.subr.mxu0 %v27
  %59 = vmatpush1.msra.mxu0 %v26
  %60 = vmatprep.subr.mxu0 %v29
  %61 = vmatpush1.msra.mxu0 %v28
  %62 = vmatprep.subr.mxu0 %v31
  %63 = vmatpush1.msra.mxu0 %v30
  %64 = vmatprep.subr.mxu0 0.0
  %65 = vmatpush1.msra.mxu0 0.0
  %66 = vmatprep.subr.mxu0 0.0
  %67 = vmatpush1.msra.mxu0 0.0
  %68 = vmatprep.subr.mxu0 0.0
  %69 = vmatpush1.msra.mxu0 0.0
  %70 = vmatprep.subr.mxu0 0.0
  %71 = vmatpush1.msra.mxu0 0.0
  %72 = vmatprep.subr.mxu0 0.0
  %73 = vmatpush1.msra.mxu0 0.0
  %74 = vmatprep.subr.mxu0 0.0
  %75 = vmatpush1.msra.mxu0 0.0
  %76 = vmatprep.subr.mxu0 0.0
  %77 = vmatpush1.msra.mxu0 0.0
  %78 = vmatprep.subr.mxu0 0.0
  %79 = vmatpush1.msra.mxu0 0.0
  %80 = vmatprep.subr.mxu0 0.0
  %81 = vmatpush1.msra.mxu0 0.0
  %82 = vmatprep.subr.mxu0 0.0
  %83 = vmatpush1.msra.mxu0 0.0
  %84 = vmatprep.subr.mxu0 0.0
  %85 = vmatpush1.msra.mxu0 0.0
  %86 = vmatprep.subr.mxu0 0.0
  %87 = vmatpush1.msra.mxu0 0.0
  %88 = vmatprep.subr.mxu0 0.0
  %89 = vmatpush1.msra.mxu0 0.0
  %90 = vmatprep.subr.mxu0 0.0
  %91 = vmatpush1.msra.mxu0 0.0
  %92 = vmatprep.subr.mxu0 0.0
  %93 = vmatpush1.msra.mxu0 0.0
  %94 = vmatprep.subr.mxu0 0.0
  %95 = vmatpush1.msra.mxu0 0.0
  %96 = vmatprep.subr.mxu0 0.0
  %97 = vmatpush1.msra.mxu0 0.0
  %98 = vmatprep.subr.mxu0 0.0
  %99 = vmatpush1.msra.mxu0 0.0
  %100 = vmatprep.subr.mxu0 0.0
  %101 = vmatpush1.msra.mxu0 0.0
  %102 = vmatprep.subr.mxu0 0.0
  %103 = vmatpush1.msra.mxu0 0.0
  %104 = vmatprep.subr.mxu0 0.0
  %105 = vmatpush1.msra.mxu0 0.0
  %106 = vmatprep.subr.mxu0 0.0
  %107 = vmatpush1.msra.mxu0 0.0
  %108 = vmatprep.subr.mxu0 0.0
  %109 = vmatpush1.msra.mxu0 0.0
  %110 = vmatprep.subr.mxu0 0.0
  %111 = vmatpush1.msra.mxu0 0.0
  %112 = vmatprep.mubr.f32.mxu0 0.0
  %113 = vmatmul.mubr.f32.gmra.mrb[0].mxu0 %v46
  %v114 = vpop.f32.mrb[0].mxu0
  %v115 = vadd.f32 %v37, %v114
  %v116 = vpop.f32.mrb[0].mxu0
  %v117 = vadd.f32 %v41, %v116
  %118 = vdwg.mxu0
  %v119 = vld [vmem:[%s0] sm:$0xf]
  %s120 = scalar_lea.vmem %s0, 28
  %v121 = vld [vmem:[%s120] sm:$0xf]
  %v122 = vadd.f32 %v119, %v115
  %v123 = vxor.u32 %v122, 2147483648
  %v124 = vmul.f32 %v123, 1.442695
  %v125 = vpow.pop %v124
  %v126 = vadd.f32 %v125, 1.0
  %v127 = vrcp.pop %v126
  %v128 = vmul.f32 1.0, %v127
  %v131 = vunpack.c.l.s4 1983009808
  %v132 = vunpack.c.0.s8 %v131
  %v133 = vlaneseq
  %v134 = vshrl.u32 %v133, 7
  %v135 = vsub.s32 %v132, %v134
  %v136 = vrot.slane %v115, %v135
  %137 = vrot.lane.b32.xlu0 %v136, 64
  %v138 = vpop.permute.xlu0 %137
  %v140 = vmul.f32 %v128, %v138
  %142 = vrot.lane.b32.xlu0 %v140, 64
  %v143 = vpop.permute.xlu0 %142
  %v145 = vadd.f32 %v119, %v143
  %v146 = vtanh.pop %v145
  %v147 = vsub.f32 1.0, %v128
  %149 = vrot.lane.b32.xlu0 %v146, 96
  %v150 = vpop.permute.xlu0 %149
  %v152 = vmul.f32 %v147, %v150
  %v153 = vmul.f32 %v128, 0.0
  %v154 = vadd.f32 %v152, %v153
  %v155 = vadd.f32 %v121, %v115
  %v156 = vxor.u32 %v155, 2147483648
  %v157 = vmul.f32 %v156, 1.442695
  %v158 = vpow.pop %v157
  %v159 = vadd.f32 %v158, 1.0
  %v160 = vrcp.pop %v159
  %v161 = vmul.f32 1.0, %v160
  %v163 = vrot.slane %v121, 2
  %v165 = vadd.f32 %v163, %v117
  %v166 = vxor.u32 %v165, 2147483648
  %v167 = vmul.f32 %v166, 1.442695
  %v168 = vpow.pop %v167
  %v169 = vadd.f32 %v168, 1.0
  %v170 = vrcp.pop %v169
  %v171 = vmul.f32 1.0, %v170
  %v174 = vunpack.c.l.s4 1983009808
  %v175 = vunpack.c.0.s8 %v174
  %v176 = vlaneseq
  %v177 = vshrl.u32 %v176, 7
  %v178 = vsub.s32 %v175, %v177
  %v179 = vrot.slane %v117, %v178
  %180 = vrot.lane.b32.xlu0 %v179, 64
  %v181 = vpop.permute.xlu0 %180
  %v183 = vmul.f32 %v161, %v181
  %184 = vrot.lane.b32.xlu0 %v121, 96
  %v185 = vpop.permute.xlu0 %184
  %v186 = vrot.slane %v185, 2
  %189 = vrot.lane.b32.xlu0 %v183, 32
  %v190 = vpop.permute.xlu0 %189
  %v192 = vadd.f32 %v186, %v190
  %v193 = vtanh.pop %v192
  %v194 = vsub.f32 1.0, %v171
  %v195 = vmul.f32 %v194, %v193
  %v196 = vmul.f32 %v171, 0.0
  %v197 = vadd.f32 %v195, %v196
  %v200 = vunpack.c.l.s4 1983009808
  %v201 = vunpack.c.0.s8 %v200
  %v202 = vlaneseq
  %v203 = vshrl.u32 %v202, 7
  %v204 = vsub.s32 %v201, %v203
  %v205 = vrot.slane %v154, %v204
  %206 = vrot.lane.b32.xlu0 %v205, 96
  %v207 = vpop.permute.xlu0 %206
  %v211 = vunpack.c.l.s4 1983009808
  %v212 = vunpack.c.0.s8 %v211
  %v213 = vlaneseq
  %v214 = vshrl.u32 %v213, 7
  %v215 = vsub.s32 %v212, %v214
  %v216 = vrot.slane %v197, %v215
  %217 = vrot.lane.b32.xlu0 %v216, 32
  %v218 = vpop.permute.xlu0 %217
  %vm220 = vcmask 261120
  %v221 = vsel %vm220, %v207, %v218
  %v223 = vunpack.c.l.s4 1966171168
  %v224 = vunpack.c.0.s8 %v223
  %v225 = vlaneseq
  %v226 = vshrl.u32 %v225, 7
  %v227 = vsub.s32 %v224, %v226
  %v228 = vrot.slane %v154, %v227
  %v229 = vcombine.high %v228, %v228
  %v230 = vlaneseq
  %v231 = vshrl.u32 %v230, 7
  %v232 = vsub.s32 0, %v231
  %v233 = vrot.slane %v228, %v232
  %v234 = vlaneseq
  %v235 = vshrl.u32 %v234, 7
  %v236 = vsub.s32 0, %v235
  %v237 = vrot.slane %v229, %v236
  %238 = vrot.lane.b32.xlu0 %v233, 96
  %v239 = vpop.permute.xlu0 %238
  %240 = vrot.lane.b32.xlu0 %v237, 96
  %v241 = vpop.permute.xlu0 %240
  %vm244 = vcmask 253952
  %245 = vst.msk [vmem:[%s3] sm:$0x1] %vm244, %v239
  %246 = vst.msk [vmem:[%s3 + $0x8] sm:$0x1] %vm244, %v241
  %v248 = vunpack.c.l.s4 1966171168
  %v249 = vunpack.c.0.s8 %v248
  %v250 = vlaneseq
  %v251 = vshrl.u32 %v250, 7
  %v252 = vsub.s32 %v249, %v251
  %v253 = vrot.slane %v197, %v252
  %v254 = vcombine.high %v253, %v253
  %v255 = vlaneseq
  %v256 = vshrl.u32 %v255, 7
  %v257 = vsub.s32 0, %v256
  %v258 = vrot.slane %v253, %v257
  %v259 = vlaneseq
  %v260 = vshrl.u32 %v259, 7
  %v261 = vsub.s32 0, %v260
  %v262 = vrot.slane %v254, %v261
  %263 = vrot.lane.b32.xlu0 %v258, 32
  %v264 = vpop.permute.xlu0 %263
  %265 = vrot.lane.b32.xlu0 %v262, 32
  %v266 = vpop.permute.xlu0 %265
  %vm269 = vcmask 516352
  %270 = vst.msk [vmem:[%s3 + $0x7] sm:$0x1] %vm269, %v264
  %271 = vst.msk [vmem:[%s3 + $0xf] sm:$0x1] %vm269, %v266
  %v273 = vsel %vm44, %v221, 0
  %275 = vmatprep.subr.mxu0 %v17
  %276 = vmatpush1.msra.mxu0 %v16
  %277 = vmatprep.subr.mxu0 %v19
  %278 = vmatpush1.msra.mxu0 %v18
  %279 = vmatprep.subr.mxu0 %v21
  %280 = vmatpush1.msra.mxu0 %v20
  %281 = vmatprep.subr.mxu0 %v23
  %282 = vmatpush1.msra.mxu0 %v22
  %283 = vmatprep.subr.mxu0 %v25
  %284 = vmatpush1.msra.mxu0 %v24
  %285 = vmatprep.subr.mxu0 %v27
  %286 = vmatpush1.msra.mxu0 %v26
  %287 = vmatprep.subr.mxu0 %v29
  %288 = vmatpush1.msra.mxu0 %v28
  %289 = vmatprep.subr.mxu0 %v31
  %290 = vmatpush1.msra.mxu0 %v30
  %291 = vmatprep.subr.mxu0 0.0
  %292 = vmatpush1.msra.mxu0 0.0
  %293 = vmatprep.subr.mxu0 0.0
  %294 = vmatpush1.msra.mxu0 0.0
  %295 = vmatprep.subr.mxu0 0.0
  %296 = vmatpush1.msra.mxu0 0.0
  %297 = vmatprep.subr.mxu0 0.0
  %298 = vmatpush1.msra.mxu0 0.0
  %299 = vmatprep.subr.mxu0 0.0
  %300 = vmatpush1.msra.mxu0 0.0
  %301 = vmatprep.subr.mxu0 0.0
  %302 = vmatpush1.msra.mxu0 0.0
  %303 = vmatprep.subr.mxu0 0.0
  %304 = vmatpush1.msra.mxu0 0.0
  %305 = vmatprep.subr.mxu0 0.0
  %306 = vmatpush1.msra.mxu0 0.0
  %307 = vmatprep.subr.mxu0 0.0
  %308 = vmatpush1.msra.mxu0 0.0
  %309 = vmatprep.subr.mxu0 0.0
  %310 = vmatpush1.msra.mxu0 0.0
  %311 = vmatprep.subr.mxu0 0.0
  %312 = vmatpush1.msra.mxu0 0.0
  %313 = vmatprep.subr.mxu0 0.0
  %314 = vmatpush1.msra.mxu0 0.0
  %315 = vmatprep.subr.mxu0 0.0
  %316 = vmatpush1.msra.mxu0 0.0
  %317 = vmatprep.subr.mxu0 0.0
  %318 = vmatpush1.msra.mxu0 0.0
  %319 = vmatprep.subr.mxu0 0.0
  %320 = vmatpush1.msra.mxu0 0.0
  %321 = vmatprep.subr.mxu0 0.0
  %322 = vmatpush1.msra.mxu0 0.0
  %323 = vmatprep.subr.mxu0 0.0
  %324 = vmatpush1.msra.mxu0 0.0
  %325 = vmatprep.subr.mxu0 0.0
  %326 = vmatpush1.msra.mxu0 0.0
  %327 = vmatprep.subr.mxu0 0.0
  %328 = vmatpush1.msra.mxu0 0.0
  %329 = vmatprep.subr.mxu0 0.0
  %330 = vmatpush1.msra.mxu0 0.0
  %331 = vmatprep.subr.mxu0 0.0
  %332 = vmatpush1.msra.mxu0 0.0
  %333 = vmatprep.subr.mxu0 0.0
  %334 = vmatpush1.msra.mxu0 0.0
  %335 = vmatprep.subr.mxu0 0.0
  %336 = vmatpush1.msra.mxu0 0.0
  %337 = vmatprep.subr.mxu0 0.0
  %338 = vmatpush1.msra.mxu0 0.0
  %339 = vmatprep.mubr.f32.mxu0 0.0
  %340 = vmatmul.mubr.f32.gmra.mrb[0].mxu0 %v273
  %v341 = vpop.f32.mrb[0].mxu0
  %v342 = vadd.f32 %v37, %v341
  %v343 = vpop.f32.mrb[0].mxu0
  %v344 = vadd.f32 %v41, %v343
  %345 = vdwg.mxu0
  %s346 = scalar_lea.vmem %s0, 4
  %v347 = vld [vmem:[%s346] sm:$0xf]
  %s348 = scalar_lea.vmem %s0, 24
  %v349 = vld [vmem:[%s348] sm:$0xf]
  %v350 = vadd.f32 %v347, %v342
  %v351 = vxor.u32 %v350, 2147483648
  %v352 = vmul.f32 %v351, 1.442695
  %v353 = vpow.pop %v352
  %v354 = vadd.f32 %v353, 1.0
  %v355 = vrcp.pop %v354
  %v356 = vmul.f32 1.0, %v355
  %v359 = vunpack.c.l.s4 1983009808
  %v360 = vunpack.c.0.s8 %v359
  %v361 = vlaneseq
  %v362 = vshrl.u32 %v361, 7
  %v363 = vsub.s32 %v360, %v362
  %v364 = vrot.slane %v342, %v363
  %365 = vrot.lane.b32.xlu0 %v364, 64
  %v366 = vpop.permute.xlu0 %365
  %v368 = vmul.f32 %v356, %v366
  %370 = vrot.lane.b32.xlu0 %v368, 64
  %v371 = vpop.permute.xlu0 %370
  %v373 = vadd.f32 %v347, %v371
  %v374 = vtanh.pop %v373
  %v375 = vsub.f32 1.0, %v356
  %377 = vrot.lane.b32.xlu0 %v374, 96
  %v378 = vpop.permute.xlu0 %377
  %v380 = vmul.f32 %v375, %v378
  %v382 = vunpack.c.l.s4 1983009808
  %v383 = vunpack.c.0.s8 %v382
  %v384 = vlaneseq
  %v385 = vshrl.u32 %v384, 7
  %v386 = vsub.s32 %v383, %v385
  %v387 = vrot.slane %v221, %v386
  %388 = vrot.lane.b32.xlu0 %v387, 32
  %v389 = vpop.permute.xlu0 %388
  %v391 = vmul.f32 %v356, %v389
  %v392 = vadd.f32 %v380, %v391
  %v393 = vadd.f32 %v349, %v342
  %v394 = vxor.u32 %v393, 2147483648
  %v395 = vmul.f32 %v394, 1.442695
  %v396 = vpow.pop %v395
  %v397 = vadd.f32 %v396, 1.0
  %v398 = vrcp.pop %v397
  %v399 = vmul.f32 1.0, %v398
  %v401 = vrot.slane %v349, 2
  %v403 = vadd.f32 %v401, %v344
  %v404 = vxor.u32 %v403, 2147483648
  %v405 = vmul.f32 %v404, 1.442695
  %v406 = vpow.pop %v405
  %v407 = vadd.f32 %v406, 1.0
  %v408 = vrcp.pop %v407
  %v409 = vmul.f32 1.0, %v408
  %v412 = vunpack.c.l.s4 1983009808
  %v413 = vunpack.c.0.s8 %v412
  %v414 = vlaneseq
  %v415 = vshrl.u32 %v414, 7
  %v416 = vsub.s32 %v413, %v415
  %v417 = vrot.slane %v344, %v416
  %418 = vrot.lane.b32.xlu0 %v417, 64
  %v419 = vpop.permute.xlu0 %418
  %v421 = vmul.f32 %v399, %v419
  %422 = vrot.lane.b32.xlu0 %v349, 96
  %v423 = vpop.permute.xlu0 %422
  %v424 = vrot.slane %v423, 2
  %427 = vrot.lane.b32.xlu0 %v421, 32
  %v428 = vpop.permute.xlu0 %427
  %v430 = vadd.f32 %v424, %v428
  %v431 = vtanh.pop %v430
  %v432 = vsub.f32 1.0, %v409
  %v433 = vmul.f32 %v432, %v431
  %434 = vrot.lane.b32.xlu0 %v387, 96
  %v435 = vpop.permute.xlu0 %434
  %v437 = vmul.f32 %v409, %v435
  %v438 = vadd.f32 %v433, %v437
  %v441 = vunpack.c.l.s4 1983009808
  %v442 = vunpack.c.0.s8 %v441
  %v443 = vlaneseq
  %v444 = vshrl.u32 %v443, 7
  %v445 = vsub.s32 %v442, %v444
  %v446 = vrot.slane %v392, %v445
  %447 = vrot.lane.b32.xlu0 %v446, 96
  %v448 = vpop.permute.xlu0 %447
  %v452 = vunpack.c.l.s4 1983009808
  %v453 = vunpack.c.0.s8 %v452
  %v454 = vlaneseq
  %v455 = vshrl.u32 %v454, 7
  %v456 = vsub.s32 %v453, %v455
  %v457 = vrot.slane %v438, %v456
  %458 = vrot.lane.b32.xlu0 %v457, 32
  %v459 = vpop.permute.xlu0 %458
  %v461 = vsel %vm220, %v448, %v459
  %v463 = vunpack.c.l.s4 1966171168
  %v464 = vunpack.c.0.s8 %v463
  %v465 = vlaneseq
  %v466 = vshrl.u32 %v465, 7
  %v467 = vsub.s32 %v464, %v466
  %v468 = vrot.slane %v392, %v467
  %v469 = vcombine.high %v468, %v468
  %v470 = vlaneseq
  %v471 = vshrl.u32 %v470, 7
  %v472 = vsub.s32 0, %v471
  %v473 = vrot.slane %v468, %v472
  %v474 = vlaneseq
  %v475 = vshrl.u32 %v474, 7
  %v476 = vsub.s32 0, %v475
  %v477 = vrot.slane %v469, %v476
  %478 = vrot.lane.b32.xlu0 %v473, 96
  %v479 = vpop.permute.xlu0 %478
  %480 = vrot.lane.b32.xlu0 %v477, 96
  %v481 = vpop.permute.xlu0 %480
  %484 = vst.msk [vmem:[%s3 + $0x1] sm:$0x1] %vm244, %v479
  %485 = vst.msk [vmem:[%s3 + $0x9] sm:$0x1] %vm244, %v481
  %v487 = vunpack.c.l.s4 1966171168
  %v488 = vunpack.c.0.s8 %v487
  %v489 = vlaneseq
  %v490 = vshrl.u32 %v489, 7
  %v491 = vsub.s32 %v488, %v490
  %v492 = vrot.slane %v438, %v491
  %v493 = vcombine.high %v492, %v492
  %v494 = vlaneseq
  %v495 = vshrl.u32 %v494, 7
  %v496 = vsub.s32 0, %v495
  %v497 = vrot.slane %v492, %v496
  %v498 = vlaneseq
  %v499 = vshrl.u32 %v498, 7
  %v500 = vsub.s32 0, %v499
  %v501 = vrot.slane %v493, %v500
  %502 = vrot.lane.b32.xlu0 %v497, 32
  %v503 = vpop.permute.xlu0 %502
  %504 = vrot.lane.b32.xlu0 %v501, 32
  %v505 = vpop.permute.xlu0 %504
  %508 = vst.msk [vmem:[%s3 + $0x6] sm:$0x1] %vm269, %v503
  %509 = vst.msk [vmem:[%s3 + $0xe] sm:$0x1] %vm269, %v505
  %v511 = vsel %vm44, %v461, 0
  %513 = vmatprep.subr.mxu0 %v17
  %514 = vmatpush1.msra.mxu0 %v16
  %515 = vmatprep.subr.mxu0 %v19
  %516 = vmatpush1.msra.mxu0 %v18
  %517 = vmatprep.subr.mxu0 %v21
  %518 = vmatpush1.msra.mxu0 %v20
  %519 = vmatprep.subr.mxu0 %v23
  %520 = vmatpush1.msra.mxu0 %v22
  %521 = vmatprep.subr.mxu0 %v25
  %522 = vmatpush1.msra.mxu0 %v24
  %523 = vmatprep.subr.mxu0 %v27
  %524 = vmatpush1.msra.mxu0 %v26
  %525 = vmatprep.subr.mxu0 %v29
  %526 = vmatpush1.msra.mxu0 %v28
  %527 = vmatprep.subr.mxu0 %v31
  %528 = vmatpush1.msra.mxu0 %v30
  %529 = vmatprep.subr.mxu0 0.0
  %530 = vmatpush1.msra.mxu0 0.0
  %531 = vmatprep.subr.mxu0 0.0
  %532 = vmatpush1.msra.mxu0 0.0
  %533 = vmatprep.subr.mxu0 0.0
  %534 = vmatpush1.msra.mxu0 0.0
  %535 = vmatprep.subr.mxu0 0.0
  %536 = vmatpush1.msra.mxu0 0.0
  %537 = vmatprep.subr.mxu0 0.0
  %538 = vmatpush1.msra.mxu0 0.0
  %539 = vmatprep.subr.mxu0 0.0
  %540 = vmatpush1.msra.mxu0 0.0
  %541 = vmatprep.subr.mxu0 0.0
  %542 = vmatpush1.msra.mxu0 0.0
  %543 = vmatprep.subr.mxu0 0.0
  %544 = vmatpush1.msra.mxu0 0.0
  %545 = vmatprep.subr.mxu0 0.0
  %546 = vmatpush1.msra.mxu0 0.0
  %547 = vmatprep.subr.mxu0 0.0
  %548 = vmatpush1.msra.mxu0 0.0
  %549 = vmatprep.subr.mxu0 0.0
  %550 = vmatpush1.msra.mxu0 0.0
  %551 = vmatprep.subr.mxu0 0.0
  %552 = vmatpush1.msra.mxu0 0.0
  %553 = vmatprep.subr.mxu0 0.0
  %554 = vmatpush1.msra.mxu0 0.0
  %555 = vmatprep.subr.mxu0 0.0
  %556 = vmatpush1.msra.mxu0 0.0
  %557 = vmatprep.subr.mxu0 0.0
  %558 = vmatpush1.msra.mxu0 0.0
  %559 = vmatprep.subr.mxu0 0.0
  %560 = vmatpush1.msra.mxu0 0.0
  %561 = vmatprep.subr.mxu0 0.0
  %562 = vmatpush1.msra.mxu0 0.0
  %563 = vmatprep.subr.mxu0 0.0
  %564 = vmatpush1.msra.mxu0 0.0
  %565 = vmatprep.subr.mxu0 0.0
  %566 = vmatpush1.msra.mxu0 0.0
  %567 = vmatprep.subr.mxu0 0.0
  %568 = vmatpush1.msra.mxu0 0.0
  %569 = vmatprep.subr.mxu0 0.0
  %570 = vmatpush1.msra.mxu0 0.0
  %571 = vmatprep.subr.mxu0 0.0
  %572 = vmatpush1.msra.mxu0 0.0
  %573 = vmatprep.subr.mxu0 0.0
  %574 = vmatpush1.msra.mxu0 0.0
  %575 = vmatprep.subr.mxu0 0.0
  %576 = vmatpush1.msra.mxu0 0.0
  %577 = vmatprep.mubr.f32.mxu0 0.0
  %578 = vmatmul.mubr.f32.gmra.mrb[0].mxu0 %v511
  %v579 = vpop.f32.mrb[0].mxu0
  %v580 = vadd.f32 %v37, %v579
  %v581 = vpop.f32.mrb[0].mxu0
  %v582 = vadd.f32 %v41, %v581
  %583 = vdwg.mxu0
  %s584 = scalar_lea.vmem %s0, 8
  %v585 = vld [vmem:[%s584] sm:$0xf]
  %s586 = scalar_lea.vmem %s0, 20
  %v587 = vld [vmem:[%s586] sm:$0xf]
  %v588 = vadd.f32 %v585, %v580
  %v589 = vxor.u32 %v588, 2147483648
  %v590 = vmul.f32 %v589, 1.442695
  %v591 = vpow.pop %v590
  %v592 = vadd.f32 %v591, 1.0
  %v593 = vrcp.pop %v592
  %v594 = vmul.f32 1.0, %v593
  %v597 = vunpack.c.l.s4 1983009808
  %v598 = vunpack.c.0.s8 %v597
  %v599 = vlaneseq
  %v600 = vshrl.u32 %v599, 7
  %v601 = vsub.s32 %v598, %v600
  %v602 = vrot.slane %v580, %v601
  %603 = vrot.lane.b32.xlu0 %v602, 64
  %v604 = vpop.permute.xlu0 %603
  %v606 = vmul.f32 %v594, %v604
  %608 = vrot.lane.b32.xlu0 %v606, 64
  %v609 = vpop.permute.xlu0 %608
  %v611 = vadd.f32 %v585, %v609
  %v612 = vtanh.pop %v611
  %v613 = vsub.f32 1.0, %v594
  %615 = vrot.lane.b32.xlu0 %v612, 96
  %v616 = vpop.permute.xlu0 %615
  %v618 = vmul.f32 %v613, %v616
  %v620 = vunpack.c.l.s4 1983009808
  %v621 = vunpack.c.0.s8 %v620
  %v622 = vlaneseq
  %v623 = vshrl.u32 %v622, 7
  %v624 = vsub.s32 %v621, %v623
  %v625 = vrot.slane %v461, %v624
  %626 = vrot.lane.b32.xlu0 %v625, 32
  %v627 = vpop.permute.xlu0 %626
  %v629 = vmul.f32 %v594, %v627
  %v630 = vadd.f32 %v618, %v629
  %v631 = vadd.f32 %v587, %v580
  %v632 = vxor.u32 %v631, 2147483648
  %v633 = vmul.f32 %v632, 1.442695
  %v634 = vpow.pop %v633
  %v635 = vadd.f32 %v634, 1.0
  %v636 = vrcp.pop %v635
  %v637 = vmul.f32 1.0, %v636
  %v639 = vrot.slane %v587, 2
  %v641 = vadd.f32 %v639, %v582
  %v642 = vxor.u32 %v641, 2147483648
  %v643 = vmul.f32 %v642, 1.442695
  %v644 = vpow.pop %v643
  %v645 = vadd.f32 %v644, 1.0
  %v646 = vrcp.pop %v645
  %v647 = vmul.f32 1.0, %v646
  %v650 = vunpack.c.l.s4 1983009808
  %v651 = vunpack.c.0.s8 %v650
  %v652 = vlaneseq
  %v653 = vshrl.u32 %v652, 7
  %v654 = vsub.s32 %v651, %v653
  %v655 = vrot.slane %v582, %v654
  %656 = vrot.lane.b32.xlu0 %v655, 64
  %v657 = vpop.permute.xlu0 %656
  %v659 = vmul.f32 %v637, %v657
  %660 = vrot.lane.b32.xlu0 %v587, 96
  %v661 = vpop.permute.xlu0 %660
  %v662 = vrot.slane %v661, 2
  %665 = vrot.lane.b32.xlu0 %v659, 32
  %v666 = vpop.permute.xlu0 %665
  %v668 = vadd.f32 %v662, %v666
  %v669 = vtanh.pop %v668
  %v670 = vsub.f32 1.0, %v647
  %v671 = vmul.f32 %v670, %v669
  %672 = vrot.lane.b32.xlu0 %v625, 96
  %v673 = vpop.permute.xlu0 %672
  %v675 = vmul.f32 %v647, %v673
  %v676 = vadd.f32 %v671, %v675
  %v679 = vunpack.c.l.s4 1983009808
  %v680 = vunpack.c.0.s8 %v679
  %v681 = vlaneseq
  %v682 = vshrl.u32 %v681, 7
  %v683 = vsub.s32 %v680, %v682
  %v684 = vrot.slane %v630, %v683
  %685 = vrot.lane.b32.xlu0 %v684, 96
  %v686 = vpop.permute.xlu0 %685
  %v690 = vunpack.c.l.s4 1983009808
  %v691 = vunpack.c.0.s8 %v690
  %v692 = vlaneseq
  %v693 = vshrl.u32 %v692, 7
  %v694 = vsub.s32 %v691, %v693
  %v695 = vrot.slane %v676, %v694
  %696 = vrot.lane.b32.xlu0 %v695, 32
  %v697 = vpop.permute.xlu0 %696
  %v699 = vsel %vm220, %v686, %v697
  %v701 = vunpack.c.l.s4 1966171168
  %v702 = vunpack.c.0.s8 %v701
  %v703 = vlaneseq
  %v704 = vshrl.u32 %v703, 7
  %v705 = vsub.s32 %v702, %v704
  %v706 = vrot.slane %v630, %v705
  %v707 = vcombine.high %v706, %v706
  %v708 = vlaneseq
  %v709 = vshrl.u32 %v708, 7
  %v710 = vsub.s32 0, %v709
  %v711 = vrot.slane %v706, %v710
  %v712 = vlaneseq
  %v713 = vshrl.u32 %v712, 7
  %v714 = vsub.s32 0, %v713
  %v715 = vrot.slane %v707, %v714
  %716 = vrot.lane.b32.xlu0 %v711, 96
  %v717 = vpop.permute.xlu0 %716
  %718 = vrot.lane.b32.xlu0 %v715, 96
  %v719 = vpop.permute.xlu0 %718
  %722 = vst.msk [vmem:[%s3 + $0x2] sm:$0x1] %vm244, %v717
  %723 = vst.msk [vmem:[%s3 + $0xa] sm:$0x1] %vm244, %v719
  %v725 = vunpack.c.l.s4 1966171168
  %v726 = vunpack.c.0.s8 %v725
  %v727 = vlaneseq
  %v728 = vshrl.u32 %v727, 7
  %v729 = vsub.s32 %v726, %v728
  %v730 = vrot.slane %v676, %v729
  %v731 = vcombine.high %v730, %v730
  %v732 = vlaneseq
  %v733 = vshrl.u32 %v732, 7
  %v734 = vsub.s32 0, %v733
  %v735 = vrot.slane %v730, %v734
  %v736 = vlaneseq
  %v737 = vshrl.u32 %v736, 7
  %v738 = vsub.s32 0, %v737
  %v739 = vrot.slane %v731, %v738
  %740 = vrot.lane.b32.xlu0 %v735, 32
  %v741 = vpop.permute.xlu0 %740
  %742 = vrot.lane.b32.xlu0 %v739, 32
  %v743 = vpop.permute.xlu0 %742
  %746 = vst.msk [vmem:[%s3 + $0x5] sm:$0x1] %vm269, %v741
  %747 = vst.msk [vmem:[%s3 + $0xd] sm:$0x1] %vm269, %v743
  %v749 = vsel %vm44, %v699, 0
  %751 = vmatprep.subr.mxu0 %v17
  %752 = vmatpush1.msra.mxu0 %v16
  %753 = vmatprep.subr.mxu0 %v19
  %754 = vmatpush1.msra.mxu0 %v18
  %755 = vmatprep.subr.mxu0 %v21
  %756 = vmatpush1.msra.mxu0 %v20
  %757 = vmatprep.subr.mxu0 %v23
  %758 = vmatpush1.msra.mxu0 %v22
  %759 = vmatprep.subr.mxu0 %v25
  %760 = vmatpush1.msra.mxu0 %v24
  %761 = vmatprep.subr.mxu0 %v27
  %762 = vmatpush1.msra.mxu0 %v26
  %763 = vmatprep.subr.mxu0 %v29
  %764 = vmatpush1.msra.mxu0 %v28
  %765 = vmatprep.subr.mxu0 %v31
  %766 = vmatpush1.msra.mxu0 %v30
  %767 = vmatprep.subr.mxu0 0.0
  %768 = vmatpush1.msra.mxu0 0.0
  %769 = vmatprep.subr.mxu0 0.0
  %770 = vmatpush1.msra.mxu0 0.0
  %771 = vmatprep.subr.mxu0 0.0
  %772 = vmatpush1.msra.mxu0 0.0
  %773 = vmatprep.subr.mxu0 0.0
  %774 = vmatpush1.msra.mxu0 0.0
  %775 = vmatprep.subr.mxu0 0.0
  %776 = vmatpush1.msra.mxu0 0.0
  %777 = vmatprep.subr.mxu0 0.0
  %778 = vmatpush1.msra.mxu0 0.0
  %779 = vmatprep.subr.mxu0 0.0
  %780 = vmatpush1.msra.mxu0 0.0
  %781 = vmatprep.subr.mxu0 0.0
  %782 = vmatpush1.msra.mxu0 0.0
  %783 = vmatprep.subr.mxu0 0.0
  %784 = vmatpush1.msra.mxu0 0.0
  %785 = vmatprep.subr.mxu0 0.0
  %786 = vmatpush1.msra.mxu0 0.0
  %787 = vmatprep.subr.mxu0 0.0
  %788 = vmatpush1.msra.mxu0 0.0
  %789 = vmatprep.subr.mxu0 0.0
  %790 = vmatpush1.msra.mxu0 0.0
  %791 = vmatprep.subr.mxu0 0.0
  %792 = vmatpush1.msra.mxu0 0.0
  %793 = vmatprep.subr.mxu0 0.0
  %794 = vmatpush1.msra.mxu0 0.0
  %795 = vmatprep.subr.mxu0 0.0
  %796 = vmatpush1.msra.mxu0 0.0
  %797 = vmatprep.subr.mxu0 0.0
  %798 = vmatpush1.msra.mxu0 0.0
  %799 = vmatprep.subr.mxu0 0.0
  %800 = vmatpush1.msra.mxu0 0.0
  %801 = vmatprep.subr.mxu0 0.0
  %802 = vmatpush1.msra.mxu0 0.0
  %803 = vmatprep.subr.mxu0 0.0
  %804 = vmatpush1.msra.mxu0 0.0
  %805 = vmatprep.subr.mxu0 0.0
  %806 = vmatpush1.msra.mxu0 0.0
  %807 = vmatprep.subr.mxu0 0.0
  %808 = vmatpush1.msra.mxu0 0.0
  %809 = vmatprep.subr.mxu0 0.0
  %810 = vmatpush1.msra.mxu0 0.0
  %811 = vmatprep.subr.mxu0 0.0
  %812 = vmatpush1.msra.mxu0 0.0
  %813 = vmatprep.subr.mxu0 0.0
  %814 = vmatpush1.msra.mxu0 0.0
  %815 = vmatprep.mubr.f32.mxu0 0.0
  %816 = vmatmul.mubr.f32.gmra.mrb[0].mxu0 %v749
  %v817 = vpop.f32.mrb[0].mxu0
  %v818 = vadd.f32 %v37, %v817
  %v819 = vpop.f32.mrb[0].mxu0
  %v820 = vadd.f32 %v41, %v819
  %821 = vdwg.mxu0
  %s822 = scalar_lea.vmem %s0, 12
  %v823 = vld [vmem:[%s822] sm:$0xf]
  %s824 = scalar_lea.vmem %s0, 16
  %v825 = vld [vmem:[%s824] sm:$0xf]
  %v826 = vadd.f32 %v823, %v818
  %v827 = vxor.u32 %v826, 2147483648
  %v828 = vmul.f32 %v827, 1.442695
  %v829 = vpow.pop %v828
  %v830 = vadd.f32 %v829, 1.0
  %v831 = vrcp.pop %v830
  %v832 = vmul.f32 1.0, %v831
  %v835 = vunpack.c.l.s4 1983009808
  %v836 = vunpack.c.0.s8 %v835
  %v837 = vlaneseq
  %v838 = vshrl.u32 %v837, 7
  %v839 = vsub.s32 %v836, %v838
  %v840 = vrot.slane %v818, %v839
  %841 = vrot.lane.b32.xlu0 %v840, 64
  %v842 = vpop.permute.xlu0 %841
  %v844 = vmul.f32 %v832, %v842
  %846 = vrot.lane.b32.xlu0 %v844, 64
  %v847 = vpop.permute.xlu0 %846
  %v849 = vadd.f32 %v823, %v847
  %v850 = vtanh.pop %v849
  %v851 = vsub.f32 1.0, %v832
  %853 = vrot.lane.b32.xlu0 %v850, 96
  %v854 = vpop.permute.xlu0 %853
  %v856 = vmul.f32 %v851, %v854
  %v858 = vunpack.c.l.s4 1983009808
  %v859 = vunpack.c.0.s8 %v858
  %v860 = vlaneseq
  %v861 = vshrl.u32 %v860, 7
  %v862 = vsub.s32 %v859, %v861
  %v863 = vrot.slane %v699, %v862
  %864 = vrot.lane.b32.xlu0 %v863, 32
  %v865 = vpop.permute.xlu0 %864
  %v867 = vmul.f32 %v832, %v865
  %v868 = vadd.f32 %v856, %v867
  %v869 = vadd.f32 %v825, %v818
  %v870 = vxor.u32 %v869, 2147483648
  %v871 = vmul.f32 %v870, 1.442695
  %v872 = vpow.pop %v871
  %v873 = vadd.f32 %v872, 1.0
  %v874 = vrcp.pop %v873
  %v875 = vmul.f32 1.0, %v874
  %v877 = vrot.slane %v825, 2
  %v879 = vadd.f32 %v877, %v820
  %v880 = vxor.u32 %v879, 2147483648
  %v881 = vmul.f32 %v880, 1.442695
  %v882 = vpow.pop %v881
  %v883 = vadd.f32 %v882, 1.0
  %v884 = vrcp.pop %v883
  %v885 = vmul.f32 1.0, %v884
  %v888 = vunpack.c.l.s4 1983009808
  %v889 = vunpack.c.0.s8 %v888
  %v890 = vlaneseq
  %v891 = vshrl.u32 %v890, 7
  %v892 = vsub.s32 %v889, %v891
  %v893 = vrot.slane %v820, %v892
  %894 = vrot.lane.b32.xlu0 %v893, 64
  %v895 = vpop.permute.xlu0 %894
  %v897 = vmul.f32 %v875, %v895
  %898 = vrot.lane.b32.xlu0 %v825, 96
  %v899 = vpop.permute.xlu0 %898
  %v900 = vrot.slane %v899, 2
  %903 = vrot.lane.b32.xlu0 %v897, 32
  %v904 = vpop.permute.xlu0 %903
  %v906 = vadd.f32 %v900, %v904
  %v907 = vtanh.pop %v906
  %v908 = vsub.f32 1.0, %v885
  %v909 = vmul.f32 %v908, %v907
  %910 = vrot.lane.b32.xlu0 %v863, 96
  %v911 = vpop.permute.xlu0 %910
  %v913 = vmul.f32 %v885, %v911
  %v914 = vadd.f32 %v909, %v913
  %v917 = vunpack.c.l.s4 1983009808
  %v918 = vunpack.c.0.s8 %v917
  %v919 = vlaneseq
  %v920 = vshrl.u32 %v919, 7
  %v921 = vsub.s32 %v918, %v920
  %v922 = vrot.slane %v868, %v921
  %923 = vrot.lane.b32.xlu0 %v922, 96
  %v924 = vpop.permute.xlu0 %923
  %v928 = vunpack.c.l.s4 1983009808
  %v929 = vunpack.c.0.s8 %v928
  %v930 = vlaneseq
  %v931 = vshrl.u32 %v930, 7
  %v932 = vsub.s32 %v929, %v931
  %v933 = vrot.slane %v914, %v932
  %934 = vrot.lane.b32.xlu0 %v933, 32
  %v935 = vpop.permute.xlu0 %934
  %v937 = vsel %vm220, %v924, %v935
  %v939 = vunpack.c.l.s4 1966171168
  %v940 = vunpack.c.0.s8 %v939
  %v941 = vlaneseq
  %v942 = vshrl.u32 %v941, 7
  %v943 = vsub.s32 %v940, %v942
  %v944 = vrot.slane %v868, %v943
  %v945 = vcombine.high %v944, %v944
  %v946 = vlaneseq
  %v947 = vshrl.u32 %v946, 7
  %v948 = vsub.s32 0, %v947
  %v949 = vrot.slane %v944, %v948
  %v950 = vlaneseq
  %v951 = vshrl.u32 %v950, 7
  %v952 = vsub.s32 0, %v951
  %v953 = vrot.slane %v945, %v952
  %954 = vrot.lane.b32.xlu0 %v949, 96
  %v955 = vpop.permute.xlu0 %954
  %956 = vrot.lane.b32.xlu0 %v953, 96
  %v957 = vpop.permute.xlu0 %956
  %960 = vst.msk [vmem:[%s3 + $0x3] sm:$0x1] %vm244, %v955
  %961 = vst.msk [vmem:[%s3 + $0xb] sm:$0x1] %vm244, %v957
  %v963 = vunpack.c.l.s4 1966171168
  %v964 = vunpack.c.0.s8 %v963
  %v965 = vlaneseq
  %v966 = vshrl.u32 %v965, 7
  %v967 = vsub.s32 %v964, %v966
  %v968 = vrot.slane %v914, %v967
  %v969 = vcombine.high %v968, %v968
  %v970 = vlaneseq
  %v971 = vshrl.u32 %v970, 7
  %v972 = vsub.s32 0, %v971
  %v973 = vrot.slane %v968, %v972
  %v974 = vlaneseq
  %v975 = vshrl.u32 %v974, 7
  %v976 = vsub.s32 0, %v975
  %v977 = vrot.slane %v969, %v976
  %978 = vrot.lane.b32.xlu0 %v973, 32
  %v979 = vpop.permute.xlu0 %978
  %980 = vrot.lane.b32.xlu0 %v977, 32
  %v981 = vpop.permute.xlu0 %980
  %984 = vst.msk [vmem:[%s3 + $0x4] sm:$0x1] %vm269, %v979
  %985 = vst.msk [vmem:[%s3 + $0xc] sm:$0x1] %vm269, %v981
  %v987 = vsel %vm44, %v937, 0
  %989 = vmatprep.subr.mxu0 %v17
  %990 = vmatpush1.msra.mxu0 %v16
  %991 = vmatprep.subr.mxu0 %v19
  %992 = vmatpush1.msra.mxu0 %v18
  %993 = vmatprep.subr.mxu0 %v21
  %994 = vmatpush1.msra.mxu0 %v20
  %995 = vmatprep.subr.mxu0 %v23
  %996 = vmatpush1.msra.mxu0 %v22
  %997 = vmatprep.subr.mxu0 %v25
  %998 = vmatpush1.msra.mxu0 %v24
  %999 = vmatprep.subr.mxu0 %v27
  %1000 = vmatpush1.msra.mxu0 %v26
  %1001 = vmatprep.subr.mxu0 %v29
  %1002 = vmatpush1.msra.mxu0 %v28
  %1003 = vmatprep.subr.mxu0 %v31
  %1004 = vmatpush1.msra.mxu0 %v30
  %1005 = vmatprep.subr.mxu0 0.0
  %1006 = vmatpush1.msra.mxu0 0.0
  %1007 = vmatprep.subr.mxu0 0.0
  %1008 = vmatpush1.msra.mxu0 0.0
  %1009 = vmatprep.subr.mxu0 0.0
  %1010 = vmatpush1.msra.mxu0 0.0
  %1011 = vmatprep.subr.mxu0 0.0
  %1012 = vmatpush1.msra.mxu0 0.0
  %1013 = vmatprep.subr.mxu0 0.0
  %1014 = vmatpush1.msra.mxu0 0.0
  %1015 = vmatprep.subr.mxu0 0.0
  %1016 = vmatpush1.msra.mxu0 0.0
  %1017 = vmatprep.subr.mxu0 0.0
  %1018 = vmatpush1.msra.mxu0 0.0
  %1019 = vmatprep.subr.mxu0 0.0
  %1020 = vmatpush1.msra.mxu0 0.0
  %1021 = vmatprep.subr.mxu0 0.0
  %1022 = vmatpush1.msra.mxu0 0.0
  %1023 = vmatprep.subr.mxu0 0.0
  %1024 = vmatpush1.msra.mxu0 0.0
  %1025 = vmatprep.subr.mxu0 0.0
  %1026 = vmatpush1.msra.mxu0 0.0
  %1027 = vmatprep.subr.mxu0 0.0
  %1028 = vmatpush1.msra.mxu0 0.0
  %1029 = vmatprep.subr.mxu0 0.0
  %1030 = vmatpush1.msra.mxu0 0.0
  %1031 = vmatprep.subr.mxu0 0.0
  %1032 = vmatpush1.msra.mxu0 0.0
  %1033 = vmatprep.subr.mxu0 0.0
  %1034 = vmatpush1.msra.mxu0 0.0
  %1035 = vmatprep.subr.mxu0 0.0
  %1036 = vmatpush1.msra.mxu0 0.0
  %1037 = vmatprep.subr.mxu0 0.0
  %1038 = vmatpush1.msra.mxu0 0.0
  %1039 = vmatprep.subr.mxu0 0.0
  %1040 = vmatpush1.msra.mxu0 0.0
  %1041 = vmatprep.subr.mxu0 0.0
  %1042 = vmatpush1.msra.mxu0 0.0
  %1043 = vmatprep.subr.mxu0 0.0
  %1044 = vmatpush1.msra.mxu0 0.0
  %1045 = vmatprep.subr.mxu0 0.0
  %1046 = vmatpush1.msra.mxu0 0.0
  %1047 = vmatprep.subr.mxu0 0.0
  %1048 = vmatpush1.msra.mxu0 0.0
  %1049 = vmatprep.subr.mxu0 0.0
  %1050 = vmatpush1.msra.mxu0 0.0
  %1051 = vmatprep.subr.mxu0 0.0
  %1052 = vmatpush1.msra.mxu0 0.0
  %1053 = vmatprep.mubr.f32.mxu0 0.0
  %1054 = vmatmul.mubr.f32.gmra.mrb[0].mxu0 %v987
  %v1055 = vpop.f32.mrb[0].mxu0
  %v1056 = vadd.f32 %v37, %v1055
  %v1057 = vpop.f32.mrb[0].mxu0
  %v1058 = vadd.f32 %v41, %v1057
  %1059 = vdwg.mxu0
  %v1060 = vld [vmem:[%s824] sm:$0xf]
  %v1061 = vld [vmem:[%s822] sm:$0xf]
  %v1062 = vadd.f32 %v1060, %v1056
  %v1063 = vxor.u32 %v1062, 2147483648
  %v1064 = vmul.f32 %v1063, 1.442695
  %v1065 = vpow.pop %v1064
  %v1066 = vadd.f32 %v1065, 1.0
  %v1067 = vrcp.pop %v1066
  %v1068 = vmul.f32 1.0, %v1067
  %v1071 = vunpack.c.l.s4 1983009808
  %v1072 = vunpack.c.0.s8 %v1071
  %v1073 = vlaneseq
  %v1074 = vshrl.u32 %v1073, 7
  %v1075 = vsub.s32 %v1072, %v1074
  %v1076 = vrot.slane %v1056, %v1075
  %1077 = vrot.lane.b32.xlu0 %v1076, 64
  %v1078 = vpop.permute.xlu0 %1077
  %v1080 = vmul.f32 %v1068, %v1078
  %1082 = vrot.lane.b32.xlu0 %v1080, 64
  %v1083 = vpop.permute.xlu0 %1082
  %v1085 = vadd.f32 %v1060, %v1083
  %v1086 = vtanh.pop %v1085
  %v1087 = vsub.f32 1.0, %v1068
  %1089 = vrot.lane.b32.xlu0 %v1086, 96
  %v1090 = vpop.permute.xlu0 %1089
  %v1092 = vmul.f32 %v1087, %v1090
  %v1094 = vunpack.c.l.s4 1983009808
  %v1095 = vunpack.c.0.s8 %v1094
  %v1096 = vlaneseq
  %v1097 = vshrl.u32 %v1096, 7
  %v1098 = vsub.s32 %v1095, %v1097
  %v1099 = vrot.slane %v937, %v1098
  %1100 = vrot.lane.b32.xlu0 %v1099, 32
  %v1101 = vpop.permute.xlu0 %1100
  %v1103 = vmul.f32 %v1068, %v1101
  %v1104 = vadd.f32 %v1092, %v1103
  %v1105 = vadd.f32 %v1061, %v1056
  %v1106 = vxor.u32 %v1105, 2147483648
  %v1107 = vmul.f32 %v1106, 1.442695
  %v1108 = vpow.pop %v1107
  %v1109 = vadd.f32 %v1108, 1.0
  %v1110 = vrcp.pop %v1109
  %v1111 = vmul.f32 1.0, %v1110
  %v1113 = vrot.slane %v1061, 2
  %v1115 = vadd.f32 %v1113, %v1058
  %v1116 = vxor.u32 %v1115, 2147483648
  %v1117 = vmul.f32 %v1116, 1.442695
  %v1118 = vpow.pop %v1117
  %v1119 = vadd.f32 %v1118, 1.0
  %v1120 = vrcp.pop %v1119
  %v1121 = vmul.f32 1.0, %v1120
  %v1124 = vunpack.c.l.s4 1983009808
  %v1125 = vunpack.c.0.s8 %v1124
  %v1126 = vlaneseq
  %v1127 = vshrl.u32 %v1126, 7
  %v1128 = vsub.s32 %v1125, %v1127
  %v1129 = vrot.slane %v1058, %v1128
  %1130 = vrot.lane.b32.xlu0 %v1129, 64
  %v1131 = vpop.permute.xlu0 %1130
  %v1133 = vmul.f32 %v1111, %v1131
  %1134 = vrot.lane.b32.xlu0 %v1061, 96
  %v1135 = vpop.permute.xlu0 %1134
  %v1136 = vrot.slane %v1135, 2
  %1139 = vrot.lane.b32.xlu0 %v1133, 32
  %v1140 = vpop.permute.xlu0 %1139
  %v1142 = vadd.f32 %v1136, %v1140
  %v1143 = vtanh.pop %v1142
  %v1144 = vsub.f32 1.0, %v1121
  %v1145 = vmul.f32 %v1144, %v1143
  %1146 = vrot.lane.b32.xlu0 %v1099, 96
  %v1147 = vpop.permute.xlu0 %1146
  %v1149 = vmul.f32 %v1121, %v1147
  %v1150 = vadd.f32 %v1145, %v1149
  %v1153 = vunpack.c.l.s4 1983009808
  %v1154 = vunpack.c.0.s8 %v1153
  %v1155 = vlaneseq
  %v1156 = vshrl.u32 %v1155, 7
  %v1157 = vsub.s32 %v1154, %v1156
  %v1158 = vrot.slane %v1104, %v1157
  %1159 = vrot.lane.b32.xlu0 %v1158, 96
  %v1160 = vpop.permute.xlu0 %1159
  %v1164 = vunpack.c.l.s4 1983009808
  %v1165 = vunpack.c.0.s8 %v1164
  %v1166 = vlaneseq
  %v1167 = vshrl.u32 %v1166, 7
  %v1168 = vsub.s32 %v1165, %v1167
  %v1169 = vrot.slane %v1150, %v1168
  %1170 = vrot.lane.b32.xlu0 %v1169, 32
  %v1171 = vpop.permute.xlu0 %1170
  %v1173 = vsel %vm220, %v1160, %v1171
  %v1175 = vunpack.c.l.s4 1966171168
  %v1176 = vunpack.c.0.s8 %v1175
  %v1177 = vlaneseq
  %v1178 = vshrl.u32 %v1177, 7
  %v1179 = vsub.s32 %v1176, %v1178
  %v1180 = vrot.slane %v1104, %v1179
  %v1181 = vcombine.high %v1180, %v1180
  %v1182 = vlaneseq
  %v1183 = vshrl.u32 %v1182, 7
  %v1184 = vsub.s32 0, %v1183
  %v1185 = vrot.slane %v1180, %v1184
  %v1186 = vlaneseq
  %v1187 = vshrl.u32 %v1186, 7
  %v1188 = vsub.s32 0, %v1187
  %v1189 = vrot.slane %v1181, %v1188
  %1190 = vrot.lane.b32.xlu0 %v1185, 96
  %v1191 = vpop.permute.xlu0 %1190
  %1192 = vrot.lane.b32.xlu0 %v1189, 96
  %v1193 = vpop.permute.xlu0 %1192
  %1196 = vst.msk [vmem:[%s3 + $0x4] sm:$0x1] %vm244, %v1191
  %1197 = vst.msk [vmem:[%s3 + $0xc] sm:$0x1] %vm244, %v1193
  %v1199 = vunpack.c.l.s4 1966171168
  %v1200 = vunpack.c.0.s8 %v1199
  %v1201 = vlaneseq
  %v1202 = vshrl.u32 %v1201, 7
  %v1203 = vsub.s32 %v1200, %v1202
  %v1204 = vrot.slane %v1150, %v1203
  %v1205 = vcombine.high %v1204, %v1204
  %v1206 = vlaneseq
  %v1207 = vshrl.u32 %v1206, 7
  %v1208 = vsub.s32 0, %v1207
  %v1209 = vrot.slane %v1204, %v1208
  %v1210 = vlaneseq
  %v1211 = vshrl.u32 %v1210, 7
  %v1212 = vsub.s32 0, %v1211
  %v1213 = vrot.slane %v1205, %v1212
  %1214 = vrot.lane.b32.xlu0 %v1209, 32
  %v1215 = vpop.permute.xlu0 %1214
  %1216 = vrot.lane.b32.xlu0 %v1213, 32
  %v1217 = vpop.permute.xlu0 %1216
  %1220 = vst.msk [vmem:[%s3 + $0x3] sm:$0x1] %vm269, %v1215
  %1221 = vst.msk [vmem:[%s3 + $0xb] sm:$0x1] %vm269, %v1217
  %v1223 = vsel %vm44, %v1173, 0
  %1225 = vmatprep.subr.mxu0 %v17
  %1226 = vmatpush1.msra.mxu0 %v16
  %1227 = vmatprep.subr.mxu0 %v19
  %1228 = vmatpush1.msra.mxu0 %v18
  %1229 = vmatprep.subr.mxu0 %v21
  %1230 = vmatpush1.msra.mxu0 %v20
  %1231 = vmatprep.subr.mxu0 %v23
  %1232 = vmatpush1.msra.mxu0 %v22
  %1233 = vmatprep.subr.mxu0 %v25
  %1234 = vmatpush1.msra.mxu0 %v24
  %1235 = vmatprep.subr.mxu0 %v27
  %1236 = vmatpush1.msra.mxu0 %v26
  %1237 = vmatprep.subr.mxu0 %v29
  %1238 = vmatpush1.msra.mxu0 %v28
  %1239 = vmatprep.subr.mxu0 %v31
  %1240 = vmatpush1.msra.mxu0 %v30
  %1241 = vmatprep.subr.mxu0 0.0
  %1242 = vmatpush1.msra.mxu0 0.0
  %1243 = vmatprep.subr.mxu0 0.0
  %1244 = vmatpush1.msra.mxu0 0.0
  %1245 = vmatprep.subr.mxu0 0.0
  %1246 = vmatpush1.msra.mxu0 0.0
  %1247 = vmatprep.subr.mxu0 0.0
  %1248 = vmatpush1.msra.mxu0 0.0
  %1249 = vmatprep.subr.mxu0 0.0
  %1250 = vmatpush1.msra.mxu0 0.0
  %1251 = vmatprep.subr.mxu0 0.0
  %1252 = vmatpush1.msra.mxu0 0.0
  %1253 = vmatprep.subr.mxu0 0.0
  %1254 = vmatpush1.msra.mxu0 0.0
  %1255 = vmatprep.subr.mxu0 0.0
  %1256 = vmatpush1.msra.mxu0 0.0
  %1257 = vmatprep.subr.mxu0 0.0
  %1258 = vmatpush1.msra.mxu0 0.0
  %1259 = vmatprep.subr.mxu0 0.0
  %1260 = vmatpush1.msra.mxu0 0.0
  %1261 = vmatprep.subr.mxu0 0.0
  %1262 = vmatpush1.msra.mxu0 0.0
  %1263 = vmatprep.subr.mxu0 0.0
  %1264 = vmatpush1.msra.mxu0 0.0
  %1265 = vmatprep.subr.mxu0 0.0
  %1266 = vmatpush1.msra.mxu0 0.0
  %1267 = vmatprep.subr.mxu0 0.0
  %1268 = vmatpush1.msra.mxu0 0.0
  %1269 = vmatprep.subr.mxu0 0.0
  %1270 = vmatpush1.msra.mxu0 0.0
  %1271 = vmatprep.subr.mxu0 0.0
  %1272 = vmatpush1.msra.mxu0 0.0
  %1273 = vmatprep.subr.mxu0 0.0
  %1274 = vmatpush1.msra.mxu0 0.0
  %1275 = vmatprep.subr.mxu0 0.0
  %1276 = vmatpush1.msra.mxu0 0.0
  %1277 = vmatprep.subr.mxu0 0.0
  %1278 = vmatpush1.msra.mxu0 0.0
  %1279 = vmatprep.subr.mxu0 0.0
  %1280 = vmatpush1.msra.mxu0 0.0
  %1281 = vmatprep.subr.mxu0 0.0
  %1282 = vmatpush1.msra.mxu0 0.0
  %1283 = vmatprep.subr.mxu0 0.0
  %1284 = vmatpush1.msra.mxu0 0.0
  %1285 = vmatprep.subr.mxu0 0.0
  %1286 = vmatpush1.msra.mxu0 0.0
  %1287 = vmatprep.subr.mxu0 0.0
  %1288 = vmatpush1.msra.mxu0 0.0
  %1289 = vmatprep.mubr.f32.mxu0 0.0
  %1290 = vmatmul.mubr.f32.gmra.mrb[0].mxu0 %v1223
  %v1291 = vpop.f32.mrb[0].mxu0
  %v1292 = vadd.f32 %v37, %v1291
  %v1293 = vpop.f32.mrb[0].mxu0
  %v1294 = vadd.f32 %v41, %v1293
  %1295 = vdwg.mxu0
  %v1296 = vld [vmem:[%s586] sm:$0xf]
  %v1297 = vld [vmem:[%s584] sm:$0xf]
  %v1298 = vadd.f32 %v1296, %v1292
  %v1299 = vxor.u32 %v1298, 2147483648
  %v1300 = vmul.f32 %v1299, 1.442695
  %v1301 = vpow.pop %v1300
  %v1302 = vadd.f32 %v1301, 1.0
  %v1303 = vrcp.pop %v1302
  %v1304 = vmul.f32 1.0, %v1303
  %v1307 = vunpack.c.l.s4 1983009808
  %v1308 = vunpack.c.0.s8 %v1307
  %v1309 = vlaneseq
  %v1310 = vshrl.u32 %v1309, 7
  %v1311 = vsub.s32 %v1308, %v1310
  %v1312 = vrot.slane %v1292, %v1311
  %1313 = vrot.lane.b32.xlu0 %v1312, 64
  %v1314 = vpop.permute.xlu0 %1313
  %v1316 = vmul.f32 %v1304, %v1314
  %1318 = vrot.lane.b32.xlu0 %v1316, 64
  %v1319 = vpop.permute.xlu0 %1318
  %v1321 = vadd.f32 %v1296, %v1319
  %v1322 = vtanh.pop %v1321
  %v1323 = vsub.f32 1.0, %v1304
  %1325 = vrot.lane.b32.xlu0 %v1322, 96
  %v1326 = vpop.permute.xlu0 %1325
  %v1328 = vmul.f32 %v1323, %v1326
  %v1330 = vunpack.c.l.s4 1983009808
  %v1331 = vunpack.c.0.s8 %v1330
  %v1332 = vlaneseq
  %v1333 = vshrl.u32 %v1332, 7
  %v1334 = vsub.s32 %v1331, %v1333
  %v1335 = vrot.slane %v1173, %v1334
  %1336 = vrot.lane.b32.xlu0 %v1335, 32
  %v1337 = vpop.permute.xlu0 %1336
  %v1339 = vmul.f32 %v1304, %v1337
  %v1340 = vadd.f32 %v1328, %v1339
  %v1341 = vadd.f32 %v1297, %v1292
  %v1342 = vxor.u32 %v1341, 2147483648
  %v1343 = vmul.f32 %v1342, 1.442695
  %v1344 = vpow.pop %v1343
  %v1345 = vadd.f32 %v1344, 1.0
  %v1346 = vrcp.pop %v1345
  %v1347 = vmul.f32 1.0, %v1346
  %v1349 = vrot.slane %v1297, 2
  %v1351 = vadd.f32 %v1349, %v1294
  %v1352 = vxor.u32 %v1351, 2147483648
  %v1353 = vmul.f32 %v1352, 1.442695
  %v1354 = vpow.pop %v1353
  %v1355 = vadd.f32 %v1354, 1.0
  %v1356 = vrcp.pop %v1355
  %v1357 = vmul.f32 1.0, %v1356
  %v1360 = vunpack.c.l.s4 1983009808
  %v1361 = vunpack.c.0.s8 %v1360
  %v1362 = vlaneseq
  %v1363 = vshrl.u32 %v1362, 7
  %v1364 = vsub.s32 %v1361, %v1363
  %v1365 = vrot.slane %v1294, %v1364
  %1366 = vrot.lane.b32.xlu0 %v1365, 64
  %v1367 = vpop.permute.xlu0 %1366
  %v1369 = vmul.f32 %v1347, %v1367
  %1370 = vrot.lane.b32.xlu0 %v1297, 96
  %v1371 = vpop.permute.xlu0 %1370
  %v1372 = vrot.slane %v1371, 2
  %1375 = vrot.lane.b32.xlu0 %v1369, 32
  %v1376 = vpop.permute.xlu0 %1375
  %v1378 = vadd.f32 %v1372, %v1376
  %v1379 = vtanh.pop %v1378
  %v1380 = vsub.f32 1.0, %v1357
  %v1381 = vmul.f32 %v1380, %v1379
  %1382 = vrot.lane.b32.xlu0 %v1335, 96
  %v1383 = vpop.permute.xlu0 %1382
  %v1385 = vmul.f32 %v1357, %v1383
  %v1386 = vadd.f32 %v1381, %v1385
  %v1389 = vunpack.c.l.s4 1983009808
  %v1390 = vunpack.c.0.s8 %v1389
  %v1391 = vlaneseq
  %v1392 = vshrl.u32 %v1391, 7
  %v1393 = vsub.s32 %v1390, %v1392
  %v1394 = vrot.slane %v1340, %v1393
  %1395 = vrot.lane.b32.xlu0 %v1394, 96
  %v1396 = vpop.permute.xlu0 %1395
  %v1400 = vunpack.c.l.s4 1983009808
  %v1401 = vunpack.c.0.s8 %v1400
  %v1402 = vlaneseq
  %v1403 = vshrl.u32 %v1402, 7
  %v1404 = vsub.s32 %v1401, %v1403
  %v1405 = vrot.slane %v1386, %v1404
  %1406 = vrot.lane.b32.xlu0 %v1405, 32
  %v1407 = vpop.permute.xlu0 %1406
  %v1409 = vsel %vm220, %v1396, %v1407
  %v1411 = vunpack.c.l.s4 1966171168
  %v1412 = vunpack.c.0.s8 %v1411
  %v1413 = vlaneseq
  %v1414 = vshrl.u32 %v1413, 7
  %v1415 = vsub.s32 %v1412, %v1414
  %v1416 = vrot.slane %v1340, %v1415
  %v1417 = vcombine.high %v1416, %v1416
  %v1418 = vlaneseq
  %v1419 = vshrl.u32 %v1418, 7
  %v1420 = vsub.s32 0, %v1419
  %v1421 = vrot.slane %v1416, %v1420
  %v1422 = vlaneseq
  %v1423 = vshrl.u32 %v1422, 7
  %v1424 = vsub.s32 0, %v1423
  %v1425 = vrot.slane %v1417, %v1424
  %1426 = vrot.lane.b32.xlu0 %v1421, 96
  %v1427 = vpop.permute.xlu0 %1426
  %1428 = vrot.lane.b32.xlu0 %v1425, 96
  %v1429 = vpop.permute.xlu0 %1428
  %1432 = vst.msk [vmem:[%s3 + $0x5] sm:$0x1] %vm244, %v1427
  %1433 = vst.msk [vmem:[%s3 + $0xd] sm:$0x1] %vm244, %v1429
  %v1435 = vunpack.c.l.s4 1966171168
  %v1436 = vunpack.c.0.s8 %v1435
  %v1437 = vlaneseq
  %v1438 = vshrl.u32 %v1437, 7
  %v1439 = vsub.s32 %v1436, %v1438
  %v1440 = vrot.slane %v1386, %v1439
  %v1441 = vcombine.high %v1440, %v1440
  %v1442 = vlaneseq
  %v1443 = vshrl.u32 %v1442, 7
  %v1444 = vsub.s32 0, %v1443
  %v1445 = vrot.slane %v1440, %v1444
  %v1446 = vlaneseq
  %v1447 = vshrl.u32 %v1446, 7
  %v1448 = vsub.s32 0, %v1447
  %v1449 = vrot.slane %v1441, %v1448
  %1450 = vrot.lane.b32.xlu0 %v1445, 32
  %v1451 = vpop.permute.xlu0 %1450
  %1452 = vrot.lane.b32.xlu0 %v1449, 32
  %v1453 = vpop.permute.xlu0 %1452
  %1456 = vst.msk [vmem:[%s3 + $0x2] sm:$0x1] %vm269, %v1451
  %1457 = vst.msk [vmem:[%s3 + $0xa] sm:$0x1] %vm269, %v1453
  %v1459 = vsel %vm44, %v1409, 0
  %1461 = vmatprep.subr.mxu0 %v17
  %1462 = vmatpush1.msra.mxu0 %v16
  %1463 = vmatprep.subr.mxu0 %v19
  %1464 = vmatpush1.msra.mxu0 %v18
  %1465 = vmatprep.subr.mxu0 %v21
  %1466 = vmatpush1.msra.mxu0 %v20
  %1467 = vmatprep.subr.mxu0 %v23
  %1468 = vmatpush1.msra.mxu0 %v22
  %1469 = vmatprep.subr.mxu0 %v25
  %1470 = vmatpush1.msra.mxu0 %v24
  %1471 = vmatprep.subr.mxu0 %v27
  %1472 = vmatpush1.msra.mxu0 %v26
  %1473 = vmatprep.subr.mxu0 %v29
  %1474 = vmatpush1.msra.mxu0 %v28
  %1475 = vmatprep.subr.mxu0 %v31
  %1476 = vmatpush1.msra.mxu0 %v30
  %1477 = vmatprep.subr.mxu0 0.0
  %1478 = vmatpush1.msra.mxu0 0.0
  %1479 = vmatprep.subr.mxu0 0.0
  %1480 = vmatpush1.msra.mxu0 0.0
  %1481 = vmatprep.subr.mxu0 0.0
  %1482 = vmatpush1.msra.mxu0 0.0
  %1483 = vmatprep.subr.mxu0 0.0
  %1484 = vmatpush1.msra.mxu0 0.0
  %1485 = vmatprep.subr.mxu0 0.0
  %1486 = vmatpush1.msra.mxu0 0.0
  %1487 = vmatprep.subr.mxu0 0.0
  %1488 = vmatpush1.msra.mxu0 0.0
  %1489 = vmatprep.subr.mxu0 0.0
  %1490 = vmatpush1.msra.mxu0 0.0
  %1491 = vmatprep.subr.mxu0 0.0
  %1492 = vmatpush1.msra.mxu0 0.0
  %1493 = vmatprep.subr.mxu0 0.0
  %1494 = vmatpush1.msra.mxu0 0.0
  %1495 = vmatprep.subr.mxu0 0.0
  %1496 = vmatpush1.msra.mxu0 0.0
  %1497 = vmatprep.subr.mxu0 0.0
  %1498 = vmatpush1.msra.mxu0 0.0
  %1499 = vmatprep.subr.mxu0 0.0
  %1500 = vmatpush1.msra.mxu0 0.0
  %1501 = vmatprep.subr.mxu0 0.0
  %1502 = vmatpush1.msra.mxu0 0.0
  %1503 = vmatprep.subr.mxu0 0.0
  %1504 = vmatpush1.msra.mxu0 0.0
  %1505 = vmatprep.subr.mxu0 0.0
  %1506 = vmatpush1.msra.mxu0 0.0
  %1507 = vmatprep.subr.mxu0 0.0
  %1508 = vmatpush1.msra.mxu0 0.0
  %1509 = vmatprep.subr.mxu0 0.0
  %1510 = vmatpush1.msra.mxu0 0.0
  %1511 = vmatprep.subr.mxu0 0.0
  %1512 = vmatpush1.msra.mxu0 0.0
  %1513 = vmatprep.subr.mxu0 0.0
  %1514 = vmatpush1.msra.mxu0 0.0
  %1515 = vmatprep.subr.mxu0 0.0
  %1516 = vmatpush1.msra.mxu0 0.0
  %1517 = vmatprep.subr.mxu0 0.0
  %1518 = vmatpush1.msra.mxu0 0.0
  %1519 = vmatprep.subr.mxu0 0.0
  %1520 = vmatpush1.msra.mxu0 0.0
  %1521 = vmatprep.subr.mxu0 0.0
  %1522 = vmatpush1.msra.mxu0 0.0
  %1523 = vmatprep.subr.mxu0 0.0
  %1524 = vmatpush1.msra.mxu0 0.0
  %1525 = vmatprep.mubr.f32.mxu0 0.0
  %1526 = vmatmul.mubr.f32.gmra.mrb[0].mxu0 %v1459
  %v1527 = vpop.f32.mrb[0].mxu0
  %v1528 = vadd.f32 %v37, %v1527
  %v1529 = vpop.f32.mrb[0].mxu0
  %v1530 = vadd.f32 %v41, %v1529
  %1531 = vdwg.mxu0
  %v1532 = vld [vmem:[%s348] sm:$0xf]
  %v1533 = vld [vmem:[%s346] sm:$0xf]
  %v1534 = vadd.f32 %v1532, %v1528
  %v1535 = vxor.u32 %v1534, 2147483648
  %v1536 = vmul.f32 %v1535, 1.442695
  %v1537 = vpow.pop %v1536
  %v1538 = vadd.f32 %v1537, 1.0
  %v1539 = vrcp.pop %v1538
  %v1540 = vmul.f32 1.0, %v1539
  %v1543 = vunpack.c.l.s4 1983009808
  %v1544 = vunpack.c.0.s8 %v1543
  %v1545 = vlaneseq
  %v1546 = vshrl.u32 %v1545, 7
  %v1547 = vsub.s32 %v1544, %v1546
  %v1548 = vrot.slane %v1528, %v1547
  %1549 = vrot.lane.b32.xlu0 %v1548, 64
  %v1550 = vpop.permute.xlu0 %1549
  %v1552 = vmul.f32 %v1540, %v1550
  %1554 = vrot.lane.b32.xlu0 %v1552, 64
  %v1555 = vpop.permute.xlu0 %1554
  %v1557 = vadd.f32 %v1532, %v1555
  %v1558 = vtanh.pop %v1557
  %v1559 = vsub.f32 1.0, %v1540
  %1561 = vrot.lane.b32.xlu0 %v1558, 96
  %v1562 = vpop.permute.xlu0 %1561
  %v1564 = vmul.f32 %v1559, %v1562
  %v1566 = vunpack.c.l.s4 1983009808
  %v1567 = vunpack.c.0.s8 %v1566
  %v1568 = vlaneseq
  %v1569 = vshrl.u32 %v1568, 7
  %v1570 = vsub.s32 %v1567, %v1569
  %v1571 = vrot.slane %v1409, %v1570
  %1572 = vrot.lane.b32.xlu0 %v1571, 32
  %v1573 = vpop.permute.xlu0 %1572
  %v1575 = vmul.f32 %v1540, %v1573
  %v1576 = vadd.f32 %v1564, %v1575
  %v1577 = vadd.f32 %v1533, %v1528
  %v1578 = vxor.u32 %v1577, 2147483648
  %v1579 = vmul.f32 %v1578, 1.442695
  %v1580 = vpow.pop %v1579
  %v1581 = vadd.f32 %v1580, 1.0
  %v1582 = vrcp.pop %v1581
  %v1583 = vmul.f32 1.0, %v1582
  %v1585 = vrot.slane %v1533, 2
  %v1587 = vadd.f32 %v1585, %v1530
  %v1588 = vxor.u32 %v1587, 2147483648
  %v1589 = vmul.f32 %v1588, 1.442695
  %v1590 = vpow.pop %v1589
  %v1591 = vadd.f32 %v1590, 1.0
  %v1592 = vrcp.pop %v1591
  %v1593 = vmul.f32 1.0, %v1592
  %v1596 = vunpack.c.l.s4 1983009808
  %v1597 = vunpack.c.0.s8 %v1596
  %v1598 = vlaneseq
  %v1599 = vshrl.u32 %v1598, 7
  %v1600 = vsub.s32 %v1597, %v1599
  %v1601 = vrot.slane %v1530, %v1600
  %1602 = vrot.lane.b32.xlu0 %v1601, 64
  %v1603 = vpop.permute.xlu0 %1602
  %v1605 = vmul.f32 %v1583, %v1603
  %1606 = vrot.lane.b32.xlu0 %v1533, 96
  %v1607 = vpop.permute.xlu0 %1606
  %v1608 = vrot.slane %v1607, 2
  %1611 = vrot.lane.b32.xlu0 %v1605, 32
  %v1612 = vpop.permute.xlu0 %1611
  %v1614 = vadd.f32 %v1608, %v1612
  %v1615 = vtanh.pop %v1614
  %v1616 = vsub.f32 1.0, %v1593
  %v1617 = vmul.f32 %v1616, %v1615
  %1618 = vrot.lane.b32.xlu0 %v1571, 96
  %v1619 = vpop.permute.xlu0 %1618
  %v1621 = vmul.f32 %v1593, %v1619
  %v1622 = vadd.f32 %v1617, %v1621
  %v1625 = vunpack.c.l.s4 1983009808
  %v1626 = vunpack.c.0.s8 %v1625
  %v1627 = vlaneseq
  %v1628 = vshrl.u32 %v1627, 7
  %v1629 = vsub.s32 %v1626, %v1628
  %v1630 = vrot.slane %v1576, %v1629
  %1631 = vrot.lane.b32.xlu0 %v1630, 96
  %v1632 = vpop.permute.xlu0 %1631
  %v1636 = vunpack.c.l.s4 1983009808
  %v1637 = vunpack.c.0.s8 %v1636
  %v1638 = vlaneseq
  %v1639 = vshrl.u32 %v1638, 7
  %v1640 = vsub.s32 %v1637, %v1639
  %v1641 = vrot.slane %v1622, %v1640
  %1642 = vrot.lane.b32.xlu0 %v1641, 32
  %v1643 = vpop.permute.xlu0 %1642
  %v1645 = vsel %vm220, %v1632, %v1643
  %v1647 = vunpack.c.l.s4 1966171168
  %v1648 = vunpack.c.0.s8 %v1647
  %v1649 = vlaneseq
  %v1650 = vshrl.u32 %v1649, 7
  %v1651 = vsub.s32 %v1648, %v1650
  %v1652 = vrot.slane %v1576, %v1651
  %v1653 = vcombine.high %v1652, %v1652
  %v1654 = vlaneseq
  %v1655 = vshrl.u32 %v1654, 7
  %v1656 = vsub.s32 0, %v1655
  %v1657 = vrot.slane %v1652, %v1656
  %v1658 = vlaneseq
  %v1659 = vshrl.u32 %v1658, 7
  %v1660 = vsub.s32 0, %v1659
  %v1661 = vrot.slane %v1653, %v1660
  %1662 = vrot.lane.b32.xlu0 %v1657, 96
  %v1663 = vpop.permute.xlu0 %1662
  %1664 = vrot.lane.b32.xlu0 %v1661, 96
  %v1665 = vpop.permute.xlu0 %1664
  %1668 = vst.msk [vmem:[%s3 + $0x6] sm:$0x1] %vm244, %v1663
  %1669 = vst.msk [vmem:[%s3 + $0xe] sm:$0x1] %vm244, %v1665
  %v1671 = vunpack.c.l.s4 1966171168
  %v1672 = vunpack.c.0.s8 %v1671
  %v1673 = vlaneseq
  %v1674 = vshrl.u32 %v1673, 7
  %v1675 = vsub.s32 %v1672, %v1674
  %v1676 = vrot.slane %v1622, %v1675
  %v1677 = vcombine.high %v1676, %v1676
  %v1678 = vlaneseq
  %v1679 = vshrl.u32 %v1678, 7
  %v1680 = vsub.s32 0, %v1679
  %v1681 = vrot.slane %v1676, %v1680
  %v1682 = vlaneseq
  %v1683 = vshrl.u32 %v1682, 7
  %v1684 = vsub.s32 0, %v1683
  %v1685 = vrot.slane %v1677, %v1684
  %1686 = vrot.lane.b32.xlu0 %v1681, 32
  %v1687 = vpop.permute.xlu0 %1686
  %1688 = vrot.lane.b32.xlu0 %v1685, 32
  %v1689 = vpop.permute.xlu0 %1688
  %1692 = vst.msk [vmem:[%s3 + $0x1] sm:$0x1] %vm269, %v1687
  %1693 = vst.msk [vmem:[%s3 + $0x9] sm:$0x1] %vm269, %v1689
  %v1695 = vsel %vm44, %v1645, 0
  %1697 = vmatprep.subr.mxu0 %v17
  %1698 = vmatpush1.msra.mxu0 %v16
  %1699 = vmatprep.subr.mxu0 %v19
  %1700 = vmatpush1.msra.mxu0 %v18
  %1701 = vmatprep.subr.mxu0 %v21
  %1702 = vmatpush1.msra.mxu0 %v20
  %1703 = vmatprep.subr.mxu0 %v23
  %1704 = vmatpush1.msra.mxu0 %v22
  %1705 = vmatprep.subr.mxu0 %v25
  %1706 = vmatpush1.msra.mxu0 %v24
  %1707 = vmatprep.subr.mxu0 %v27
  %1708 = vmatpush1.msra.mxu0 %v26
  %1709 = vmatprep.subr.mxu0 %v29
  %1710 = vmatpush1.msra.mxu0 %v28
  %1711 = vmatprep.subr.mxu0 %v31
  %1712 = vmatpush1.msra.mxu0 %v30
  %1713 = vmatprep.subr.mxu0 0.0
  %1714 = vmatpush1.msra.mxu0 0.0
  %1715 = vmatprep.subr.mxu0 0.0
  %1716 = vmatpush1.msra.mxu0 0.0
  %1717 = vmatprep.subr.mxu0 0.0
  %1718 = vmatpush1.msra.mxu0 0.0
  %1719 = vmatprep.subr.mxu0 0.0
  %1720 = vmatpush1.msra.mxu0 0.0
  %1721 = vmatprep.subr.mxu0 0.0
  %1722 = vmatpush1.msra.mxu0 0.0
  %1723 = vmatprep.subr.mxu0 0.0
  %1724 = vmatpush1.msra.mxu0 0.0
  %1725 = vmatprep.subr.mxu0 0.0
  %1726 = vmatpush1.msra.mxu0 0.0
  %1727 = vmatprep.subr.mxu0 0.0
  %1728 = vmatpush1.msra.mxu0 0.0
  %1729 = vmatprep.subr.mxu0 0.0
  %1730 = vmatpush1.msra.mxu0 0.0
  %1731 = vmatprep.subr.mxu0 0.0
  %1732 = vmatpush1.msra.mxu0 0.0
  %1733 = vmatprep.subr.mxu0 0.0
  %1734 = vmatpush1.msra.mxu0 0.0
  %1735 = vmatprep.subr.mxu0 0.0
  %1736 = vmatpush1.msra.mxu0 0.0
  %1737 = vmatprep.subr.mxu0 0.0
  %1738 = vmatpush1.msra.mxu0 0.0
  %1739 = vmatprep.subr.mxu0 0.0
  %1740 = vmatpush1.msra.mxu0 0.0
  %1741 = vmatprep.subr.mxu0 0.0
  %1742 = vmatpush1.msra.mxu0 0.0
  %1743 = vmatprep.subr.mxu0 0.0
  %1744 = vmatpush1.msra.mxu0 0.0
  %1745 = vmatprep.subr.mxu0 0.0
  %1746 = vmatpush1.msra.mxu0 0.0
  %1747 = vmatprep.subr.mxu0 0.0
  %1748 = vmatpush1.msra.mxu0 0.0
  %1749 = vmatprep.subr.mxu0 0.0
  %1750 = vmatpush1.msra.mxu0 0.0
  %1751 = vmatprep.subr.mxu0 0.0
  %1752 = vmatpush1.msra.mxu0 0.0
  %1753 = vmatprep.subr.mxu0 0.0
  %1754 = vmatpush1.msra.mxu0 0.0
  %1755 = vmatprep.subr.mxu0 0.0
  %1756 = vmatpush1.msra.mxu0 0.0
  %1757 = vmatprep.subr.mxu0 0.0
  %1758 = vmatpush1.msra.mxu0 0.0
  %1759 = vmatprep.subr.mxu0 0.0
  %1760 = vmatpush1.msra.mxu0 0.0
  %1761 = vmatprep.mubr.f32.mxu0 0.0
  %1762 = vmatmul.mubr.f32.gmra.mrb[0].mxu0 %v1695
  %v1763 = vpop.f32.mrb[0].mxu0
  %v1764 = vadd.f32 %v37, %v1763
  %v1765 = vpop.f32.mrb[0].mxu0
  %v1766 = vadd.f32 %v41, %v1765
  %1767 = vdwg.mxu0
  %v1768 = vld [vmem:[%s120] sm:$0xf]
  %v1769 = vld [vmem:[%s0] sm:$0xf]
  %v1770 = vadd.f32 %v1768, %v1764
  %v1771 = vxor.u32 %v1770, 2147483648
  %v1772 = vmul.f32 %v1771, 1.442695
  %v1773 = vpow.pop %v1772
  %v1774 = vadd.f32 %v1773, 1.0
  %v1775 = vrcp.pop %v1774
  %v1776 = vmul.f32 1.0, %v1775
  %v1779 = vunpack.c.l.s4 1983009808
  %v1780 = vunpack.c.0.s8 %v1779
  %v1781 = vlaneseq
  %v1782 = vshrl.u32 %v1781, 7
  %v1783 = vsub.s32 %v1780, %v1782
  %v1784 = vrot.slane %v1764, %v1783
  %1785 = vrot.lane.b32.xlu0 %v1784, 64
  %v1786 = vpop.permute.xlu0 %1785
  %v1788 = vmul.f32 %v1776, %v1786
  %1790 = vrot.lane.b32.xlu0 %v1788, 64
  %v1791 = vpop.permute.xlu0 %1790
  %v1793 = vadd.f32 %v1768, %v1791
  %v1794 = vtanh.pop %v1793
  %v1795 = vsub.f32 1.0, %v1776
  %1797 = vrot.lane.b32.xlu0 %v1794, 96
  %v1798 = vpop.permute.xlu0 %1797
  %v1800 = vmul.f32 %v1795, %v1798
  %v1802 = vunpack.c.l.s4 1983009808
  %v1803 = vunpack.c.0.s8 %v1802
  %v1804 = vlaneseq
  %v1805 = vshrl.u32 %v1804, 7
  %v1806 = vsub.s32 %v1803, %v1805
  %v1807 = vrot.slane %v1645, %v1806
  %1808 = vrot.lane.b32.xlu0 %v1807, 32
  %v1809 = vpop.permute.xlu0 %1808
  %v1811 = vmul.f32 %v1776, %v1809
  %v1812 = vadd.f32 %v1800, %v1811
  %v1813 = vadd.f32 %v1769, %v1764
  %v1814 = vxor.u32 %v1813, 2147483648
  %v1815 = vmul.f32 %v1814, 1.442695
  %v1816 = vpow.pop %v1815
  %v1817 = vadd.f32 %v1816, 1.0
  %v1818 = vrcp.pop %v1817
  %v1819 = vmul.f32 1.0, %v1818
  %v1821 = vrot.slane %v1769, 2
  %v1823 = vadd.f32 %v1821, %v1766
  %v1824 = vxor.u32 %v1823, 2147483648
  %v1825 = vmul.f32 %v1824, 1.442695
  %v1826 = vpow.pop %v1825
  %v1827 = vadd.f32 %v1826, 1.0
  %v1828 = vrcp.pop %v1827
  %v1829 = vmul.f32 1.0, %v1828
  %v1832 = vunpack.c.l.s4 1983009808
  %v1833 = vunpack.c.0.s8 %v1832
  %v1834 = vlaneseq
  %v1835 = vshrl.u32 %v1834, 7
  %v1836 = vsub.s32 %v1833, %v1835
  %v1837 = vrot.slane %v1766, %v1836
  %1838 = vrot.lane.b32.xlu0 %v1837, 64
  %v1839 = vpop.permute.xlu0 %1838
  %v1841 = vmul.f32 %v1819, %v1839
  %1842 = vrot.lane.b32.xlu0 %v1769, 96
  %v1843 = vpop.permute.xlu0 %1842
  %v1844 = vrot.slane %v1843, 2
  %1847 = vrot.lane.b32.xlu0 %v1841, 32
  %v1848 = vpop.permute.xlu0 %1847
  %v1850 = vadd.f32 %v1844, %v1848
  %v1851 = vtanh.pop %v1850
  %v1852 = vsub.f32 1.0, %v1829
  %v1853 = vmul.f32 %v1852, %v1851
  %1854 = vrot.lane.b32.xlu0 %v1807, 96
  %v1855 = vpop.permute.xlu0 %1854
  %v1857 = vmul.f32 %v1829, %v1855
  %v1858 = vadd.f32 %v1853, %v1857
  %v1861 = vunpack.c.l.s4 1983009808
  %v1862 = vunpack.c.0.s8 %v1861
  %v1863 = vlaneseq
  %v1864 = vshrl.u32 %v1863, 7
  %v1865 = vsub.s32 %v1862, %v1864
  %v1866 = vrot.slane %v1812, %v1865
  %1867 = vrot.lane.b32.xlu0 %v1866, 96
  %v1868 = vpop.permute.xlu0 %1867
  %v1872 = vunpack.c.l.s4 1983009808
  %v1873 = vunpack.c.0.s8 %v1872
  %v1874 = vlaneseq
  %v1875 = vshrl.u32 %v1874, 7
  %v1876 = vsub.s32 %v1873, %v1875
  %v1877 = vrot.slane %v1858, %v1876
  %1878 = vrot.lane.b32.xlu0 %v1877, 32
  %v1879 = vpop.permute.xlu0 %1878
  %v1881 = vsel %vm220, %v1868, %v1879
  %v1883 = vunpack.c.l.s4 1966171168
  %v1884 = vunpack.c.0.s8 %v1883
  %v1885 = vlaneseq
  %v1886 = vshrl.u32 %v1885, 7
  %v1887 = vsub.s32 %v1884, %v1886
  %v1888 = vrot.slane %v1812, %v1887
  %v1889 = vcombine.high %v1888, %v1888
  %v1890 = vlaneseq
  %v1891 = vshrl.u32 %v1890, 7
  %v1892 = vsub.s32 0, %v1891
  %v1893 = vrot.slane %v1888, %v1892
  %v1894 = vlaneseq
  %v1895 = vshrl.u32 %v1894, 7
  %v1896 = vsub.s32 0, %v1895
  %v1897 = vrot.slane %v1889, %v1896
  %1898 = vrot.lane.b32.xlu0 %v1893, 96
  %v1899 = vpop.permute.xlu0 %1898
  %1900 = vrot.lane.b32.xlu0 %v1897, 96
  %v1901 = vpop.permute.xlu0 %1900
  %1904 = vst.msk [vmem:[%s3 + $0x7] sm:$0x1] %vm244, %v1899
  %1905 = vst.msk [vmem:[%s3 + $0xf] sm:$0x1] %vm244, %v1901
  %v1907 = vunpack.c.l.s4 1966171168
  %v1908 = vunpack.c.0.s8 %v1907
  %v1909 = vlaneseq
  %v1910 = vshrl.u32 %v1909, 7
  %v1911 = vsub.s32 %v1908, %v1910
  %v1912 = vrot.slane %v1858, %v1911
  %v1913 = vcombine.high %v1912, %v1912
  %v1914 = vlaneseq
  %v1915 = vshrl.u32 %v1914, 7
  %v1916 = vsub.s32 0, %v1915
  %v1917 = vrot.slane %v1912, %v1916
  %v1918 = vlaneseq
  %v1919 = vshrl.u32 %v1918, 7
  %v1920 = vsub.s32 0, %v1919
  %v1921 = vrot.slane %v1913, %v1920
  %1922 = vrot.lane.b32.xlu0 %v1917, 32
  %v1923 = vpop.permute.xlu0 %1922
  %1924 = vrot.lane.b32.xlu0 %v1921, 32
  %v1925 = vpop.permute.xlu0 %1924
  %1928 = vst.msk [vmem:[%s3] sm:$0x1] %vm269, %v1923
  %1929 = vst.msk [vmem:[%s3 + $0x8] sm:$0x1] %vm269, %v1925
  %vm1930 = vcmask 517120
  %1931 = vst.msk [vmem:[%s4] sm:$0x3] %vm1930, %v1881
  // Predicated region
  $region14: #{seq2seq_forward.2} parent=0 // pred_check
    _
  $region15: #{seq2seq_forward.2} parent=0 // pred_check_branch
    %1933 = sbr.rel (0) target = $region17
  $region16: #{seq2seq_forward.2} parent=0 // pred_region
    _
  $region17: #{seq2seq_forward.2} parent=0 // pred_fallthru
    _
  // Predicated region
  $region18: #{seq2seq_forward.2} parent=0 // pred_check
    _
  $region19: #{seq2seq_forward.2} parent=0 // pred_check_branch
    %1935 = sbr.rel (0) target = $region21
  $region20: #{seq2seq_forward.2} parent=0 // pred_region
    _
  $region21: #{seq2seq_forward.2} parent=0 // pred_fallthru
    _
  // Predicated region
  $region22: #{seq2seq_forward.2} parent=0 // pred_check
    _
  $region23: #{seq2seq_forward.2} parent=0 // pred_check_branch
    %1937 = sbr.rel (0) target = $region25
  $region24: #{seq2seq_forward.2} parent=0 // pred_region
    _
  $region25: #{seq2seq_forward.2} parent=0 // pred_fallthru
    _
  // Predicated region
  $region26: #{seq2seq_forward.2} parent=0 // pred_check
    _
  $region27: #{seq2seq_forward.2} parent=0 // pred_check_branch
    %1939 = sbr.rel (0) target = $region29
  $region28: #{seq2seq_forward.2} parent=0 // pred_region
    _
  $region29: #{seq2seq_forward.2} parent=0 // pred_fallthru
    _

</llo_original>
